<compile_context>
chip_gen: v5e
topology: v5e:2x2
jax: 0.10.0
libtpu: 0.0.40
codegen_flags: <defaults>
</compile_context>

<pallas_src>
import jax
import jax.numpy as jnp
from jax.experimental import pallas as pl
from jax.experimental.pallas import tpu as pltpu


# ------------------------------ Pallas kernel ------------------------------ #

def _pool_select_mats(n_out, n_in, dtype=jnp.float32):
    """0/1 selection matrices: S0[j, 2j] = 1, S1[j, 2j+1] = 1."""
    r = jax.lax.broadcasted_iota(jnp.int32, (n_out, n_in), 0)
    c = jax.lax.broadcasted_iota(jnp.int32, (n_out, n_in), 1)
    s0 = jnp.where(c == 2 * r, 1.0, 0.0).astype(dtype)
    s1 = jnp.where(c == 2 * r + 1, 1.0, 0.0).astype(dtype)
    return s0, s1


def _net_kernel(xt_ref, w1_ref, b1_ref, w2_ref, b2_ref,
                wf1_ref, bf1_ref, wf2_ref, bf2_ref, out_ref):
    f32 = jnp.float32

    xt = xt_ref[0]          # [28, 28], xt[w, h] = image[h, w] (pre-transposed)
    w1 = w1_ref[...]        # [25, 10]   row = kw*5 + kh
    b1 = b1_ref[...]        # [1, 10]
    w2 = w2_ref[...]        # [250, 20]  row = kw*50 + kh*10 + cin
    b2 = b2_ref[...]        # [1, 20]
    wf1 = wf1_ref[...]      # [320, 50]  row = w*80 + h*20 + c
    bf1 = bf1_ref[...]      # [1, 50]
    wf2 = wf2_ref[...]      # [50, 10]
    bf2 = bf2_ref[...]      # [1, 10]

    s0a, s1a = _pool_select_mats(12, 24)   # conv1 column pooling
    s0b, s1b = _pool_select_mats(4, 8)     # conv2 column pooling

    # ----------------- conv1 (1->10, k5) + maxpool2 + relu ----------------- #
    def conv1_row(u):
        # patches[v, kw*5+kh] = image[u+kh, v+kw] = xt[v+kw, u+kh]
        a = jnp.concatenate([xt[kw:kw + 24, u:u + 5] for kw in range(5)],
                            axis=-1)                                   # [24, 25]
        return jnp.dot(a, w1, preferred_element_type=f32) + b1         # [24, 10]

    act1 = []   # 12 rows of [12, 10];  act1[h][w, c] == relu(pool(conv1))[c, h, w]
    for i in range(12):
        m = jnp.maximum(conv1_row(2 * i), conv1_row(2 * i + 1))        # pool rows
        m = jnp.maximum(jnp.dot(s0a, m, preferred_element_type=f32),
                        jnp.dot(s1a, m, preferred_element_type=f32))   # pool cols
        act1.append(jnp.maximum(m, 0.0))                               # relu

    # Channel-stacked conv1 activation: act1_cat[w, h*10 + c]
    act1_cat = jnp.concatenate(act1, axis=-1)                          # [12, 120]

    # ----------------- conv2 (10->20, k5) + maxpool2 + relu ---------------- #
    # TODO(synk): Dropout2d after conv2 is identity (eval-mode forward only).
    def conv2_row(u):
        acc = b2
        for kw in range(5):
            patch = act1_cat[kw:kw + 8, u * 10:(u + 5) * 10]           # [8, 50]
            acc = acc + jnp.dot(patch, w2[kw * 50:(kw + 1) * 50, :],
                                preferred_element_type=f32)
        return acc                                                      # [8, 20]

    act2 = []   # 4 rows of [4, 20]
    for i in range(4):
        m = jnp.maximum(conv2_row(2 * i), conv2_row(2 * i + 1))
        m = jnp.maximum(jnp.dot(s0b, m, preferred_element_type=f32),
                        jnp.dot(s1b, m, preferred_element_type=f32))
        act2.append(jnp.maximum(m, 0.0))

    # ---------- flatten + fc1 + relu + fc2 + log_softmax (per image) ------- #
    act2_cat = jnp.concatenate(act2, axis=-1)                           # [4, 80] : [w, h*20+c]
    flat = jnp.concatenate([act2_cat[w:w + 1, :] for w in range(4)],
                           axis=-1)                                     # [1, 320] : w*80+h*20+c
    h1 = jnp.maximum(jnp.dot(flat, wf1, preferred_element_type=f32) + bf1, 0.0)
    # TODO(synk): F.dropout before fc2 is identity (eval-mode forward only).
    logits = jnp.dot(h1, wf2, preferred_element_type=f32) + bf2         # [1, 10]
    shifted = logits - jnp.max(logits, axis=-1, keepdims=True)
    lse = jnp.log(jnp.sum(jnp.exp(shifted), axis=-1, keepdims=True))
    out_ref[...] = (shifted - lse)[None].astype(out_ref.dtype)          # [1, 1, 10]


# ------------------------------ JAX wrappers -------------------------------- #

def init_params(key):
    """PyTorch-layout parameters (same shapes/init style as the nn.Module)."""
    ks = jax.random.split(key, 8)

    def u(k, shape, fan_in):
        bound = 1.0 / jnp.sqrt(jnp.float32(fan_in))
        return jax.random.uniform(k, shape, jnp.float32, -bound, bound)

    return {
        "conv1_w": u(ks[0], (10, 1, 5, 5), 1 * 5 * 5),
        "conv1_b": u(ks[1], (10,), 1 * 5 * 5),
        "conv2_w": u(ks[2], (20, 10, 5, 5), 10 * 5 * 5),
        "conv2_b": u(ks[3], (20,), 10 * 5 * 5),
        "fc1_w": u(ks[4], (50, 320), 320),
        "fc1_b": u(ks[5], (50,), 320),
        "fc2_w": u(ks[6], (10, 50), 50),
        "fc2_b": u(ks[7], (10,), 50),
    }


def prepare_params(p):
    """One-time re-layout of the PyTorch weights into the kernel's layouts."""
    f32 = jnp.float32
    return {
        # conv1: [o,1,kh,kw] -> [kw*5+kh, o]
        "w1": p["conv1_w"].reshape(10, 5, 5).transpose(2, 1, 0).reshape(25, 10).astype(f32),
        "b1": p["conv1_b"].reshape(1, 10).astype(f32),
        # conv2: [c,k,kh,kw] -> [kw*50+kh*10+k, c]
        "w2": p["conv2_w"].transpose(3, 2, 1, 0).reshape(250, 20).astype(f32),
        "b2": p["conv2_b"].reshape(1, 20).astype(f32),
        # fc1: rows reordered from PyTorch's (c,h,w) flatten to our (w,h,c) flatten
        "wf1": p["fc1_w"].reshape(50, 20, 4, 4).transpose(3, 2, 1, 0).reshape(320, 50).astype(f32),
        "bf1": p["fc1_b"].reshape(1, 50).astype(f32),
        "wf2": p["fc2_w"].T.astype(f32),
        "bf2": p["fc2_b"].reshape(1, 10).astype(f32),
    }


def net_forward(prepped, x):
    """x: [B, 1, 28, 28] NCHW -> log-probs [B, 10]."""
    B = x.shape[0]
    # Pre-transpose spatial dims so in-kernel conv1 patch columns are
    # unit-stride sublane slices:  xt[b, w, h] = x[b, 0, h, w].
    xt = jnp.transpose(x[:, 0, :, :], (0, 2, 1)).astype(jnp.float32)

    out = pl.pallas_call(
        _net_kernel,
        grid=(B,),
        out_shape=jax.ShapeDtypeStruct((B, 1, 10), jnp.float32),
        in_specs=[
            pl.BlockSpec((1, 28, 28), lambda b: (b, 0, 0)),   # image b
            pl.BlockSpec((25, 10), lambda b: (0, 0)),         # conv1 w (resident)
            pl.BlockSpec((1, 10), lambda b: (0, 0)),
            pl.BlockSpec((250, 20), lambda b: (0, 0)),        # conv2 w (resident)
            pl.BlockSpec((1, 20), lambda b: (0, 0)),
            pl.BlockSpec((320, 50), lambda b: (0, 0)),        # fc1 w (resident)
            pl.BlockSpec((1, 50), lambda b: (0, 0)),
            pl.BlockSpec((50, 10), lambda b: (0, 0)),         # fc2 w (resident)
            pl.BlockSpec((1, 10), lambda b: (0, 0)),
        ],
        out_specs=pl.BlockSpec((1, 1, 10), lambda b: (b, 0, 0)),
        compiler_params=pltpu.CompilerParams(
            dimension_semantics=("parallel",),   # batch grid: pipelined + 2-TC sharding on v7x
        ),
    )(xt, prepped["w1"], prepped["b1"], prepped["w2"], prepped["b2"],
      prepped["wf1"], prepped["bf1"], prepped["wf2"], prepped["bf2"])
    return out.reshape(B, 10)


def net_reference(params, x):
    """Pure-JAX (XLA) reference with PyTorch eval-mode semantics."""
    y = jax.lax.conv_general_dilated(
        x, params["conv1_w"], (1, 1), "VALID",
        dimension_numbers=("NCHW", "OIHW", "NCHW"))
    y = y + params["conv1_b"].reshape(1, -1, 1, 1)
    y = jax.lax.reduce_window(y, -jnp.inf, jax.lax.max,
                              (1, 1, 2, 2), (1, 1, 2, 2), "VALID")
    y = jax.nn.relu(y)
    y = jax.lax.conv_general_dilated(
        y, params["conv2_w"], (1, 1), "VALID",
        dimension_numbers=("NCHW", "OIHW", "NCHW"))
    y = y + params["conv2_b"].reshape(1, -1, 1, 1)
    y = jax.lax.reduce_window(y, -jnp.inf, jax.lax.max,
                              (1, 1, 2, 2), (1, 1, 2, 2), "VALID")
    y = jax.nn.relu(y)
    y = y.reshape(-1, 320)
    y = jax.nn.relu(y @ params["fc1_w"].T + params["fc1_b"])
    y = y @ params["fc2_w"].T + params["fc2_b"]
    return jax.nn.log_softmax(y, axis=1)


if __name__ == "__main__":
    key = jax.random.PRNGKey(0)
    pkey, xkey = jax.random.split(key)
    params = init_params(pkey)
    prepped = prepare_params(params)
    x = jax.random.normal(xkey, (2, 1, 28, 28), jnp.float32)

    out = jax.jit(net_forward)(prepped, x)
    out = jax.block_until_ready(out)

    assert out.shape == (2, 10), out.shape
    assert bool(jnp.all(jnp.isfinite(out)))
    # log_softmax rows must exponentiate-sum to 1
    assert bool(jnp.allclose(jnp.sum(jnp.exp(out), axis=1), 1.0, atol=1e-5))
    # match the pure-JAX reference forward
    ref = net_reference(params, x)
    assert bool(jnp.allclose(out, ref, atol=1e-3, rtol=1e-3))
    print("KERNEL_OK")
</pallas_src>

<mosaic_0001>
module attributes {stable_mosaic.version = 11 : i64} {
  func.func @_net_kernel(%arg0: i32, %arg1: memref<1x28x28xf32, #tpu.memory_space<vmem>>, %arg2: memref<25x10xf32, #tpu.memory_space<vmem>>, %arg3: memref<1x10xf32, #tpu.memory_space<vmem>>, %arg4: memref<250x20xf32, #tpu.memory_space<vmem>>, %arg5: memref<1x20xf32, #tpu.memory_space<vmem>>, %arg6: memref<320x50xf32, #tpu.memory_space<vmem>>, %arg7: memref<1x50xf32, #tpu.memory_space<vmem>>, %arg8: memref<50x10xf32, #tpu.memory_space<vmem>>, %arg9: memref<1x10xf32, #tpu.memory_space<vmem>>, %arg10: memref<1x1x10xf32, #tpu.memory_space<vmem>>) attributes {dimension_semantics = [#tpu.dimension_semantics<parallel>], iteration_bounds = array<i64: 2>, scalar_prefetch = 0 : i64, scratch_operands = 0 : i64, tpu.core_type = #tpu.core_type<tc>, window_params = [{transform_indices = @transform_0, window_bounds = array<i64: 1, 28, 28>}, {pipeline_mode = #tpu.pipeline_mode<synchronous>, transform_indices = @transform_1, window_bounds = array<i64: 25, 10>}, {pipeline_mode = #tpu.pipeline_mode<synchronous>, transform_indices = @transform_2, window_bounds = array<i64: 1, 10>}, {pipeline_mode = #tpu.pipeline_mode<synchronous>, transform_indices = @transform_3, window_bounds = array<i64: 250, 20>}, {pipeline_mode = #tpu.pipeline_mode<synchronous>, transform_indices = @transform_4, window_bounds = array<i64: 1, 20>}, {pipeline_mode = #tpu.pipeline_mode<synchronous>, transform_indices = @transform_5, window_bounds = array<i64: 320, 50>}, {pipeline_mode = #tpu.pipeline_mode<synchronous>, transform_indices = @transform_6, window_bounds = array<i64: 1, 50>}, {pipeline_mode = #tpu.pipeline_mode<synchronous>, transform_indices = @transform_7, window_bounds = array<i64: 50, 10>}, {pipeline_mode = #tpu.pipeline_mode<synchronous>, transform_indices = @transform_8, window_bounds = array<i64: 1, 10>}, {transform_indices = @transform_9, window_bounds = array<i64: 1, 1, 10>}]} {
    %c0 = arith.constant 0 : index
    %c0_0 = arith.constant 0 : index
    %c0_1 = arith.constant 0 : index
    %0 = vector.load %arg1[%c0, %c0_0, %c0_1] : memref<1x28x28xf32, #tpu.memory_space<vmem>>, vector<1x28x28xf32>
    %1 = vector.shape_cast %0 : vector<1x28x28xf32> to vector<28x28xf32>
    %c0_2 = arith.constant 0 : index
    %c0_3 = arith.constant 0 : index
    %2 = vector.load %arg2[%c0_2, %c0_3] : memref<25x10xf32, #tpu.memory_space<vmem>>, vector<25x10xf32>
    %c0_4 = arith.constant 0 : index
    %c0_5 = arith.constant 0 : index
    %3 = vector.load %arg3[%c0_4, %c0_5] : memref<1x10xf32, #tpu.memory_space<vmem>>, vector<1x10xf32>
    %c0_6 = arith.constant 0 : index
    %c0_7 = arith.constant 0 : index
    %4 = vector.load %arg4[%c0_6, %c0_7] : memref<250x20xf32, #tpu.memory_space<vmem>>, vector<250x20xf32>
    %c0_8 = arith.constant 0 : index
    %c0_9 = arith.constant 0 : index
    %5 = vector.load %arg5[%c0_8, %c0_9] : memref<1x20xf32, #tpu.memory_space<vmem>>, vector<1x20xf32>
    %c0_10 = arith.constant 0 : index
    %c0_11 = arith.constant 0 : index
    %6 = vector.load %arg6[%c0_10, %c0_11] : memref<320x50xf32, #tpu.memory_space<vmem>>, vector<320x50xf32>
    %c0_12 = arith.constant 0 : index
    %c0_13 = arith.constant 0 : index
    %7 = vector.load %arg7[%c0_12, %c0_13] : memref<1x50xf32, #tpu.memory_space<vmem>>, vector<1x50xf32>
    %c0_14 = arith.constant 0 : index
    %c0_15 = arith.constant 0 : index
    %8 = vector.load %arg8[%c0_14, %c0_15] : memref<50x10xf32, #tpu.memory_space<vmem>>, vector<50x10xf32>
    %c0_16 = arith.constant 0 : index
    %c0_17 = arith.constant 0 : index
    %9 = vector.load %arg9[%c0_16, %c0_17] : memref<1x10xf32, #tpu.memory_space<vmem>>, vector<1x10xf32>
    %10 = tpu.iota {dimensions = array<i32: 0>} : vector<12x24xi32>
    %11 = tpu.iota {dimensions = array<i32: 1>} : vector<12x24xi32>
    %c2_i32 = arith.constant 2 : i32
    %12 = vector.broadcast %c2_i32 : i32 to vector<12x24xi32>
    %13 = arith.muli %12, %10 : vector<12x24xi32>
    %14 = arith.cmpi eq, %11, %13 : vector<12x24xi32>
    %cst = arith.constant 1.000000e+00 : f32
    %cst_18 = arith.constant 0.000000e+00 : f32
    %15 = vector.broadcast %cst : f32 to vector<12x24xf32>
    %16 = vector.broadcast %cst_18 : f32 to vector<12x24xf32>
    %17 = arith.select %14, %15, %16 : vector<12x24xi1>, vector<12x24xf32>
    %c2_i32_19 = arith.constant 2 : i32
    %18 = vector.broadcast %c2_i32_19 : i32 to vector<12x24xi32>
    %19 = arith.muli %18, %10 : vector<12x24xi32>
    %c1_i32 = arith.constant 1 : i32
    %20 = vector.broadcast %c1_i32 : i32 to vector<12x24xi32>
    %21 = arith.addi %19, %20 : vector<12x24xi32>
    %22 = arith.cmpi eq, %11, %21 : vector<12x24xi32>
    %cst_20 = arith.constant 1.000000e+00 : f32
    %cst_21 = arith.constant 0.000000e+00 : f32
    %23 = vector.broadcast %cst_20 : f32 to vector<12x24xf32>
    %24 = vector.broadcast %cst_21 : f32 to vector<12x24xf32>
    %25 = arith.select %22, %23, %24 : vector<12x24xi1>, vector<12x24xf32>
    %26 = tpu.iota {dimensions = array<i32: 0>} : vector<4x8xi32>
    %27 = tpu.iota {dimensions = array<i32: 1>} : vector<4x8xi32>
    %c2_i32_22 = arith.constant 2 : i32
    %28 = vector.broadcast %c2_i32_22 : i32 to vector<4x8xi32>
    %29 = arith.muli %28, %26 : vector<4x8xi32>
    %30 = arith.cmpi eq, %27, %29 : vector<4x8xi32>
    %cst_23 = arith.constant 1.000000e+00 : f32
    %cst_24 = arith.constant 0.000000e+00 : f32
    %31 = vector.broadcast %cst_23 : f32 to vector<4x8xf32>
    %32 = vector.broadcast %cst_24 : f32 to vector<4x8xf32>
    %33 = arith.select %30, %31, %32 : vector<4x8xi1>, vector<4x8xf32>
    %c2_i32_25 = arith.constant 2 : i32
    %34 = vector.broadcast %c2_i32_25 : i32 to vector<4x8xi32>
    %35 = arith.muli %34, %26 : vector<4x8xi32>
    %c1_i32_26 = arith.constant 1 : i32
    %36 = vector.broadcast %c1_i32_26 : i32 to vector<4x8xi32>
    %37 = arith.addi %35, %36 : vector<4x8xi32>
    %38 = arith.cmpi eq, %27, %37 : vector<4x8xi32>
    %cst_27 = arith.constant 1.000000e+00 : f32
    %cst_28 = arith.constant 0.000000e+00 : f32
    %39 = vector.broadcast %cst_27 : f32 to vector<4x8xf32>
    %40 = vector.broadcast %cst_28 : f32 to vector<4x8xf32>
    %41 = arith.select %38, %39, %40 : vector<4x8xi1>, vector<4x8xf32>
    %42 = vector.extract_strided_slice %1 {offsets = [0, 0], sizes = [24, 5], strides = [1, 1]} : vector<28x28xf32> to vector<24x5xf32>
    %43 = vector.extract_strided_slice %1 {offsets = [1, 0], sizes = [24, 5], strides = [1, 1]} : vector<28x28xf32> to vector<24x5xf32>
    %44 = vector.extract_strided_slice %1 {offsets = [2, 0], sizes = [24, 5], strides = [1, 1]} : vector<28x28xf32> to vector<24x5xf32>
    %45 = vector.extract_strided_slice %1 {offsets = [3, 0], sizes = [24, 5], strides = [1, 1]} : vector<28x28xf32> to vector<24x5xf32>
    %46 = vector.extract_strided_slice %1 {offsets = [4, 0], sizes = [24, 5], strides = [1, 1]} : vector<28x28xf32> to vector<24x5xf32>
    %47 = tpu.concatenate %42, %43, %44, %45, %46 in 1 : vector<24x5xf32>, vector<24x5xf32>, vector<24x5xf32>, vector<24x5xf32>, vector<24x5xf32> -> vector<24x25xf32>
    %cst_29 = arith.constant dense<0.000000e+00> : vector<24x10xf32>
    %48 = tpu.matmul %47, %2, %cst_29 {dimension_numbers = #tpu.dot_dimension_numbers<[1], [0], [0], [1], [0, 0, 1, 1], [], []>} : vector<24x25xf32>, vector<25x10xf32>, vector<24x10xf32> -> vector<24x10xf32>
    %49 = vector.broadcast %3 : vector<1x10xf32> to vector<24x10xf32>
    %50 = arith.addf %48, %49 : vector<24x10xf32>
    %51 = vector.extract_strided_slice %1 {offsets = [0, 1], sizes = [24, 5], strides = [1, 1]} : vector<28x28xf32> to vector<24x5xf32>
    %52 = vector.extract_strided_slice %1 {offsets = [1, 1], sizes = [24, 5], strides = [1, 1]} : vector<28x28xf32> to vector<24x5xf32>
    %53 = vector.extract_strided_slice %1 {offsets = [2, 1], sizes = [24, 5], strides = [1, 1]} : vector<28x28xf32> to vector<24x5xf32>
    %54 = vector.extract_strided_slice %1 {offsets = [3, 1], sizes = [24, 5], strides = [1, 1]} : vector<28x28xf32> to vector<24x5xf32>
    %55 = vector.extract_strided_slice %1 {offsets = [4, 1], sizes = [24, 5], strides = [1, 1]} : vector<28x28xf32> to vector<24x5xf32>
    %56 = tpu.concatenate %51, %52, %53, %54, %55 in 1 : vector<24x5xf32>, vector<24x5xf32>, vector<24x5xf32>, vector<24x5xf32>, vector<24x5xf32> -> vector<24x25xf32>
    %cst_30 = arith.constant dense<0.000000e+00> : vector<24x10xf32>
    %57 = tpu.matmul %56, %2, %cst_30 {dimension_numbers = #tpu.dot_dimension_numbers<[1], [0], [0], [1], [0, 0, 1, 1], [], []>} : vector<24x25xf32>, vector<25x10xf32>, vector<24x10xf32> -> vector<24x10xf32>
    %58 = vector.broadcast %3 : vector<1x10xf32> to vector<24x10xf32>
    %59 = arith.addf %57, %58 : vector<24x10xf32>
    %60 = arith.maximumf %50, %59 : vector<24x10xf32>
    %cst_31 = arith.constant dense<0.000000e+00> : vector<12x10xf32>
    %61 = tpu.matmul %17, %60, %cst_31 {dimension_numbers = #tpu.dot_dimension_numbers<[1], [0], [0], [1], [0, 0, 1, 1], [], []>} : vector<12x24xf32>, vector<24x10xf32>, vector<12x10xf32> -> vector<12x10xf32>
    %cst_32 = arith.constant dense<0.000000e+00> : vector<12x10xf32>
    %62 = tpu.matmul %25, %60, %cst_32 {dimension_numbers = #tpu.dot_dimension_numbers<[1], [0], [0], [1], [0, 0, 1, 1], [], []>} : vector<12x24xf32>, vector<24x10xf32>, vector<12x10xf32> -> vector<12x10xf32>
    %63 = arith.maximumf %61, %62 : vector<12x10xf32>
    %cst_33 = arith.constant 0.000000e+00 : f32
    %64 = vector.broadcast %cst_33 : f32 to vector<12x10xf32>
    %65 = arith.maximumf %63, %64 : vector<12x10xf32>
    %66 = vector.extract_strided_slice %1 {offsets = [0, 2], sizes = [24, 5], strides = [1, 1]} : vector<28x28xf32> to vector<24x5xf32>
    %67 = vector.extract_strided_slice %1 {offsets = [1, 2], sizes = [24, 5], strides = [1, 1]} : vector<28x28xf32> to vector<24x5xf32>
    %68 = vector.extract_strided_slice %1 {offsets = [2, 2], sizes = [24, 5], strides = [1, 1]} : vector<28x28xf32> to vector<24x5xf32>
    %69 = vector.extract_strided_slice %1 {offsets = [3, 2], sizes = [24, 5], strides = [1, 1]} : vector<28x28xf32> to vector<24x5xf32>
    %70 = vector.extract_strided_slice %1 {offsets = [4, 2], sizes = [24, 5], strides = [1, 1]} : vector<28x28xf32> to vector<24x5xf32>
    %71 = tpu.concatenate %66, %67, %68, %69, %70 in 1 : vector<24x5xf32>, vector<24x5xf32>, vector<24x5xf32>, vector<24x5xf32>, vector<24x5xf32> -> vector<24x25xf32>
    %cst_34 = arith.constant dense<0.000000e+00> : vector<24x10xf32>
    %72 = tpu.matmul %71, %2, %cst_34 {dimension_numbers = #tpu.dot_dimension_numbers<[1], [0], [0], [1], [0, 0, 1, 1], [], []>} : vector<24x25xf32>, vector<25x10xf32>, vector<24x10xf32> -> vector<24x10xf32>
    %73 = vector.broadcast %3 : vector<1x10xf32> to vector<24x10xf32>
    %74 = arith.addf %72, %73 : vector<24x10xf32>
    %75 = vector.extract_strided_slice %1 {offsets = [0, 3], sizes = [24, 5], strides = [1, 1]} : vector<28x28xf32> to vector<24x5xf32>
    %76 = vector.extract_strided_slice %1 {offsets = [1, 3], sizes = [24, 5], strides = [1, 1]} : vector<28x28xf32> to vector<24x5xf32>
    %77 = vector.extract_strided_slice %1 {offsets = [2, 3], sizes = [24, 5], strides = [1, 1]} : vector<28x28xf32> to vector<24x5xf32>
    %78 = vector.extract_strided_slice %1 {offsets = [3, 3], sizes = [24, 5], strides = [1, 1]} : vector<28x28xf32> to vector<24x5xf32>
    %79 = vector.extract_strided_slice %1 {offsets = [4, 3], sizes = [24, 5], strides = [1, 1]} : vector<28x28xf32> to vector<24x5xf32>
    %80 = tpu.concatenate %75, %76, %77, %78, %79 in 1 : vector<24x5xf32>, vector<24x5xf32>, vector<24x5xf32>, vector<24x5xf32>, vector<24x5xf32> -> vector<24x25xf32>
    %cst_35 = arith.constant dense<0.000000e+00> : vector<24x10xf32>
    %81 = tpu.matmul %80, %2, %cst_35 {dimension_numbers = #tpu.dot_dimension_numbers<[1], [0], [0], [1], [0, 0, 1, 1], [], []>} : vector<24x25xf32>, vector<25x10xf32>, vector<24x10xf32> -> vector<24x10xf32>
    %82 = vector.broadcast %3 : vector<1x10xf32> to vector<24x10xf32>
    %83 = arith.addf %81, %82 : vector<24x10xf32>
    %84 = arith.maximumf %74, %83 : vector<24x10xf32>
    %cst_36 = arith.constant dense<0.000000e+00> : vector<12x10xf32>
    %85 = tpu.matmul %17, %84, %cst_36 {dimension_numbers = #tpu.dot_dimension_numbers<[1], [0], [0], [1], [0, 0, 1, 1], [], []>} : vector<12x24xf32>, vector<24x10xf32>, vector<12x10xf32> -> vector<12x10xf32>
    %cst_37 = arith.constant dense<0.000000e+00> : vector<12x10xf32>
    %86 = tpu.matmul %25, %84, %cst_37 {dimension_numbers = #tpu.dot_dimension_numbers<[1], [0], [0], [1], [0, 0, 1, 1], [], []>} : vector<12x24xf32>, vector<24x10xf32>, vector<12x10xf32> -> vector<12x10xf32>
    %87 = arith.maximumf %85, %86 : vector<12x10xf32>
    %cst_38 = arith.constant 0.000000e+00 : f32
    %88 = vector.broadcast %cst_38 : f32 to vector<12x10xf32>
    %89 = arith.maximumf %87, %88 : vector<12x10xf32>
    %90 = vector.extract_strided_slice %1 {offsets = [0, 4], sizes = [24, 5], strides = [1, 1]} : vector<28x28xf32> to vector<24x5xf32>
    %91 = vector.extract_strided_slice %1 {offsets = [1, 4], sizes = [24, 5], strides = [1, 1]} : vector<28x28xf32> to vector<24x5xf32>
    %92 = vector.extract_strided_slice %1 {offsets = [2, 4], sizes = [24, 5], strides = [1, 1]} : vector<28x28xf32> to vector<24x5xf32>
    %93 = vector.extract_strided_slice %1 {offsets = [3, 4], sizes = [24, 5], strides = [1, 1]} : vector<28x28xf32> to vector<24x5xf32>
    %94 = vector.extract_strided_slice %1 {offsets = [4, 4], sizes = [24, 5], strides = [1, 1]} : vector<28x28xf32> to vector<24x5xf32>
    %95 = tpu.concatenate %90, %91, %92, %93, %94 in 1 : vector<24x5xf32>, vector<24x5xf32>, vector<24x5xf32>, vector<24x5xf32>, vector<24x5xf32> -> vector<24x25xf32>
    %cst_39 = arith.constant dense<0.000000e+00> : vector<24x10xf32>
    %96 = tpu.matmul %95, %2, %cst_39 {dimension_numbers = #tpu.dot_dimension_numbers<[1], [0], [0], [1], [0, 0, 1, 1], [], []>} : vector<24x25xf32>, vector<25x10xf32>, vector<24x10xf32> -> vector<24x10xf32>
    %97 = vector.broadcast %3 : vector<1x10xf32> to vector<24x10xf32>
    %98 = arith.addf %96, %97 : vector<24x10xf32>
    %99 = vector.extract_strided_slice %1 {offsets = [0, 5], sizes = [24, 5], strides = [1, 1]} : vector<28x28xf32> to vector<24x5xf32>
    %100 = vector.extract_strided_slice %1 {offsets = [1, 5], sizes = [24, 5], strides = [1, 1]} : vector<28x28xf32> to vector<24x5xf32>
    %101 = vector.extract_strided_slice %1 {offsets = [2, 5], sizes = [24, 5], strides = [1, 1]} : vector<28x28xf32> to vector<24x5xf32>
    %102 = vector.extract_strided_slice %1 {offsets = [3, 5], sizes = [24, 5], strides = [1, 1]} : vector<28x28xf32> to vector<24x5xf32>
    %103 = vector.extract_strided_slice %1 {offsets = [4, 5], sizes = [24, 5], strides = [1, 1]} : vector<28x28xf32> to vector<24x5xf32>
    %104 = tpu.concatenate %99, %100, %101, %102, %103 in 1 : vector<24x5xf32>, vector<24x5xf32>, vector<24x5xf32>, vector<24x5xf32>, vector<24x5xf32> -> vector<24x25xf32>
    %cst_40 = arith.constant dense<0.000000e+00> : vector<24x10xf32>
    %105 = tpu.matmul %104, %2, %cst_40 {dimension_numbers = #tpu.dot_dimension_numbers<[1], [0], [0], [1], [0, 0, 1, 1], [], []>} : vector<24x25xf32>, vector<25x10xf32>, vector<24x10xf32> -> vector<24x10xf32>
    %106 = vector.broadcast %3 : vector<1x10xf32> to vector<24x10xf32>
    %107 = arith.addf %105, %106 : vector<24x10xf32>
    %108 = arith.maximumf %98, %107 : vector<24x10xf32>
    %cst_41 = arith.constant dense<0.000000e+00> : vector<12x10xf32>
    %109 = tpu.matmul %17, %108, %cst_41 {dimension_numbers = #tpu.dot_dimension_numbers<[1], [0], [0], [1], [0, 0, 1, 1], [], []>} : vector<12x24xf32>, vector<24x10xf32>, vector<12x10xf32> -> vector<12x10xf32>
    %cst_42 = arith.constant dense<0.000000e+00> : vector<12x10xf32>
    %110 = tpu.matmul %25, %108, %cst_42 {dimension_numbers = #tpu.dot_dimension_numbers<[1], [0], [0], [1], [0, 0, 1, 1], [], []>} : vector<12x24xf32>, vector<24x10xf32>, vector<12x10xf32> -> vector<12x10xf32>
    %111 = arith.maximumf %109, %110 : vector<12x10xf32>
    %cst_43 = arith.constant 0.000000e+00 : f32
    %112 = vector.broadcast %cst_43 : f32 to vector<12x10xf32>
    %113 = arith.maximumf %111, %112 : vector<12x10xf32>
    %114 = vector.extract_strided_slice %1 {offsets = [0, 6], sizes = [24, 5], strides = [1, 1]} : vector<28x28xf32> to vector<24x5xf32>
    %115 = vector.extract_strided_slice %1 {offsets = [1, 6], sizes = [24, 5], strides = [1, 1]} : vector<28x28xf32> to vector<24x5xf32>
    %116 = vector.extract_strided_slice %1 {offsets = [2, 6], sizes = [24, 5], strides = [1, 1]} : vector<28x28xf32> to vector<24x5xf32>
    %117 = vector.extract_strided_slice %1 {offsets = [3, 6], sizes = [24, 5], strides = [1, 1]} : vector<28x28xf32> to vector<24x5xf32>
    %118 = vector.extract_strided_slice %1 {offsets = [4, 6], sizes = [24, 5], strides = [1, 1]} : vector<28x28xf32> to vector<24x5xf32>
    %119 = tpu.concatenate %114, %115, %116, %117, %118 in 1 : vector<24x5xf32>, vector<24x5xf32>, vector<24x5xf32>, vector<24x5xf32>, vector<24x5xf32> -> vector<24x25xf32>
    %cst_44 = arith.constant dense<0.000000e+00> : vector<24x10xf32>
    %120 = tpu.matmul %119, %2, %cst_44 {dimension_numbers = #tpu.dot_dimension_numbers<[1], [0], [0], [1], [0, 0, 1, 1], [], []>} : vector<24x25xf32>, vector<25x10xf32>, vector<24x10xf32> -> vector<24x10xf32>
    %121 = vector.broadcast %3 : vector<1x10xf32> to vector<24x10xf32>
    %122 = arith.addf %120, %121 : vector<24x10xf32>
    %123 = vector.extract_strided_slice %1 {offsets = [0, 7], sizes = [24, 5], strides = [1, 1]} : vector<28x28xf32> to vector<24x5xf32>
    %124 = vector.extract_strided_slice %1 {offsets = [1, 7], sizes = [24, 5], strides = [1, 1]} : vector<28x28xf32> to vector<24x5xf32>
    %125 = vector.extract_strided_slice %1 {offsets = [2, 7], sizes = [24, 5], strides = [1, 1]} : vector<28x28xf32> to vector<24x5xf32>
    %126 = vector.extract_strided_slice %1 {offsets = [3, 7], sizes = [24, 5], strides = [1, 1]} : vector<28x28xf32> to vector<24x5xf32>
    %127 = vector.extract_strided_slice %1 {offsets = [4, 7], sizes = [24, 5], strides = [1, 1]} : vector<28x28xf32> to vector<24x5xf32>
    %128 = tpu.concatenate %123, %124, %125, %126, %127 in 1 : vector<24x5xf32>, vector<24x5xf32>, vector<24x5xf32>, vector<24x5xf32>, vector<24x5xf32> -> vector<24x25xf32>
    %cst_45 = arith.constant dense<0.000000e+00> : vector<24x10xf32>
    %129 = tpu.matmul %128, %2, %cst_45 {dimension_numbers = #tpu.dot_dimension_numbers<[1], [0], [0], [1], [0, 0, 1, 1], [], []>} : vector<24x25xf32>, vector<25x10xf32>, vector<24x10xf32> -> vector<24x10xf32>
    %130 = vector.broadcast %3 : vector<1x10xf32> to vector<24x10xf32>
    %131 = arith.addf %129, %130 : vector<24x10xf32>
    %132 = arith.maximumf %122, %131 : vector<24x10xf32>
    %cst_46 = arith.constant dense<0.000000e+00> : vector<12x10xf32>
    %133 = tpu.matmul %17, %132, %cst_46 {dimension_numbers = #tpu.dot_dimension_numbers<[1], [0], [0], [1], [0, 0, 1, 1], [], []>} : vector<12x24xf32>, vector<24x10xf32>, vector<12x10xf32> -> vector<12x10xf32>
    %cst_47 = arith.constant dense<0.000000e+00> : vector<12x10xf32>
    %134 = tpu.matmul %25, %132, %cst_47 {dimension_numbers = #tpu.dot_dimension_numbers<[1], [0], [0], [1], [0, 0, 1, 1], [], []>} : vector<12x24xf32>, vector<24x10xf32>, vector<12x10xf32> -> vector<12x10xf32>
    %135 = arith.maximumf %133, %134 : vector<12x10xf32>
    %cst_48 = arith.constant 0.000000e+00 : f32
    %136 = vector.broadcast %cst_48 : f32 to vector<12x10xf32>
    %137 = arith.maximumf %135, %136 : vector<12x10xf32>
    %138 = vector.extract_strided_slice %1 {offsets = [0, 8], sizes = [24, 5], strides = [1, 1]} : vector<28x28xf32> to vector<24x5xf32>
    %139 = vector.extract_strided_slice %1 {offsets = [1, 8], sizes = [24, 5], strides = [1, 1]} : vector<28x28xf32> to vector<24x5xf32>
    %140 = vector.extract_strided_slice %1 {offsets = [2, 8], sizes = [24, 5], strides = [1, 1]} : vector<28x28xf32> to vector<24x5xf32>
    %141 = vector.extract_strided_slice %1 {offsets = [3, 8], sizes = [24, 5], strides = [1, 1]} : vector<28x28xf32> to vector<24x5xf32>
    %142 = vector.extract_strided_slice %1 {offsets = [4, 8], sizes = [24, 5], strides = [1, 1]} : vector<28x28xf32> to vector<24x5xf32>
    %143 = tpu.concatenate %138, %139, %140, %141, %142 in 1 : vector<24x5xf32>, vector<24x5xf32>, vector<24x5xf32>, vector<24x5xf32>, vector<24x5xf32> -> vector<24x25xf32>
    %cst_49 = arith.constant dense<0.000000e+00> : vector<24x10xf32>
    %144 = tpu.matmul %143, %2, %cst_49 {dimension_numbers = #tpu.dot_dimension_numbers<[1], [0], [0], [1], [0, 0, 1, 1], [], []>} : vector<24x25xf32>, vector<25x10xf32>, vector<24x10xf32> -> vector<24x10xf32>
    %145 = vector.broadcast %3 : vector<1x10xf32> to vector<24x10xf32>
    %146 = arith.addf %144, %145 : vector<24x10xf32>
    %147 = vector.extract_strided_slice %1 {offsets = [0, 9], sizes = [24, 5], strides = [1, 1]} : vector<28x28xf32> to vector<24x5xf32>
    %148 = vector.extract_strided_slice %1 {offsets = [1, 9], sizes = [24, 5], strides = [1, 1]} : vector<28x28xf32> to vector<24x5xf32>
    %149 = vector.extract_strided_slice %1 {offsets = [2, 9], sizes = [24, 5], strides = [1, 1]} : vector<28x28xf32> to vector<24x5xf32>
    %150 = vector.extract_strided_slice %1 {offsets = [3, 9], sizes = [24, 5], strides = [1, 1]} : vector<28x28xf32> to vector<24x5xf32>
    %151 = vector.extract_strided_slice %1 {offsets = [4, 9], sizes = [24, 5], strides = [1, 1]} : vector<28x28xf32> to vector<24x5xf32>
    %152 = tpu.concatenate %147, %148, %149, %150, %151 in 1 : vector<24x5xf32>, vector<24x5xf32>, vector<24x5xf32>, vector<24x5xf32>, vector<24x5xf32> -> vector<24x25xf32>
    %cst_50 = arith.constant dense<0.000000e+00> : vector<24x10xf32>
    %153 = tpu.matmul %152, %2, %cst_50 {dimension_numbers = #tpu.dot_dimension_numbers<[1], [0], [0], [1], [0, 0, 1, 1], [], []>} : vector<24x25xf32>, vector<25x10xf32>, vector<24x10xf32> -> vector<24x10xf32>
    %154 = vector.broadcast %3 : vector<1x10xf32> to vector<24x10xf32>
    %155 = arith.addf %153, %154 : vector<24x10xf32>
    %156 = arith.maximumf %146, %155 : vector<24x10xf32>
    %cst_51 = arith.constant dense<0.000000e+00> : vector<12x10xf32>
    %157 = tpu.matmul %17, %156, %cst_51 {dimension_numbers = #tpu.dot_dimension_numbers<[1], [0], [0], [1], [0, 0, 1, 1], [], []>} : vector<12x24xf32>, vector<24x10xf32>, vector<12x10xf32> -> vector<12x10xf32>
    %cst_52 = arith.constant dense<0.000000e+00> : vector<12x10xf32>
    %158 = tpu.matmul %25, %156, %cst_52 {dimension_numbers = #tpu.dot_dimension_numbers<[1], [0], [0], [1], [0, 0, 1, 1], [], []>} : vector<12x24xf32>, vector<24x10xf32>, vector<12x10xf32> -> vector<12x10xf32>
    %159 = arith.maximumf %157, %158 : vector<12x10xf32>
    %cst_53 = arith.constant 0.000000e+00 : f32
    %160 = vector.broadcast %cst_53 : f32 to vector<12x10xf32>
    %161 = arith.maximumf %159, %160 : vector<12x10xf32>
    %162 = vector.extract_strided_slice %1 {offsets = [0, 10], sizes = [24, 5], strides = [1, 1]} : vector<28x28xf32> to vector<24x5xf32>
    %163 = vector.extract_strided_slice %1 {offsets = [1, 10], sizes = [24, 5], strides = [1, 1]} : vector<28x28xf32> to vector<24x5xf32>
    %164 = vector.extract_strided_slice %1 {offsets = [2, 10], sizes = [24, 5], strides = [1, 1]} : vector<28x28xf32> to vector<24x5xf32>
    %165 = vector.extract_strided_slice %1 {offsets = [3, 10], sizes = [24, 5], strides = [1, 1]} : vector<28x28xf32> to vector<24x5xf32>
    %166 = vector.extract_strided_slice %1 {offsets = [4, 10], sizes = [24, 5], strides = [1, 1]} : vector<28x28xf32> to vector<24x5xf32>
    %167 = tpu.concatenate %162, %163, %164, %165, %166 in 1 : vector<24x5xf32>, vector<24x5xf32>, vector<24x5xf32>, vector<24x5xf32>, vector<24x5xf32> -> vector<24x25xf32>
    %cst_54 = arith.constant dense<0.000000e+00> : vector<24x10xf32>
    %168 = tpu.matmul %167, %2, %cst_54 {dimension_numbers = #tpu.dot_dimension_numbers<[1], [0], [0], [1], [0, 0, 1, 1], [], []>} : vector<24x25xf32>, vector<25x10xf32>, vector<24x10xf32> -> vector<24x10xf32>
    %169 = vector.broadcast %3 : vector<1x10xf32> to vector<24x10xf32>
    %170 = arith.addf %168, %169 : vector<24x10xf32>
    %171 = vector.extract_strided_slice %1 {offsets = [0, 11], sizes = [24, 5], strides = [1, 1]} : vector<28x28xf32> to vector<24x5xf32>
    %172 = vector.extract_strided_slice %1 {offsets = [1, 11], sizes = [24, 5], strides = [1, 1]} : vector<28x28xf32> to vector<24x5xf32>
    %173 = vector.extract_strided_slice %1 {offsets = [2, 11], sizes = [24, 5], strides = [1, 1]} : vector<28x28xf32> to vector<24x5xf32>
    %174 = vector.extract_strided_slice %1 {offsets = [3, 11], sizes = [24, 5], strides = [1, 1]} : vector<28x28xf32> to vector<24x5xf32>
    %175 = vector.extract_strided_slice %1 {offsets = [4, 11], sizes = [24, 5], strides = [1, 1]} : vector<28x28xf32> to vector<24x5xf32>
    %176 = tpu.concatenate %171, %172, %173, %174, %175 in 1 : vector<24x5xf32>, vector<24x5xf32>, vector<24x5xf32>, vector<24x5xf32>, vector<24x5xf32> -> vector<24x25xf32>
    %cst_55 = arith.constant dense<0.000000e+00> : vector<24x10xf32>
    %177 = tpu.matmul %176, %2, %cst_55 {dimension_numbers = #tpu.dot_dimension_numbers<[1], [0], [0], [1], [0, 0, 1, 1], [], []>} : vector<24x25xf32>, vector<25x10xf32>, vector<24x10xf32> -> vector<24x10xf32>
    %178 = vector.broadcast %3 : vector<1x10xf32> to vector<24x10xf32>
    %179 = arith.addf %177, %178 : vector<24x10xf32>
    %180 = arith.maximumf %170, %179 : vector<24x10xf32>
    %cst_56 = arith.constant dense<0.000000e+00> : vector<12x10xf32>
    %181 = tpu.matmul %17, %180, %cst_56 {dimension_numbers = #tpu.dot_dimension_numbers<[1], [0], [0], [1], [0, 0, 1, 1], [], []>} : vector<12x24xf32>, vector<24x10xf32>, vector<12x10xf32> -> vector<12x10xf32>
    %cst_57 = arith.constant dense<0.000000e+00> : vector<12x10xf32>
    %182 = tpu.matmul %25, %180, %cst_57 {dimension_numbers = #tpu.dot_dimension_numbers<[1], [0], [0], [1], [0, 0, 1, 1], [], []>} : vector<12x24xf32>, vector<24x10xf32>, vector<12x10xf32> -> vector<12x10xf32>
    %183 = arith.maximumf %181, %182 : vector<12x10xf32>
    %cst_58 = arith.constant 0.000000e+00 : f32
    %184 = vector.broadcast %cst_58 : f32 to vector<12x10xf32>
    %185 = arith.maximumf %183, %184 : vector<12x10xf32>
    %186 = vector.extract_strided_slice %1 {offsets = [0, 12], sizes = [24, 5], strides = [1, 1]} : vector<28x28xf32> to vector<24x5xf32>
    %187 = vector.extract_strided_slice %1 {offsets = [1, 12], sizes = [24, 5], strides = [1, 1]} : vector<28x28xf32> to vector<24x5xf32>
    %188 = vector.extract_strided_slice %1 {offsets = [2, 12], sizes = [24, 5], strides = [1, 1]} : vector<28x28xf32> to vector<24x5xf32>
    %189 = vector.extract_strided_slice %1 {offsets = [3, 12], sizes = [24, 5], strides = [1, 1]} : vector<28x28xf32> to vector<24x5xf32>
    %190 = vector.extract_strided_slice %1 {offsets = [4, 12], sizes = [24, 5], strides = [1, 1]} : vector<28x28xf32> to vector<24x5xf32>
    %191 = tpu.concatenate %186, %187, %188, %189, %190 in 1 : vector<24x5xf32>, vector<24x5xf32>, vector<24x5xf32>, vector<24x5xf32>, vector<24x5xf32> -> vector<24x25xf32>
    %cst_59 = arith.constant dense<0.000000e+00> : vector<24x10xf32>
    %192 = tpu.matmul %191, %2, %cst_59 {dimension_numbers = #tpu.dot_dimension_numbers<[1], [0], [0], [1], [0, 0, 1, 1], [], []>} : vector<24x25xf32>, vector<25x10xf32>, vector<24x10xf32> -> vector<24x10xf32>
    %193 = vector.broadcast %3 : vector<1x10xf32> to vector<24x10xf32>
    %194 = arith.addf %192, %193 : vector<24x10xf32>
    %195 = vector.extract_strided_slice %1 {offsets = [0, 13], sizes = [24, 5], strides = [1, 1]} : vector<28x28xf32> to vector<24x5xf32>
    %196 = vector.extract_strided_slice %1 {offsets = [1, 13], sizes = [24, 5], strides = [1, 1]} : vector<28x28xf32> to vector<24x5xf32>
    %197 = vector.extract_strided_slice %1 {offsets = [2, 13], sizes = [24, 5], strides = [1, 1]} : vector<28x28xf32> to vector<24x5xf32>
    %198 = vector.extract_strided_slice %1 {offsets = [3, 13], sizes = [24, 5], strides = [1, 1]} : vector<28x28xf32> to vector<24x5xf32>
    %199 = vector.extract_strided_slice %1 {offsets = [4, 13], sizes = [24, 5], strides = [1, 1]} : vector<28x28xf32> to vector<24x5xf32>
    %200 = tpu.concatenate %195, %196, %197, %198, %199 in 1 : vector<24x5xf32>, vector<24x5xf32>, vector<24x5xf32>, vector<24x5xf32>, vector<24x5xf32> -> vector<24x25xf32>
    %cst_60 = arith.constant dense<0.000000e+00> : vector<24x10xf32>
    %201 = tpu.matmul %200, %2, %cst_60 {dimension_numbers = #tpu.dot_dimension_numbers<[1], [0], [0], [1], [0, 0, 1, 1], [], []>} : vector<24x25xf32>, vector<25x10xf32>, vector<24x10xf32> -> vector<24x10xf32>
    %202 = vector.broadcast %3 : vector<1x10xf32> to vector<24x10xf32>
    %203 = arith.addf %201, %202 : vector<24x10xf32>
    %204 = arith.maximumf %194, %203 : vector<24x10xf32>
    %cst_61 = arith.constant dense<0.000000e+00> : vector<12x10xf32>
    %205 = tpu.matmul %17, %204, %cst_61 {dimension_numbers = #tpu.dot_dimension_numbers<[1], [0], [0], [1], [0, 0, 1, 1], [], []>} : vector<12x24xf32>, vector<24x10xf32>, vector<12x10xf32> -> vector<12x10xf32>
    %cst_62 = arith.constant dense<0.000000e+00> : vector<12x10xf32>
    %206 = tpu.matmul %25, %204, %cst_62 {dimension_numbers = #tpu.dot_dimension_numbers<[1], [0], [0], [1], [0, 0, 1, 1], [], []>} : vector<12x24xf32>, vector<24x10xf32>, vector<12x10xf32> -> vector<12x10xf32>
    %207 = arith.maximumf %205, %206 : vector<12x10xf32>
    %cst_63 = arith.constant 0.000000e+00 : f32
    %208 = vector.broadcast %cst_63 : f32 to vector<12x10xf32>
    %209 = arith.maximumf %207, %208 : vector<12x10xf32>
    %210 = vector.extract_strided_slice %1 {offsets = [0, 14], sizes = [24, 5], strides = [1, 1]} : vector<28x28xf32> to vector<24x5xf32>
    %211 = vector.extract_strided_slice %1 {offsets = [1, 14], sizes = [24, 5], strides = [1, 1]} : vector<28x28xf32> to vector<24x5xf32>
    %212 = vector.extract_strided_slice %1 {offsets = [2, 14], sizes = [24, 5], strides = [1, 1]} : vector<28x28xf32> to vector<24x5xf32>
    %213 = vector.extract_strided_slice %1 {offsets = [3, 14], sizes = [24, 5], strides = [1, 1]} : vector<28x28xf32> to vector<24x5xf32>
    %214 = vector.extract_strided_slice %1 {offsets = [4, 14], sizes = [24, 5], strides = [1, 1]} : vector<28x28xf32> to vector<24x5xf32>
    %215 = tpu.concatenate %210, %211, %212, %213, %214 in 1 : vector<24x5xf32>, vector<24x5xf32>, vector<24x5xf32>, vector<24x5xf32>, vector<24x5xf32> -> vector<24x25xf32>
    %cst_64 = arith.constant dense<0.000000e+00> : vector<24x10xf32>
    %216 = tpu.matmul %215, %2, %cst_64 {dimension_numbers = #tpu.dot_dimension_numbers<[1], [0], [0], [1], [0, 0, 1, 1], [], []>} : vector<24x25xf32>, vector<25x10xf32>, vector<24x10xf32> -> vector<24x10xf32>
    %217 = vector.broadcast %3 : vector<1x10xf32> to vector<24x10xf32>
    %218 = arith.addf %216, %217 : vector<24x10xf32>
    %219 = vector.extract_strided_slice %1 {offsets = [0, 15], sizes = [24, 5], strides = [1, 1]} : vector<28x28xf32> to vector<24x5xf32>
    %220 = vector.extract_strided_slice %1 {offsets = [1, 15], sizes = [24, 5], strides = [1, 1]} : vector<28x28xf32> to vector<24x5xf32>
    %221 = vector.extract_strided_slice %1 {offsets = [2, 15], sizes = [24, 5], strides = [1, 1]} : vector<28x28xf32> to vector<24x5xf32>
    %222 = vector.extract_strided_slice %1 {offsets = [3, 15], sizes = [24, 5], strides = [1, 1]} : vector<28x28xf32> to vector<24x5xf32>
    %223 = vector.extract_strided_slice %1 {offsets = [4, 15], sizes = [24, 5], strides = [1, 1]} : vector<28x28xf32> to vector<24x5xf32>
    %224 = tpu.concatenate %219, %220, %221, %222, %223 in 1 : vector<24x5xf32>, vector<24x5xf32>, vector<24x5xf32>, vector<24x5xf32>, vector<24x5xf32> -> vector<24x25xf32>
    %cst_65 = arith.constant dense<0.000000e+00> : vector<24x10xf32>
    %225 = tpu.matmul %224, %2, %cst_65 {dimension_numbers = #tpu.dot_dimension_numbers<[1], [0], [0], [1], [0, 0, 1, 1], [], []>} : vector<24x25xf32>, vector<25x10xf32>, vector<24x10xf32> -> vector<24x10xf32>
    %226 = vector.broadcast %3 : vector<1x10xf32> to vector<24x10xf32>
    %227 = arith.addf %225, %226 : vector<24x10xf32>
    %228 = arith.maximumf %218, %227 : vector<24x10xf32>
    %cst_66 = arith.constant dense<0.000000e+00> : vector<12x10xf32>
    %229 = tpu.matmul %17, %228, %cst_66 {dimension_numbers = #tpu.dot_dimension_numbers<[1], [0], [0], [1], [0, 0, 1, 1], [], []>} : vector<12x24xf32>, vector<24x10xf32>, vector<12x10xf32> -> vector<12x10xf32>
    %cst_67 = arith.constant dense<0.000000e+00> : vector<12x10xf32>
    %230 = tpu.matmul %25, %228, %cst_67 {dimension_numbers = #tpu.dot_dimension_numbers<[1], [0], [0], [1], [0, 0, 1, 1], [], []>} : vector<12x24xf32>, vector<24x10xf32>, vector<12x10xf32> -> vector<12x10xf32>
    %231 = arith.maximumf %229, %230 : vector<12x10xf32>
    %cst_68 = arith.constant 0.000000e+00 : f32
    %232 = vector.broadcast %cst_68 : f32 to vector<12x10xf32>
    %233 = arith.maximumf %231, %232 : vector<12x10xf32>
    %234 = vector.extract_strided_slice %1 {offsets = [0, 16], sizes = [24, 5], strides = [1, 1]} : vector<28x28xf32> to vector<24x5xf32>
    %235 = vector.extract_strided_slice %1 {offsets = [1, 16], sizes = [24, 5], strides = [1, 1]} : vector<28x28xf32> to vector<24x5xf32>
    %236 = vector.extract_strided_slice %1 {offsets = [2, 16], sizes = [24, 5], strides = [1, 1]} : vector<28x28xf32> to vector<24x5xf32>
    %237 = vector.extract_strided_slice %1 {offsets = [3, 16], sizes = [24, 5], strides = [1, 1]} : vector<28x28xf32> to vector<24x5xf32>
    %238 = vector.extract_strided_slice %1 {offsets = [4, 16], sizes = [24, 5], strides = [1, 1]} : vector<28x28xf32> to vector<24x5xf32>
    %239 = tpu.concatenate %234, %235, %236, %237, %238 in 1 : vector<24x5xf32>, vector<24x5xf32>, vector<24x5xf32>, vector<24x5xf32>, vector<24x5xf32> -> vector<24x25xf32>
    %cst_69 = arith.constant dense<0.000000e+00> : vector<24x10xf32>
    %240 = tpu.matmul %239, %2, %cst_69 {dimension_numbers = #tpu.dot_dimension_numbers<[1], [0], [0], [1], [0, 0, 1, 1], [], []>} : vector<24x25xf32>, vector<25x10xf32>, vector<24x10xf32> -> vector<24x10xf32>
    %241 = vector.broadcast %3 : vector<1x10xf32> to vector<24x10xf32>
    %242 = arith.addf %240, %241 : vector<24x10xf32>
    %243 = vector.extract_strided_slice %1 {offsets = [0, 17], sizes = [24, 5], strides = [1, 1]} : vector<28x28xf32> to vector<24x5xf32>
    %244 = vector.extract_strided_slice %1 {offsets = [1, 17], sizes = [24, 5], strides = [1, 1]} : vector<28x28xf32> to vector<24x5xf32>
    %245 = vector.extract_strided_slice %1 {offsets = [2, 17], sizes = [24, 5], strides = [1, 1]} : vector<28x28xf32> to vector<24x5xf32>
    %246 = vector.extract_strided_slice %1 {offsets = [3, 17], sizes = [24, 5], strides = [1, 1]} : vector<28x28xf32> to vector<24x5xf32>
    %247 = vector.extract_strided_slice %1 {offsets = [4, 17], sizes = [24, 5], strides = [1, 1]} : vector<28x28xf32> to vector<24x5xf32>
    %248 = tpu.concatenate %243, %244, %245, %246, %247 in 1 : vector<24x5xf32>, vector<24x5xf32>, vector<24x5xf32>, vector<24x5xf32>, vector<24x5xf32> -> vector<24x25xf32>
    %cst_70 = arith.constant dense<0.000000e+00> : vector<24x10xf32>
    %249 = tpu.matmul %248, %2, %cst_70 {dimension_numbers = #tpu.dot_dimension_numbers<[1], [0], [0], [1], [0, 0, 1, 1], [], []>} : vector<24x25xf32>, vector<25x10xf32>, vector<24x10xf32> -> vector<24x10xf32>
    %250 = vector.broadcast %3 : vector<1x10xf32> to vector<24x10xf32>
    %251 = arith.addf %249, %250 : vector<24x10xf32>
    %252 = arith.maximumf %242, %251 : vector<24x10xf32>
    %cst_71 = arith.constant dense<0.000000e+00> : vector<12x10xf32>
    %253 = tpu.matmul %17, %252, %cst_71 {dimension_numbers = #tpu.dot_dimension_numbers<[1], [0], [0], [1], [0, 0, 1, 1], [], []>} : vector<12x24xf32>, vector<24x10xf32>, vector<12x10xf32> -> vector<12x10xf32>
    %cst_72 = arith.constant dense<0.000000e+00> : vector<12x10xf32>
    %254 = tpu.matmul %25, %252, %cst_72 {dimension_numbers = #tpu.dot_dimension_numbers<[1], [0], [0], [1], [0, 0, 1, 1], [], []>} : vector<12x24xf32>, vector<24x10xf32>, vector<12x10xf32> -> vector<12x10xf32>
    %255 = arith.maximumf %253, %254 : vector<12x10xf32>
    %cst_73 = arith.constant 0.000000e+00 : f32
    %256 = vector.broadcast %cst_73 : f32 to vector<12x10xf32>
    %257 = arith.maximumf %255, %256 : vector<12x10xf32>
    %258 = vector.extract_strided_slice %1 {offsets = [0, 18], sizes = [24, 5], strides = [1, 1]} : vector<28x28xf32> to vector<24x5xf32>
    %259 = vector.extract_strided_slice %1 {offsets = [1, 18], sizes = [24, 5], strides = [1, 1]} : vector<28x28xf32> to vector<24x5xf32>
    %260 = vector.extract_strided_slice %1 {offsets = [2, 18], sizes = [24, 5], strides = [1, 1]} : vector<28x28xf32> to vector<24x5xf32>
    %261 = vector.extract_strided_slice %1 {offsets = [3, 18], sizes = [24, 5], strides = [1, 1]} : vector<28x28xf32> to vector<24x5xf32>
    %262 = vector.extract_strided_slice %1 {offsets = [4, 18], sizes = [24, 5], strides = [1, 1]} : vector<28x28xf32> to vector<24x5xf32>
    %263 = tpu.concatenate %258, %259, %260, %261, %262 in 1 : vector<24x5xf32>, vector<24x5xf32>, vector<24x5xf32>, vector<24x5xf32>, vector<24x5xf32> -> vector<24x25xf32>
    %cst_74 = arith.constant dense<0.000000e+00> : vector<24x10xf32>
    %264 = tpu.matmul %263, %2, %cst_74 {dimension_numbers = #tpu.dot_dimension_numbers<[1], [0], [0], [1], [0, 0, 1, 1], [], []>} : vector<24x25xf32>, vector<25x10xf32>, vector<24x10xf32> -> vector<24x10xf32>
    %265 = vector.broadcast %3 : vector<1x10xf32> to vector<24x10xf32>
    %266 = arith.addf %264, %265 : vector<24x10xf32>
    %267 = vector.extract_strided_slice %1 {offsets = [0, 19], sizes = [24, 5], strides = [1, 1]} : vector<28x28xf32> to vector<24x5xf32>
    %268 = vector.extract_strided_slice %1 {offsets = [1, 19], sizes = [24, 5], strides = [1, 1]} : vector<28x28xf32> to vector<24x5xf32>
    %269 = vector.extract_strided_slice %1 {offsets = [2, 19], sizes = [24, 5], strides = [1, 1]} : vector<28x28xf32> to vector<24x5xf32>
    %270 = vector.extract_strided_slice %1 {offsets = [3, 19], sizes = [24, 5], strides = [1, 1]} : vector<28x28xf32> to vector<24x5xf32>
    %271 = vector.extract_strided_slice %1 {offsets = [4, 19], sizes = [24, 5], strides = [1, 1]} : vector<28x28xf32> to vector<24x5xf32>
    %272 = tpu.concatenate %267, %268, %269, %270, %271 in 1 : vector<24x5xf32>, vector<24x5xf32>, vector<24x5xf32>, vector<24x5xf32>, vector<24x5xf32> -> vector<24x25xf32>
    %cst_75 = arith.constant dense<0.000000e+00> : vector<24x10xf32>
    %273 = tpu.matmul %272, %2, %cst_75 {dimension_numbers = #tpu.dot_dimension_numbers<[1], [0], [0], [1], [0, 0, 1, 1], [], []>} : vector<24x25xf32>, vector<25x10xf32>, vector<24x10xf32> -> vector<24x10xf32>
    %274 = vector.broadcast %3 : vector<1x10xf32> to vector<24x10xf32>
    %275 = arith.addf %273, %274 : vector<24x10xf32>
    %276 = arith.maximumf %266, %275 : vector<24x10xf32>
    %cst_76 = arith.constant dense<0.000000e+00> : vector<12x10xf32>
    %277 = tpu.matmul %17, %276, %cst_76 {dimension_numbers = #tpu.dot_dimension_numbers<[1], [0], [0], [1], [0, 0, 1, 1], [], []>} : vector<12x24xf32>, vector<24x10xf32>, vector<12x10xf32> -> vector<12x10xf32>
    %cst_77 = arith.constant dense<0.000000e+00> : vector<12x10xf32>
    %278 = tpu.matmul %25, %276, %cst_77 {dimension_numbers = #tpu.dot_dimension_numbers<[1], [0], [0], [1], [0, 0, 1, 1], [], []>} : vector<12x24xf32>, vector<24x10xf32>, vector<12x10xf32> -> vector<12x10xf32>
    %279 = arith.maximumf %277, %278 : vector<12x10xf32>
    %cst_78 = arith.constant 0.000000e+00 : f32
    %280 = vector.broadcast %cst_78 : f32 to vector<12x10xf32>
    %281 = arith.maximumf %279, %280 : vector<12x10xf32>
    %282 = vector.extract_strided_slice %1 {offsets = [0, 20], sizes = [24, 5], strides = [1, 1]} : vector<28x28xf32> to vector<24x5xf32>
    %283 = vector.extract_strided_slice %1 {offsets = [1, 20], sizes = [24, 5], strides = [1, 1]} : vector<28x28xf32> to vector<24x5xf32>
    %284 = vector.extract_strided_slice %1 {offsets = [2, 20], sizes = [24, 5], strides = [1, 1]} : vector<28x28xf32> to vector<24x5xf32>
    %285 = vector.extract_strided_slice %1 {offsets = [3, 20], sizes = [24, 5], strides = [1, 1]} : vector<28x28xf32> to vector<24x5xf32>
    %286 = vector.extract_strided_slice %1 {offsets = [4, 20], sizes = [24, 5], strides = [1, 1]} : vector<28x28xf32> to vector<24x5xf32>
    %287 = tpu.concatenate %282, %283, %284, %285, %286 in 1 : vector<24x5xf32>, vector<24x5xf32>, vector<24x5xf32>, vector<24x5xf32>, vector<24x5xf32> -> vector<24x25xf32>
    %cst_79 = arith.constant dense<0.000000e+00> : vector<24x10xf32>
    %288 = tpu.matmul %287, %2, %cst_79 {dimension_numbers = #tpu.dot_dimension_numbers<[1], [0], [0], [1], [0, 0, 1, 1], [], []>} : vector<24x25xf32>, vector<25x10xf32>, vector<24x10xf32> -> vector<24x10xf32>
    %289 = vector.broadcast %3 : vector<1x10xf32> to vector<24x10xf32>
    %290 = arith.addf %288, %289 : vector<24x10xf32>
    %291 = vector.extract_strided_slice %1 {offsets = [0, 21], sizes = [24, 5], strides = [1, 1]} : vector<28x28xf32> to vector<24x5xf32>
    %292 = vector.extract_strided_slice %1 {offsets = [1, 21], sizes = [24, 5], strides = [1, 1]} : vector<28x28xf32> to vector<24x5xf32>
    %293 = vector.extract_strided_slice %1 {offsets = [2, 21], sizes = [24, 5], strides = [1, 1]} : vector<28x28xf32> to vector<24x5xf32>
    %294 = vector.extract_strided_slice %1 {offsets = [3, 21], sizes = [24, 5], strides = [1, 1]} : vector<28x28xf32> to vector<24x5xf32>
    %295 = vector.extract_strided_slice %1 {offsets = [4, 21], sizes = [24, 5], strides = [1, 1]} : vector<28x28xf32> to vector<24x5xf32>
    %296 = tpu.concatenate %291, %292, %293, %294, %295 in 1 : vector<24x5xf32>, vector<24x5xf32>, vector<24x5xf32>, vector<24x5xf32>, vector<24x5xf32> -> vector<24x25xf32>
    %cst_80 = arith.constant dense<0.000000e+00> : vector<24x10xf32>
    %297 = tpu.matmul %296, %2, %cst_80 {dimension_numbers = #tpu.dot_dimension_numbers<[1], [0], [0], [1], [0, 0, 1, 1], [], []>} : vector<24x25xf32>, vector<25x10xf32>, vector<24x10xf32> -> vector<24x10xf32>
    %298 = vector.broadcast %3 : vector<1x10xf32> to vector<24x10xf32>
    %299 = arith.addf %297, %298 : vector<24x10xf32>
    %300 = arith.maximumf %290, %299 : vector<24x10xf32>
    %cst_81 = arith.constant dense<0.000000e+00> : vector<12x10xf32>
    %301 = tpu.matmul %17, %300, %cst_81 {dimension_numbers = #tpu.dot_dimension_numbers<[1], [0], [0], [1], [0, 0, 1, 1], [], []>} : vector<12x24xf32>, vector<24x10xf32>, vector<12x10xf32> -> vector<12x10xf32>
    %cst_82 = arith.constant dense<0.000000e+00> : vector<12x10xf32>
    %302 = tpu.matmul %25, %300, %cst_82 {dimension_numbers = #tpu.dot_dimension_numbers<[1], [0], [0], [1], [0, 0, 1, 1], [], []>} : vector<12x24xf32>, vector<24x10xf32>, vector<12x10xf32> -> vector<12x10xf32>
    %303 = arith.maximumf %301, %302 : vector<12x10xf32>
    %cst_83 = arith.constant 0.000000e+00 : f32
    %304 = vector.broadcast %cst_83 : f32 to vector<12x10xf32>
    %305 = arith.maximumf %303, %304 : vector<12x10xf32>
    %306 = vector.extract_strided_slice %1 {offsets = [0, 22], sizes = [24, 5], strides = [1, 1]} : vector<28x28xf32> to vector<24x5xf32>
    %307 = vector.extract_strided_slice %1 {offsets = [1, 22], sizes = [24, 5], strides = [1, 1]} : vector<28x28xf32> to vector<24x5xf32>
    %308 = vector.extract_strided_slice %1 {offsets = [2, 22], sizes = [24, 5], strides = [1, 1]} : vector<28x28xf32> to vector<24x5xf32>
    %309 = vector.extract_strided_slice %1 {offsets = [3, 22], sizes = [24, 5], strides = [1, 1]} : vector<28x28xf32> to vector<24x5xf32>
    %310 = vector.extract_strided_slice %1 {offsets = [4, 22], sizes = [24, 5], strides = [1, 1]} : vector<28x28xf32> to vector<24x5xf32>
    %311 = tpu.concatenate %306, %307, %308, %309, %310 in 1 : vector<24x5xf32>, vector<24x5xf32>, vector<24x5xf32>, vector<24x5xf32>, vector<24x5xf32> -> vector<24x25xf32>
    %cst_84 = arith.constant dense<0.000000e+00> : vector<24x10xf32>
    %312 = tpu.matmul %311, %2, %cst_84 {dimension_numbers = #tpu.dot_dimension_numbers<[1], [0], [0], [1], [0, 0, 1, 1], [], []>} : vector<24x25xf32>, vector<25x10xf32>, vector<24x10xf32> -> vector<24x10xf32>
    %313 = vector.broadcast %3 : vector<1x10xf32> to vector<24x10xf32>
    %314 = arith.addf %312, %313 : vector<24x10xf32>
    %315 = vector.extract_strided_slice %1 {offsets = [0, 23], sizes = [24, 5], strides = [1, 1]} : vector<28x28xf32> to vector<24x5xf32>
    %316 = vector.extract_strided_slice %1 {offsets = [1, 23], sizes = [24, 5], strides = [1, 1]} : vector<28x28xf32> to vector<24x5xf32>
    %317 = vector.extract_strided_slice %1 {offsets = [2, 23], sizes = [24, 5], strides = [1, 1]} : vector<28x28xf32> to vector<24x5xf32>
    %318 = vector.extract_strided_slice %1 {offsets = [3, 23], sizes = [24, 5], strides = [1, 1]} : vector<28x28xf32> to vector<24x5xf32>
    %319 = vector.extract_strided_slice %1 {offsets = [4, 23], sizes = [24, 5], strides = [1, 1]} : vector<28x28xf32> to vector<24x5xf32>
    %320 = tpu.concatenate %315, %316, %317, %318, %319 in 1 : vector<24x5xf32>, vector<24x5xf32>, vector<24x5xf32>, vector<24x5xf32>, vector<24x5xf32> -> vector<24x25xf32>
    %cst_85 = arith.constant dense<0.000000e+00> : vector<24x10xf32>
    %321 = tpu.matmul %320, %2, %cst_85 {dimension_numbers = #tpu.dot_dimension_numbers<[1], [0], [0], [1], [0, 0, 1, 1], [], []>} : vector<24x25xf32>, vector<25x10xf32>, vector<24x10xf32> -> vector<24x10xf32>
    %322 = vector.broadcast %3 : vector<1x10xf32> to vector<24x10xf32>
    %323 = arith.addf %321, %322 : vector<24x10xf32>
    %324 = arith.maximumf %314, %323 : vector<24x10xf32>
    %cst_86 = arith.constant dense<0.000000e+00> : vector<12x10xf32>
    %325 = tpu.matmul %17, %324, %cst_86 {dimension_numbers = #tpu.dot_dimension_numbers<[1], [0], [0], [1], [0, 0, 1, 1], [], []>} : vector<12x24xf32>, vector<24x10xf32>, vector<12x10xf32> -> vector<12x10xf32>
    %cst_87 = arith.constant dense<0.000000e+00> : vector<12x10xf32>
    %326 = tpu.matmul %25, %324, %cst_87 {dimension_numbers = #tpu.dot_dimension_numbers<[1], [0], [0], [1], [0, 0, 1, 1], [], []>} : vector<12x24xf32>, vector<24x10xf32>, vector<12x10xf32> -> vector<12x10xf32>
    %327 = arith.maximumf %325, %326 : vector<12x10xf32>
    %cst_88 = arith.constant 0.000000e+00 : f32
    %328 = vector.broadcast %cst_88 : f32 to vector<12x10xf32>
    %329 = arith.maximumf %327, %328 : vector<12x10xf32>
    %330 = tpu.concatenate %65, %89, %113, %137, %161, %185, %209, %233, %257, %281, %305, %329 in 1 : vector<12x10xf32>, vector<12x10xf32>, vector<12x10xf32>, vector<12x10xf32>, vector<12x10xf32>, vector<12x10xf32>, vector<12x10xf32>, vector<12x10xf32>, vector<12x10xf32>, vector<12x10xf32>, vector<12x10xf32>, vector<12x10xf32> -> vector<12x120xf32>
    %331 = vector.extract_strided_slice %330 {offsets = [0, 0], sizes = [8, 50], strides = [1, 1]} : vector<12x120xf32> to vector<8x50xf32>
    %332 = vector.extract_strided_slice %4 {offsets = [0, 0], sizes = [50, 20], strides = [1, 1]} : vector<250x20xf32> to vector<50x20xf32>
    %cst_89 = arith.constant dense<0.000000e+00> : vector<8x20xf32>
    %333 = tpu.matmul %331, %332, %cst_89 {dimension_numbers = #tpu.dot_dimension_numbers<[1], [0], [0], [1], [0, 0, 1, 1], [], []>} : vector<8x50xf32>, vector<50x20xf32>, vector<8x20xf32> -> vector<8x20xf32>
    %334 = vector.broadcast %5 : vector<1x20xf32> to vector<8x20xf32>
    %335 = arith.addf %334, %333 : vector<8x20xf32>
    %336 = vector.extract_strided_slice %330 {offsets = [1, 0], sizes = [8, 50], strides = [1, 1]} : vector<12x120xf32> to vector<8x50xf32>
    %337 = vector.extract_strided_slice %4 {offsets = [50, 0], sizes = [50, 20], strides = [1, 1]} : vector<250x20xf32> to vector<50x20xf32>
    %cst_90 = arith.constant dense<0.000000e+00> : vector<8x20xf32>
    %338 = tpu.matmul %336, %337, %cst_90 {dimension_numbers = #tpu.dot_dimension_numbers<[1], [0], [0], [1], [0, 0, 1, 1], [], []>} : vector<8x50xf32>, vector<50x20xf32>, vector<8x20xf32> -> vector<8x20xf32>
    %339 = arith.addf %335, %338 : vector<8x20xf32>
    %340 = vector.extract_strided_slice %330 {offsets = [2, 0], sizes = [8, 50], strides = [1, 1]} : vector<12x120xf32> to vector<8x50xf32>
    %341 = vector.extract_strided_slice %4 {offsets = [100, 0], sizes = [50, 20], strides = [1, 1]} : vector<250x20xf32> to vector<50x20xf32>
    %cst_91 = arith.constant dense<0.000000e+00> : vector<8x20xf32>
    %342 = tpu.matmul %340, %341, %cst_91 {dimension_numbers = #tpu.dot_dimension_numbers<[1], [0], [0], [1], [0, 0, 1, 1], [], []>} : vector<8x50xf32>, vector<50x20xf32>, vector<8x20xf32> -> vector<8x20xf32>
    %343 = arith.addf %339, %342 : vector<8x20xf32>
    %344 = vector.extract_strided_slice %330 {offsets = [3, 0], sizes = [8, 50], strides = [1, 1]} : vector<12x120xf32> to vector<8x50xf32>
    %345 = vector.extract_strided_slice %4 {offsets = [150, 0], sizes = [50, 20], strides = [1, 1]} : vector<250x20xf32> to vector<50x20xf32>
    %cst_92 = arith.constant dense<0.000000e+00> : vector<8x20xf32>
    %346 = tpu.matmul %344, %345, %cst_92 {dimension_numbers = #tpu.dot_dimension_numbers<[1], [0], [0], [1], [0, 0, 1, 1], [], []>} : vector<8x50xf32>, vector<50x20xf32>, vector<8x20xf32> -> vector<8x20xf32>
    %347 = arith.addf %343, %346 : vector<8x20xf32>
    %348 = vector.extract_strided_slice %330 {offsets = [4, 0], sizes = [8, 50], strides = [1, 1]} : vector<12x120xf32> to vector<8x50xf32>
    %349 = vector.extract_strided_slice %4 {offsets = [200, 0], sizes = [50, 20], strides = [1, 1]} : vector<250x20xf32> to vector<50x20xf32>
    %cst_93 = arith.constant dense<0.000000e+00> : vector<8x20xf32>
    %350 = tpu.matmul %348, %349, %cst_93 {dimension_numbers = #tpu.dot_dimension_numbers<[1], [0], [0], [1], [0, 0, 1, 1], [], []>} : vector<8x50xf32>, vector<50x20xf32>, vector<8x20xf32> -> vector<8x20xf32>
    %351 = arith.addf %347, %350 : vector<8x20xf32>
    %352 = vector.extract_strided_slice %330 {offsets = [0, 10], sizes = [8, 50], strides = [1, 1]} : vector<12x120xf32> to vector<8x50xf32>
    %353 = vector.extract_strided_slice %4 {offsets = [0, 0], sizes = [50, 20], strides = [1, 1]} : vector<250x20xf32> to vector<50x20xf32>
    %cst_94 = arith.constant dense<0.000000e+00> : vector<8x20xf32>
    %354 = tpu.matmul %352, %353, %cst_94 {dimension_numbers = #tpu.dot_dimension_numbers<[1], [0], [0], [1], [0, 0, 1, 1], [], []>} : vector<8x50xf32>, vector<50x20xf32>, vector<8x20xf32> -> vector<8x20xf32>
    %355 = vector.broadcast %5 : vector<1x20xf32> to vector<8x20xf32>
    %356 = arith.addf %355, %354 : vector<8x20xf32>
    %357 = vector.extract_strided_slice %330 {offsets = [1, 10], sizes = [8, 50], strides = [1, 1]} : vector<12x120xf32> to vector<8x50xf32>
    %358 = vector.extract_strided_slice %4 {offsets = [50, 0], sizes = [50, 20], strides = [1, 1]} : vector<250x20xf32> to vector<50x20xf32>
    %cst_95 = arith.constant dense<0.000000e+00> : vector<8x20xf32>
    %359 = tpu.matmul %357, %358, %cst_95 {dimension_numbers = #tpu.dot_dimension_numbers<[1], [0], [0], [1], [0, 0, 1, 1], [], []>} : vector<8x50xf32>, vector<50x20xf32>, vector<8x20xf32> -> vector<8x20xf32>
    %360 = arith.addf %356, %359 : vector<8x20xf32>
    %361 = vector.extract_strided_slice %330 {offsets = [2, 10], sizes = [8, 50], strides = [1, 1]} : vector<12x120xf32> to vector<8x50xf32>
    %362 = vector.extract_strided_slice %4 {offsets = [100, 0], sizes = [50, 20], strides = [1, 1]} : vector<250x20xf32> to vector<50x20xf32>
    %cst_96 = arith.constant dense<0.000000e+00> : vector<8x20xf32>
    %363 = tpu.matmul %361, %362, %cst_96 {dimension_numbers = #tpu.dot_dimension_numbers<[1], [0], [0], [1], [0, 0, 1, 1], [], []>} : vector<8x50xf32>, vector<50x20xf32>, vector<8x20xf32> -> vector<8x20xf32>
    %364 = arith.addf %360, %363 : vector<8x20xf32>
    %365 = vector.extract_strided_slice %330 {offsets = [3, 10], sizes = [8, 50], strides = [1, 1]} : vector<12x120xf32> to vector<8x50xf32>
    %366 = vector.extract_strided_slice %4 {offsets = [150, 0], sizes = [50, 20], strides = [1, 1]} : vector<250x20xf32> to vector<50x20xf32>
    %cst_97 = arith.constant dense<0.000000e+00> : vector<8x20xf32>
    %367 = tpu.matmul %365, %366, %cst_97 {dimension_numbers = #tpu.dot_dimension_numbers<[1], [0], [0], [1], [0, 0, 1, 1], [], []>} : vector<8x50xf32>, vector<50x20xf32>, vector<8x20xf32> -> vector<8x20xf32>
    %368 = arith.addf %364, %367 : vector<8x20xf32>
    %369 = vector.extract_strided_slice %330 {offsets = [4, 10], sizes = [8, 50], strides = [1, 1]} : vector<12x120xf32> to vector<8x50xf32>
    %370 = vector.extract_strided_slice %4 {offsets = [200, 0], sizes = [50, 20], strides = [1, 1]} : vector<250x20xf32> to vector<50x20xf32>
    %cst_98 = arith.constant dense<0.000000e+00> : vector<8x20xf32>
    %371 = tpu.matmul %369, %370, %cst_98 {dimension_numbers = #tpu.dot_dimension_numbers<[1], [0], [0], [1], [0, 0, 1, 1], [], []>} : vector<8x50xf32>, vector<50x20xf32>, vector<8x20xf32> -> vector<8x20xf32>
    %372 = arith.addf %368, %371 : vector<8x20xf32>
    %373 = arith.maximumf %351, %372 : vector<8x20xf32>
    %cst_99 = arith.constant dense<0.000000e+00> : vector<4x20xf32>
    %374 = tpu.matmul %33, %373, %cst_99 {dimension_numbers = #tpu.dot_dimension_numbers<[1], [0], [0], [1], [0, 0, 1, 1], [], []>} : vector<4x8xf32>, vector<8x20xf32>, vector<4x20xf32> -> vector<4x20xf32>
    %cst_100 = arith.constant dense<0.000000e+00> : vector<4x20xf32>
    %375 = tpu.matmul %41, %373, %cst_100 {dimension_numbers = #tpu.dot_dimension_numbers<[1], [0], [0], [1], [0, 0, 1, 1], [], []>} : vector<4x8xf32>, vector<8x20xf32>, vector<4x20xf32> -> vector<4x20xf32>
    %376 = arith.maximumf %374, %375 : vector<4x20xf32>
    %cst_101 = arith.constant 0.000000e+00 : f32
    %377 = vector.broadcast %cst_101 : f32 to vector<4x20xf32>
    %378 = arith.maximumf %376, %377 : vector<4x20xf32>
    %379 = vector.extract_strided_slice %330 {offsets = [0, 20], sizes = [8, 50], strides = [1, 1]} : vector<12x120xf32> to vector<8x50xf32>
    %380 = vector.extract_strided_slice %4 {offsets = [0, 0], sizes = [50, 20], strides = [1, 1]} : vector<250x20xf32> to vector<50x20xf32>
    %cst_102 = arith.constant dense<0.000000e+00> : vector<8x20xf32>
    %381 = tpu.matmul %379, %380, %cst_102 {dimension_numbers = #tpu.dot_dimension_numbers<[1], [0], [0], [1], [0, 0, 1, 1], [], []>} : vector<8x50xf32>, vector<50x20xf32>, vector<8x20xf32> -> vector<8x20xf32>
    %382 = vector.broadcast %5 : vector<1x20xf32> to vector<8x20xf32>
    %383 = arith.addf %382, %381 : vector<8x20xf32>
    %384 = vector.extract_strided_slice %330 {offsets = [1, 20], sizes = [8, 50], strides = [1, 1]} : vector<12x120xf32> to vector<8x50xf32>
    %385 = vector.extract_strided_slice %4 {offsets = [50, 0], sizes = [50, 20], strides = [1, 1]} : vector<250x20xf32> to vector<50x20xf32>
    %cst_103 = arith.constant dense<0.000000e+00> : vector<8x20xf32>
    %386 = tpu.matmul %384, %385, %cst_103 {dimension_numbers = #tpu.dot_dimension_numbers<[1], [0], [0], [1], [0, 0, 1, 1], [], []>} : vector<8x50xf32>, vector<50x20xf32>, vector<8x20xf32> -> vector<8x20xf32>
    %387 = arith.addf %383, %386 : vector<8x20xf32>
    %388 = vector.extract_strided_slice %330 {offsets = [2, 20], sizes = [8, 50], strides = [1, 1]} : vector<12x120xf32> to vector<8x50xf32>
    %389 = vector.extract_strided_slice %4 {offsets = [100, 0], sizes = [50, 20], strides = [1, 1]} : vector<250x20xf32> to vector<50x20xf32>
    %cst_104 = arith.constant dense<0.000000e+00> : vector<8x20xf32>
    %390 = tpu.matmul %388, %389, %cst_104 {dimension_numbers = #tpu.dot_dimension_numbers<[1], [0], [0], [1], [0, 0, 1, 1], [], []>} : vector<8x50xf32>, vector<50x20xf32>, vector<8x20xf32> -> vector<8x20xf32>
    %391 = arith.addf %387, %390 : vector<8x20xf32>
    %392 = vector.extract_strided_slice %330 {offsets = [3, 20], sizes = [8, 50], strides = [1, 1]} : vector<12x120xf32> to vector<8x50xf32>
    %393 = vector.extract_strided_slice %4 {offsets = [150, 0], sizes = [50, 20], strides = [1, 1]} : vector<250x20xf32> to vector<50x20xf32>
    %cst_105 = arith.constant dense<0.000000e+00> : vector<8x20xf32>
    %394 = tpu.matmul %392, %393, %cst_105 {dimension_numbers = #tpu.dot_dimension_numbers<[1], [0], [0], [1], [0, 0, 1, 1], [], []>} : vector<8x50xf32>, vector<50x20xf32>, vector<8x20xf32> -> vector<8x20xf32>
    %395 = arith.addf %391, %394 : vector<8x20xf32>
    %396 = vector.extract_strided_slice %330 {offsets = [4, 20], sizes = [8, 50], strides = [1, 1]} : vector<12x120xf32> to vector<8x50xf32>
    %397 = vector.extract_strided_slice %4 {offsets = [200, 0], sizes = [50, 20], strides = [1, 1]} : vector<250x20xf32> to vector<50x20xf32>
    %cst_106 = arith.constant dense<0.000000e+00> : vector<8x20xf32>
    %398 = tpu.matmul %396, %397, %cst_106 {dimension_numbers = #tpu.dot_dimension_numbers<[1], [0], [0], [1], [0, 0, 1, 1], [], []>} : vector<8x50xf32>, vector<50x20xf32>, vector<8x20xf32> -> vector<8x20xf32>
    %399 = arith.addf %395, %398 : vector<8x20xf32>
    %400 = vector.extract_strided_slice %330 {offsets = [0, 30], sizes = [8, 50], strides = [1, 1]} : vector<12x120xf32> to vector<8x50xf32>
    %401 = vector.extract_strided_slice %4 {offsets = [0, 0], sizes = [50, 20], strides = [1, 1]} : vector<250x20xf32> to vector<50x20xf32>
    %cst_107 = arith.constant dense<0.000000e+00> : vector<8x20xf32>
    %402 = tpu.matmul %400, %401, %cst_107 {dimension_numbers = #tpu.dot_dimension_numbers<[1], [0], [0], [1], [0, 0, 1, 1], [], []>} : vector<8x50xf32>, vector<50x20xf32>, vector<8x20xf32> -> vector<8x20xf32>
    %403 = vector.broadcast %5 : vector<1x20xf32> to vector<8x20xf32>
    %404 = arith.addf %403, %402 : vector<8x20xf32>
    %405 = vector.extract_strided_slice %330 {offsets = [1, 30], sizes = [8, 50], strides = [1, 1]} : vector<12x120xf32> to vector<8x50xf32>
    %406 = vector.extract_strided_slice %4 {offsets = [50, 0], sizes = [50, 20], strides = [1, 1]} : vector<250x20xf32> to vector<50x20xf32>
    %cst_108 = arith.constant dense<0.000000e+00> : vector<8x20xf32>
    %407 = tpu.matmul %405, %406, %cst_108 {dimension_numbers = #tpu.dot_dimension_numbers<[1], [0], [0], [1], [0, 0, 1, 1], [], []>} : vector<8x50xf32>, vector<50x20xf32>, vector<8x20xf32> -> vector<8x20xf32>
    %408 = arith.addf %404, %407 : vector<8x20xf32>
    %409 = vector.extract_strided_slice %330 {offsets = [2, 30], sizes = [8, 50], strides = [1, 1]} : vector<12x120xf32> to vector<8x50xf32>
    %410 = vector.extract_strided_slice %4 {offsets = [100, 0], sizes = [50, 20], strides = [1, 1]} : vector<250x20xf32> to vector<50x20xf32>
    %cst_109 = arith.constant dense<0.000000e+00> : vector<8x20xf32>
    %411 = tpu.matmul %409, %410, %cst_109 {dimension_numbers = #tpu.dot_dimension_numbers<[1], [0], [0], [1], [0, 0, 1, 1], [], []>} : vector<8x50xf32>, vector<50x20xf32>, vector<8x20xf32> -> vector<8x20xf32>
    %412 = arith.addf %408, %411 : vector<8x20xf32>
    %413 = vector.extract_strided_slice %330 {offsets = [3, 30], sizes = [8, 50], strides = [1, 1]} : vector<12x120xf32> to vector<8x50xf32>
    %414 = vector.extract_strided_slice %4 {offsets = [150, 0], sizes = [50, 20], strides = [1, 1]} : vector<250x20xf32> to vector<50x20xf32>
    %cst_110 = arith.constant dense<0.000000e+00> : vector<8x20xf32>
    %415 = tpu.matmul %413, %414, %cst_110 {dimension_numbers = #tpu.dot_dimension_numbers<[1], [0], [0], [1], [0, 0, 1, 1], [], []>} : vector<8x50xf32>, vector<50x20xf32>, vector<8x20xf32> -> vector<8x20xf32>
    %416 = arith.addf %412, %415 : vector<8x20xf32>
    %417 = vector.extract_strided_slice %330 {offsets = [4, 30], sizes = [8, 50], strides = [1, 1]} : vector<12x120xf32> to vector<8x50xf32>
    %418 = vector.extract_strided_slice %4 {offsets = [200, 0], sizes = [50, 20], strides = [1, 1]} : vector<250x20xf32> to vector<50x20xf32>
    %cst_111 = arith.constant dense<0.000000e+00> : vector<8x20xf32>
    %419 = tpu.matmul %417, %418, %cst_111 {dimension_numbers = #tpu.dot_dimension_numbers<[1], [0], [0], [1], [0, 0, 1, 1], [], []>} : vector<8x50xf32>, vector<50x20xf32>, vector<8x20xf32> -> vector<8x20xf32>
    %420 = arith.addf %416, %419 : vector<8x20xf32>
    %421 = arith.maximumf %399, %420 : vector<8x20xf32>
    %cst_112 = arith.constant dense<0.000000e+00> : vector<4x20xf32>
    %422 = tpu.matmul %33, %421, %cst_112 {dimension_numbers = #tpu.dot_dimension_numbers<[1], [0], [0], [1], [0, 0, 1, 1], [], []>} : vector<4x8xf32>, vector<8x20xf32>, vector<4x20xf32> -> vector<4x20xf32>
    %cst_113 = arith.constant dense<0.000000e+00> : vector<4x20xf32>
    %423 = tpu.matmul %41, %421, %cst_113 {dimension_numbers = #tpu.dot_dimension_numbers<[1], [0], [0], [1], [0, 0, 1, 1], [], []>} : vector<4x8xf32>, vector<8x20xf32>, vector<4x20xf32> -> vector<4x20xf32>
    %424 = arith.maximumf %422, %423 : vector<4x20xf32>
    %cst_114 = arith.constant 0.000000e+00 : f32
    %425 = vector.broadcast %cst_114 : f32 to vector<4x20xf32>
    %426 = arith.maximumf %424, %425 : vector<4x20xf32>
    %427 = vector.extract_strided_slice %330 {offsets = [0, 40], sizes = [8, 50], strides = [1, 1]} : vector<12x120xf32> to vector<8x50xf32>
    %428 = vector.extract_strided_slice %4 {offsets = [0, 0], sizes = [50, 20], strides = [1, 1]} : vector<250x20xf32> to vector<50x20xf32>
    %cst_115 = arith.constant dense<0.000000e+00> : vector<8x20xf32>
    %429 = tpu.matmul %427, %428, %cst_115 {dimension_numbers = #tpu.dot_dimension_numbers<[1], [0], [0], [1], [0, 0, 1, 1], [], []>} : vector<8x50xf32>, vector<50x20xf32>, vector<8x20xf32> -> vector<8x20xf32>
    %430 = vector.broadcast %5 : vector<1x20xf32> to vector<8x20xf32>
    %431 = arith.addf %430, %429 : vector<8x20xf32>
    %432 = vector.extract_strided_slice %330 {offsets = [1, 40], sizes = [8, 50], strides = [1, 1]} : vector<12x120xf32> to vector<8x50xf32>
    %433 = vector.extract_strided_slice %4 {offsets = [50, 0], sizes = [50, 20], strides = [1, 1]} : vector<250x20xf32> to vector<50x20xf32>
    %cst_116 = arith.constant dense<0.000000e+00> : vector<8x20xf32>
    %434 = tpu.matmul %432, %433, %cst_116 {dimension_numbers = #tpu.dot_dimension_numbers<[1], [0], [0], [1], [0, 0, 1, 1], [], []>} : vector<8x50xf32>, vector<50x20xf32>, vector<8x20xf32> -> vector<8x20xf32>
    %435 = arith.addf %431, %434 : vector<8x20xf32>
    %436 = vector.extract_strided_slice %330 {offsets = [2, 40], sizes = [8, 50], strides = [1, 1]} : vector<12x120xf32> to vector<8x50xf32>
    %437 = vector.extract_strided_slice %4 {offsets = [100, 0], sizes = [50, 20], strides = [1, 1]} : vector<250x20xf32> to vector<50x20xf32>
    %cst_117 = arith.constant dense<0.000000e+00> : vector<8x20xf32>
    %438 = tpu.matmul %436, %437, %cst_117 {dimension_numbers = #tpu.dot_dimension_numbers<[1], [0], [0], [1], [0, 0, 1, 1], [], []>} : vector<8x50xf32>, vector<50x20xf32>, vector<8x20xf32> -> vector<8x20xf32>
    %439 = arith.addf %435, %438 : vector<8x20xf32>
    %440 = vector.extract_strided_slice %330 {offsets = [3, 40], sizes = [8, 50], strides = [1, 1]} : vector<12x120xf32> to vector<8x50xf32>
    %441 = vector.extract_strided_slice %4 {offsets = [150, 0], sizes = [50, 20], strides = [1, 1]} : vector<250x20xf32> to vector<50x20xf32>
    %cst_118 = arith.constant dense<0.000000e+00> : vector<8x20xf32>
    %442 = tpu.matmul %440, %441, %cst_118 {dimension_numbers = #tpu.dot_dimension_numbers<[1], [0], [0], [1], [0, 0, 1, 1], [], []>} : vector<8x50xf32>, vector<50x20xf32>, vector<8x20xf32> -> vector<8x20xf32>
    %443 = arith.addf %439, %442 : vector<8x20xf32>
    %444 = vector.extract_strided_slice %330 {offsets = [4, 40], sizes = [8, 50], strides = [1, 1]} : vector<12x120xf32> to vector<8x50xf32>
    %445 = vector.extract_strided_slice %4 {offsets = [200, 0], sizes = [50, 20], strides = [1, 1]} : vector<250x20xf32> to vector<50x20xf32>
    %cst_119 = arith.constant dense<0.000000e+00> : vector<8x20xf32>
    %446 = tpu.matmul %444, %445, %cst_119 {dimension_numbers = #tpu.dot_dimension_numbers<[1], [0], [0], [1], [0, 0, 1, 1], [], []>} : vector<8x50xf32>, vector<50x20xf32>, vector<8x20xf32> -> vector<8x20xf32>
    %447 = arith.addf %443, %446 : vector<8x20xf32>
    %448 = vector.extract_strided_slice %330 {offsets = [0, 50], sizes = [8, 50], strides = [1, 1]} : vector<12x120xf32> to vector<8x50xf32>
    %449 = vector.extract_strided_slice %4 {offsets = [0, 0], sizes = [50, 20], strides = [1, 1]} : vector<250x20xf32> to vector<50x20xf32>
    %cst_120 = arith.constant dense<0.000000e+00> : vector<8x20xf32>
    %450 = tpu.matmul %448, %449, %cst_120 {dimension_numbers = #tpu.dot_dimension_numbers<[1], [0], [0], [1], [0, 0, 1, 1], [], []>} : vector<8x50xf32>, vector<50x20xf32>, vector<8x20xf32> -> vector<8x20xf32>
    %451 = vector.broadcast %5 : vector<1x20xf32> to vector<8x20xf32>
    %452 = arith.addf %451, %450 : vector<8x20xf32>
    %453 = vector.extract_strided_slice %330 {offsets = [1, 50], sizes = [8, 50], strides = [1, 1]} : vector<12x120xf32> to vector<8x50xf32>
    %454 = vector.extract_strided_slice %4 {offsets = [50, 0], sizes = [50, 20], strides = [1, 1]} : vector<250x20xf32> to vector<50x20xf32>
    %cst_121 = arith.constant dense<0.000000e+00> : vector<8x20xf32>
    %455 = tpu.matmul %453, %454, %cst_121 {dimension_numbers = #tpu.dot_dimension_numbers<[1], [0], [0], [1], [0, 0, 1, 1], [], []>} : vector<8x50xf32>, vector<50x20xf32>, vector<8x20xf32> -> vector<8x20xf32>
    %456 = arith.addf %452, %455 : vector<8x20xf32>
    %457 = vector.extract_strided_slice %330 {offsets = [2, 50], sizes = [8, 50], strides = [1, 1]} : vector<12x120xf32> to vector<8x50xf32>
    %458 = vector.extract_strided_slice %4 {offsets = [100, 0], sizes = [50, 20], strides = [1, 1]} : vector<250x20xf32> to vector<50x20xf32>
    %cst_122 = arith.constant dense<0.000000e+00> : vector<8x20xf32>
    %459 = tpu.matmul %457, %458, %cst_122 {dimension_numbers = #tpu.dot_dimension_numbers<[1], [0], [0], [1], [0, 0, 1, 1], [], []>} : vector<8x50xf32>, vector<50x20xf32>, vector<8x20xf32> -> vector<8x20xf32>
    %460 = arith.addf %456, %459 : vector<8x20xf32>
    %461 = vector.extract_strided_slice %330 {offsets = [3, 50], sizes = [8, 50], strides = [1, 1]} : vector<12x120xf32> to vector<8x50xf32>
    %462 = vector.extract_strided_slice %4 {offsets = [150, 0], sizes = [50, 20], strides = [1, 1]} : vector<250x20xf32> to vector<50x20xf32>
    %cst_123 = arith.constant dense<0.000000e+00> : vector<8x20xf32>
    %463 = tpu.matmul %461, %462, %cst_123 {dimension_numbers = #tpu.dot_dimension_numbers<[1], [0], [0], [1], [0, 0, 1, 1], [], []>} : vector<8x50xf32>, vector<50x20xf32>, vector<8x20xf32> -> vector<8x20xf32>
    %464 = arith.addf %460, %463 : vector<8x20xf32>
    %465 = vector.extract_strided_slice %330 {offsets = [4, 50], sizes = [8, 50], strides = [1, 1]} : vector<12x120xf32> to vector<8x50xf32>
    %466 = vector.extract_strided_slice %4 {offsets = [200, 0], sizes = [50, 20], strides = [1, 1]} : vector<250x20xf32> to vector<50x20xf32>
    %cst_124 = arith.constant dense<0.000000e+00> : vector<8x20xf32>
    %467 = tpu.matmul %465, %466, %cst_124 {dimension_numbers = #tpu.dot_dimension_numbers<[1], [0], [0], [1], [0, 0, 1, 1], [], []>} : vector<8x50xf32>, vector<50x20xf32>, vector<8x20xf32> -> vector<8x20xf32>
    %468 = arith.addf %464, %467 : vector<8x20xf32>
    %469 = arith.maximumf %447, %468 : vector<8x20xf32>
    %cst_125 = arith.constant dense<0.000000e+00> : vector<4x20xf32>
    %470 = tpu.matmul %33, %469, %cst_125 {dimension_numbers = #tpu.dot_dimension_numbers<[1], [0], [0], [1], [0, 0, 1, 1], [], []>} : vector<4x8xf32>, vector<8x20xf32>, vector<4x20xf32> -> vector<4x20xf32>
    %cst_126 = arith.constant dense<0.000000e+00> : vector<4x20xf32>
    %471 = tpu.matmul %41, %469, %cst_126 {dimension_numbers = #tpu.dot_dimension_numbers<[1], [0], [0], [1], [0, 0, 1, 1], [], []>} : vector<4x8xf32>, vector<8x20xf32>, vector<4x20xf32> -> vector<4x20xf32>
    %472 = arith.maximumf %470, %471 : vector<4x20xf32>
    %cst_127 = arith.constant 0.000000e+00 : f32
    %473 = vector.broadcast %cst_127 : f32 to vector<4x20xf32>
    %474 = arith.maximumf %472, %473 : vector<4x20xf32>
    %475 = vector.extract_strided_slice %330 {offsets = [0, 60], sizes = [8, 50], strides = [1, 1]} : vector<12x120xf32> to vector<8x50xf32>
    %476 = vector.extract_strided_slice %4 {offsets = [0, 0], sizes = [50, 20], strides = [1, 1]} : vector<250x20xf32> to vector<50x20xf32>
    %cst_128 = arith.constant dense<0.000000e+00> : vector<8x20xf32>
    %477 = tpu.matmul %475, %476, %cst_128 {dimension_numbers = #tpu.dot_dimension_numbers<[1], [0], [0], [1], [0, 0, 1, 1], [], []>} : vector<8x50xf32>, vector<50x20xf32>, vector<8x20xf32> -> vector<8x20xf32>
    %478 = vector.broadcast %5 : vector<1x20xf32> to vector<8x20xf32>
    %479 = arith.addf %478, %477 : vector<8x20xf32>
    %480 = vector.extract_strided_slice %330 {offsets = [1, 60], sizes = [8, 50], strides = [1, 1]} : vector<12x120xf32> to vector<8x50xf32>
    %481 = vector.extract_strided_slice %4 {offsets = [50, 0], sizes = [50, 20], strides = [1, 1]} : vector<250x20xf32> to vector<50x20xf32>
    %cst_129 = arith.constant dense<0.000000e+00> : vector<8x20xf32>
    %482 = tpu.matmul %480, %481, %cst_129 {dimension_numbers = #tpu.dot_dimension_numbers<[1], [0], [0], [1], [0, 0, 1, 1], [], []>} : vector<8x50xf32>, vector<50x20xf32>, vector<8x20xf32> -> vector<8x20xf32>
    %483 = arith.addf %479, %482 : vector<8x20xf32>
    %484 = vector.extract_strided_slice %330 {offsets = [2, 60], sizes = [8, 50], strides = [1, 1]} : vector<12x120xf32> to vector<8x50xf32>
    %485 = vector.extract_strided_slice %4 {offsets = [100, 0], sizes = [50, 20], strides = [1, 1]} : vector<250x20xf32> to vector<50x20xf32>
    %cst_130 = arith.constant dense<0.000000e+00> : vector<8x20xf32>
    %486 = tpu.matmul %484, %485, %cst_130 {dimension_numbers = #tpu.dot_dimension_numbers<[1], [0], [0], [1], [0, 0, 1, 1], [], []>} : vector<8x50xf32>, vector<50x20xf32>, vector<8x20xf32> -> vector<8x20xf32>
    %487 = arith.addf %483, %486 : vector<8x20xf32>
    %488 = vector.extract_strided_slice %330 {offsets = [3, 60], sizes = [8, 50], strides = [1, 1]} : vector<12x120xf32> to vector<8x50xf32>
    %489 = vector.extract_strided_slice %4 {offsets = [150, 0], sizes = [50, 20], strides = [1, 1]} : vector<250x20xf32> to vector<50x20xf32>
    %cst_131 = arith.constant dense<0.000000e+00> : vector<8x20xf32>
    %490 = tpu.matmul %488, %489, %cst_131 {dimension_numbers = #tpu.dot_dimension_numbers<[1], [0], [0], [1], [0, 0, 1, 1], [], []>} : vector<8x50xf32>, vector<50x20xf32>, vector<8x20xf32> -> vector<8x20xf32>
    %491 = arith.addf %487, %490 : vector<8x20xf32>
    %492 = vector.extract_strided_slice %330 {offsets = [4, 60], sizes = [8, 50], strides = [1, 1]} : vector<12x120xf32> to vector<8x50xf32>
    %493 = vector.extract_strided_slice %4 {offsets = [200, 0], sizes = [50, 20], strides = [1, 1]} : vector<250x20xf32> to vector<50x20xf32>
    %cst_132 = arith.constant dense<0.000000e+00> : vector<8x20xf32>
    %494 = tpu.matmul %492, %493, %cst_132 {dimension_numbers = #tpu.dot_dimension_numbers<[1], [0], [0], [1], [0, 0, 1, 1], [], []>} : vector<8x50xf32>, vector<50x20xf32>, vector<8x20xf32> -> vector<8x20xf32>
    %495 = arith.addf %491, %494 : vector<8x20xf32>
    %496 = vector.extract_strided_slice %330 {offsets = [0, 70], sizes = [8, 50], strides = [1, 1]} : vector<12x120xf32> to vector<8x50xf32>
    %497 = vector.extract_strided_slice %4 {offsets = [0, 0], sizes = [50, 20], strides = [1, 1]} : vector<250x20xf32> to vector<50x20xf32>
    %cst_133 = arith.constant dense<0.000000e+00> : vector<8x20xf32>
    %498 = tpu.matmul %496, %497, %cst_133 {dimension_numbers = #tpu.dot_dimension_numbers<[1], [0], [0], [1], [0, 0, 1, 1], [], []>} : vector<8x50xf32>, vector<50x20xf32>, vector<8x20xf32> -> vector<8x20xf32>
    %499 = vector.broadcast %5 : vector<1x20xf32> to vector<8x20xf32>
    %500 = arith.addf %499, %498 : vector<8x20xf32>
    %501 = vector.extract_strided_slice %330 {offsets = [1, 70], sizes = [8, 50], strides = [1, 1]} : vector<12x120xf32> to vector<8x50xf32>
    %502 = vector.extract_strided_slice %4 {offsets = [50, 0], sizes = [50, 20], strides = [1, 1]} : vector<250x20xf32> to vector<50x20xf32>
    %cst_134 = arith.constant dense<0.000000e+00> : vector<8x20xf32>
    %503 = tpu.matmul %501, %502, %cst_134 {dimension_numbers = #tpu.dot_dimension_numbers<[1], [0], [0], [1], [0, 0, 1, 1], [], []>} : vector<8x50xf32>, vector<50x20xf32>, vector<8x20xf32> -> vector<8x20xf32>
    %504 = arith.addf %500, %503 : vector<8x20xf32>
    %505 = vector.extract_strided_slice %330 {offsets = [2, 70], sizes = [8, 50], strides = [1, 1]} : vector<12x120xf32> to vector<8x50xf32>
    %506 = vector.extract_strided_slice %4 {offsets = [100, 0], sizes = [50, 20], strides = [1, 1]} : vector<250x20xf32> to vector<50x20xf32>
    %cst_135 = arith.constant dense<0.000000e+00> : vector<8x20xf32>
    %507 = tpu.matmul %505, %506, %cst_135 {dimension_numbers = #tpu.dot_dimension_numbers<[1], [0], [0], [1], [0, 0, 1, 1], [], []>} : vector<8x50xf32>, vector<50x20xf32>, vector<8x20xf32> -> vector<8x20xf32>
    %508 = arith.addf %504, %507 : vector<8x20xf32>
    %509 = vector.extract_strided_slice %330 {offsets = [3, 70], sizes = [8, 50], strides = [1, 1]} : vector<12x120xf32> to vector<8x50xf32>
    %510 = vector.extract_strided_slice %4 {offsets = [150, 0], sizes = [50, 20], strides = [1, 1]} : vector<250x20xf32> to vector<50x20xf32>
    %cst_136 = arith.constant dense<0.000000e+00> : vector<8x20xf32>
    %511 = tpu.matmul %509, %510, %cst_136 {dimension_numbers = #tpu.dot_dimension_numbers<[1], [0], [0], [1], [0, 0, 1, 1], [], []>} : vector<8x50xf32>, vector<50x20xf32>, vector<8x20xf32> -> vector<8x20xf32>
    %512 = arith.addf %508, %511 : vector<8x20xf32>
    %513 = vector.extract_strided_slice %330 {offsets = [4, 70], sizes = [8, 50], strides = [1, 1]} : vector<12x120xf32> to vector<8x50xf32>
    %514 = vector.extract_strided_slice %4 {offsets = [200, 0], sizes = [50, 20], strides = [1, 1]} : vector<250x20xf32> to vector<50x20xf32>
    %cst_137 = arith.constant dense<0.000000e+00> : vector<8x20xf32>
    %515 = tpu.matmul %513, %514, %cst_137 {dimension_numbers = #tpu.dot_dimension_numbers<[1], [0], [0], [1], [0, 0, 1, 1], [], []>} : vector<8x50xf32>, vector<50x20xf32>, vector<8x20xf32> -> vector<8x20xf32>
    %516 = arith.addf %512, %515 : vector<8x20xf32>
    %517 = arith.maximumf %495, %516 : vector<8x20xf32>
    %cst_138 = arith.constant dense<0.000000e+00> : vector<4x20xf32>
    %518 = tpu.matmul %33, %517, %cst_138 {dimension_numbers = #tpu.dot_dimension_numbers<[1], [0], [0], [1], [0, 0, 1, 1], [], []>} : vector<4x8xf32>, vector<8x20xf32>, vector<4x20xf32> -> vector<4x20xf32>
    %cst_139 = arith.constant dense<0.000000e+00> : vector<4x20xf32>
    %519 = tpu.matmul %41, %517, %cst_139 {dimension_numbers = #tpu.dot_dimension_numbers<[1], [0], [0], [1], [0, 0, 1, 1], [], []>} : vector<4x8xf32>, vector<8x20xf32>, vector<4x20xf32> -> vector<4x20xf32>
    %520 = arith.maximumf %518, %519 : vector<4x20xf32>
    %cst_140 = arith.constant 0.000000e+00 : f32
    %521 = vector.broadcast %cst_140 : f32 to vector<4x20xf32>
    %522 = arith.maximumf %520, %521 : vector<4x20xf32>
    %523 = tpu.concatenate %378, %426, %474, %522 in 1 : vector<4x20xf32>, vector<4x20xf32>, vector<4x20xf32>, vector<4x20xf32> -> vector<4x80xf32>
    %524 = vector.extract_strided_slice %523 {offsets = [0, 0], sizes = [1, 80], strides = [1, 1]} : vector<4x80xf32> to vector<1x80xf32>
    %525 = vector.extract_strided_slice %523 {offsets = [1, 0], sizes = [1, 80], strides = [1, 1]} : vector<4x80xf32> to vector<1x80xf32>
    %526 = vector.extract_strided_slice %523 {offsets = [2, 0], sizes = [1, 80], strides = [1, 1]} : vector<4x80xf32> to vector<1x80xf32>
    %527 = vector.extract_strided_slice %523 {offsets = [3, 0], sizes = [1, 80], strides = [1, 1]} : vector<4x80xf32> to vector<1x80xf32>
    %528 = tpu.concatenate %524, %525, %526, %527 in 1 : vector<1x80xf32>, vector<1x80xf32>, vector<1x80xf32>, vector<1x80xf32> -> vector<1x320xf32>
    %cst_141 = arith.constant dense<0.000000e+00> : vector<1x50xf32>
    %529 = tpu.matmul %528, %6, %cst_141 {dimension_numbers = #tpu.dot_dimension_numbers<[1], [0], [0], [1], [0, 0, 1, 1], [], []>} : vector<1x320xf32>, vector<320x50xf32>, vector<1x50xf32> -> vector<1x50xf32>
    %530 = arith.addf %529, %7 : vector<1x50xf32>
    %cst_142 = arith.constant 0.000000e+00 : f32
    %531 = vector.broadcast %cst_142 : f32 to vector<1x50xf32>
    %532 = arith.maximumf %530, %531 : vector<1x50xf32>
    %cst_143 = arith.constant dense<0.000000e+00> : vector<1x10xf32>
    %533 = tpu.matmul %532, %8, %cst_143 {dimension_numbers = #tpu.dot_dimension_numbers<[1], [0], [0], [1], [0, 0, 1, 1], [], []>} : vector<1x50xf32>, vector<50x10xf32>, vector<1x10xf32> -> vector<1x10xf32>
    %534 = arith.addf %533, %9 : vector<1x10xf32>
    %cst_144 = arith.constant dense<0xFF800000> : vector<1xf32>
    %535 = vector.multi_reduction <maximumf>, %534, %cst_144 [1] : vector<1x10xf32> to vector<1xf32>
    %536 = vector.shape_cast %535 : vector<1xf32> to vector<1x1xf32>
    %537 = vector.broadcast %536 : vector<1x1xf32> to vector<1x10xf32>
    %538 = arith.subf %534, %537 : vector<1x10xf32>
    %539 = math.exp %538 : vector<1x10xf32>
    %cst_145 = arith.constant dense<0.000000e+00> : vector<1xf32>
    %540 = vector.multi_reduction <add>, %539, %cst_145 [1] : vector<1x10xf32> to vector<1xf32>
    %541 = vector.shape_cast %540 : vector<1xf32> to vector<1x1xf32>
    %542 = math.log %541 : vector<1x1xf32>
    %543 = vector.broadcast %542 : vector<1x1xf32> to vector<1x10xf32>
    %544 = arith.subf %538, %543 : vector<1x10xf32>
    %545 = vector.shape_cast %544 : vector<1x10xf32> to vector<1x1x10xf32>
    %c0_146 = arith.constant 0 : index
    %c0_147 = arith.constant 0 : index
    %c0_148 = arith.constant 0 : index
    %546 = vector.load %arg10[%c0_146, %c0_147, %c0_148] : memref<1x1x10xf32, #tpu.memory_space<vmem>>, vector<1x1x10xf32>
    tpu.vector_store %arg10[%c0_146, %c0_147, %c0_148], %545 {strides = array<i32>} : memref<1x1x10xf32, #tpu.memory_space<vmem>>, vector<1x1x10xf32>,
    return
  }
  func.func @transform_0(%arg0: i32) -> (i32, i32, i32) {
    %c0_i32 = arith.constant 0 : i32
    %c0_i32_0 = arith.constant 0 : i32
    %c0_i32_1 = arith.constant 0 : i32
    return %arg0, %c0_i32, %c0_i32_0 : i32, i32, i32
  }
  func.func @transform_1(%arg0: i32) -> (i32, i32) {
    %c0_i32 = arith.constant 0 : i32
    %c0_i32_0 = arith.constant 0 : i32
    %c0_i32_1 = arith.constant 0 : i32
    return %c0_i32, %c0_i32_0 : i32, i32
  }
  func.func @transform_2(%arg0: i32) -> (i32, i32) {
    %c0_i32 = arith.constant 0 : i32
    %c0_i32_0 = arith.constant 0 : i32
    %c0_i32_1 = arith.constant 0 : i32
    return %c0_i32, %c0_i32_0 : i32, i32
  }
  func.func @transform_3(%arg0: i32) -> (i32, i32) {
    %c0_i32 = arith.constant 0 : i32
    %c0_i32_0 = arith.constant 0 : i32
    %c0_i32_1 = arith.constant 0 : i32
    return %c0_i32, %c0_i32_0 : i32, i32
  }
  func.func @transform_4(%arg0: i32) -> (i32, i32) {
    %c0_i32 = arith.constant 0 : i32
    %c0_i32_0 = arith.constant 0 : i32
    %c0_i32_1 = arith.constant 0 : i32
    return %c0_i32, %c0_i32_0 : i32, i32
  }
  func.func @transform_5(%arg0: i32) -> (i32, i32) {
    %c0_i32 = arith.constant 0 : i32
    %c0_i32_0 = arith.constant 0 : i32
    %c0_i32_1 = arith.constant 0 : i32
    return %c0_i32, %c0_i32_0 : i32, i32
  }
  func.func @transform_6(%arg0: i32) -> (i32, i32) {
    %c0_i32 = arith.constant 0 : i32
    %c0_i32_0 = arith.constant 0 : i32
    %c0_i32_1 = arith.constant 0 : i32
    return %c0_i32, %c0_i32_0 : i32, i32
  }
  func.func @transform_7(%arg0: i32) -> (i32, i32) {
    %c0_i32 = arith.constant 0 : i32
    %c0_i32_0 = arith.constant 0 : i32
    %c0_i32_1 = arith.constant 0 : i32
    return %c0_i32, %c0_i32_0 : i32, i32
  }
  func.func @transform_8(%arg0: i32) -> (i32, i32) {
    %c0_i32 = arith.constant 0 : i32
    %c0_i32_0 = arith.constant 0 : i32
    %c0_i32_1 = arith.constant 0 : i32
    return %c0_i32, %c0_i32_0 : i32, i32
  }
  func.func @transform_9(%arg0: i32) -> (i32, i32, i32) {
    %c0_i32 = arith.constant 0 : i32
    %c0_i32_0 = arith.constant 0 : i32
    %c0_i32_1 = arith.constant 0 : i32
    return %arg0, %c0_i32, %c0_i32_0 : i32, i32, i32
  }
}

</mosaic_0001>

<llo_original>
// kernel: net_forward.1
$region0: #{net_forward.1}
  #allocation0 [shape = 'u32[]', space=smem, size = 0x4, offset = 0x4, fixed_abs, tag = 'smem constant byte address 0x4 - core index']
  #allocation1 [shape = 'u32[72,128]{1,0:T(1,128)}', space=vmem, size = 0x9000, scoped, tag = 'internal scratch']
  %s0 = inlined_call_operand.vmem [shape: f32[2,28,28], index: 0, kind: input, shape index: {}]
  %s1 = inlined_call_operand.vmem [shape: f32[25,10], index: 1, kind: input, shape index: {}]
  %s2 = inlined_call_operand.vmem [shape: f32[1,10], index: 2, kind: input, shape index: {}]
  %s3 = inlined_call_operand.vmem [shape: f32[250,20], index: 3, kind: input, shape index: {}]
  %s4 = inlined_call_operand.vmem [shape: f32[1,20], index: 4, kind: input, shape index: {}]
  %s5 = inlined_call_operand.vmem [shape: f32[320,50], index: 5, kind: input, shape index: {}]
  %s6 = inlined_call_operand.vmem [shape: f32[1,50], index: 6, kind: input, shape index: {}]
  %s7 = inlined_call_operand.vmem [shape: f32[50,10], index: 7, kind: input, shape index: {}]
  %s8 = inlined_call_operand.vmem [shape: f32[1,10], index: 8, kind: input, shape index: {}]
  %s9 = inlined_call_operand.hbm [shape: f32[2,1,10], index: 9, kind: output, shape index: {}]
  %s10 = sld [smem:[#allocation0]]
  $region69: #{net_forward.1} parent=0
    _
  %s12 = ssub.s32 1, %s10
  %s13 = scalar_select 0, %s12, %s10
  $region1: #{net_forward.1} parent=0
    #allocation2 [shape = 'u8[1024]{0}', space=vmem, size = 0x400, scoped, tag = 'output window, operand 0']
    #allocation3 [shape = 's32[2]{0}', space=sflag, size = 0x8, scoped, tag = 'scoped memory for net_forward.1']
    %14 = vsyncpa [#allocation3], 0
    %s15 = scalar_lea.sflag [#allocation3], 1
    %16 = vsyncpa %s15, 0
    loop: start=0, step=1, limit=4
    $region2: #{net_forward.1} parent=1 // loop_pre_header
      _
    $region3: #{net_forward.1} parent=1 // loop_header
      %s18 = sphi 0, %s22
      %p19 = scmp.ge.s32.totalorder %s18, 4
      %s28 = sphi 0, %s30
      %s31 = sphi 0, %s28
      %s32 = sphi 0, %s31
      %s48 = sphi 0, %s32
      %s52 = sphi 0, %s52
      %s54 = sphi 0, %s52
      %s55 = sphi 0, %s54
      %s69 = sphi 0, %s55
      %s73 = sphi 0, %s73
      %s75 = sphi 0, %s73
      %s76 = sphi 0, %s75
      %s90 = sphi 0, %s76
      %s94 = sphi 0, %s94
      %s96 = sphi 0, %s94
      %s97 = sphi 0, %s96
      %s111 = sphi 0, %s97
      %s115 = sphi 0, %s115
      %s117 = sphi 0, %s115
      %s118 = sphi 0, %s117
      %s132 = sphi 0, %s118
      %s136 = sphi 0, %s136
      %s138 = sphi 0, %s136
      %s139 = sphi 0, %s138
      %s153 = sphi 0, %s139
      %s157 = sphi 0, %s157
      %s159 = sphi 0, %s157
      %s160 = sphi 0, %s159
      %s174 = sphi 0, %s160
      %s178 = sphi 0, %s178
      %s180 = sphi 0, %s178
      %s181 = sphi 0, %s180
      %s195 = sphi 0, %s181
      %s199 = sphi 0, %s199
      %s201 = sphi 0, %s199
      %s202 = sphi 0, %s201
      %s216 = sphi 0, %s202
      %s222 = sphi 0, %s224
      %s225 = sphi 0, %s222
      %s226 = sphi 0, %s225
      %s242 = sphi 0, %s226
    $region4: #{net_forward.1} parent=1 // loop_header_branch
      %21 = sbr.rel (%p19) target = $region8
    $region5: #{net_forward.1} parent=1 // loop_body
      %s23 = ssub.s32 %s18, 1
      %s24 = ssub.s32 %s18, 2
      %s25 = sadd.s32 %s18, 1
      %s26 = ssub.s32 %s18, %s25
      %p27 = scmp.eq.s32.totalorder %s26, 0
      %s29 = sadd.s32 %s28, 1
      %s30 = scalar_select %p27, %s28, %s29
      %p33 = pneg %p27
      %p34 = scmp.eq.s32.totalorder %s18, 1
      %p35 = por %p33, %p34
      %p36 = scmp.ne.s32.totalorder %s28, %s31
      %p37 = scmp.eq.s32.totalorder %s18, 0
      %p38 = por %p36, %p37
      %p39 = scmp.ne.s32.totalorder %s28, %s31
      %p40 = scmp.eq.s32.totalorder %s23, 1
      %p41 = por %p39, %p40
      %p42 = scmp.ne.s32.totalorder %s31, %s32
      %p43 = scmp.eq.s32.totalorder %s23, 0
      %p44 = por %p42, %p43
      %p45 = scmp.ne.s32.totalorder %s31, %s32
      %p46 = scmp.eq.s32.totalorder %s24, 1
      %p47 = por %p45, %p46
      %p49 = scmp.ne.s32.totalorder %s32, %s48
      %p50 = scmp.eq.s32.totalorder %s24, 0
      %p51 = por %p49, %p50
      %s53 = sadd.s32 %s52, 1
      %p56 = scmp.eq.s32.totalorder %s18, 1
      %p57 = scmp.ne.s32.totalorder %s52, %s54
      %p58 = scmp.eq.s32.totalorder %s18, 0
      %p59 = por %p57, %p58
      %p60 = scmp.ne.s32.totalorder %s52, %s54
      %p61 = scmp.eq.s32.totalorder %s23, 1
      %p62 = por %p60, %p61
      %p63 = scmp.ne.s32.totalorder %s54, %s55
      %p64 = scmp.eq.s32.totalorder %s23, 0
      %p65 = por %p63, %p64
      %p66 = scmp.ne.s32.totalorder %s54, %s55
      %p67 = scmp.eq.s32.totalorder %s24, 1
      %p68 = por %p66, %p67
      %p70 = scmp.ne.s32.totalorder %s55, %s69
      %p71 = scmp.eq.s32.totalorder %s24, 0
      %p72 = por %p70, %p71
      %s74 = sadd.s32 %s73, 1
      %p77 = scmp.eq.s32.totalorder %s18, 1
      %p78 = scmp.ne.s32.totalorder %s73, %s75
      %p79 = scmp.eq.s32.totalorder %s18, 0
      %p80 = por %p78, %p79
      %p81 = scmp.ne.s32.totalorder %s73, %s75
      %p82 = scmp.eq.s32.totalorder %s23, 1
      %p83 = por %p81, %p82
      %p84 = scmp.ne.s32.totalorder %s75, %s76
      %p85 = scmp.eq.s32.totalorder %s23, 0
      %p86 = por %p84, %p85
      %p87 = scmp.ne.s32.totalorder %s75, %s76
      %p88 = scmp.eq.s32.totalorder %s24, 1
      %p89 = por %p87, %p88
      %p91 = scmp.ne.s32.totalorder %s76, %s90
      %p92 = scmp.eq.s32.totalorder %s24, 0
      %p93 = por %p91, %p92
      %s95 = sadd.s32 %s94, 1
      %p98 = scmp.eq.s32.totalorder %s18, 1
      %p99 = scmp.ne.s32.totalorder %s94, %s96
      %p100 = scmp.eq.s32.totalorder %s18, 0
      %p101 = por %p99, %p100
      %p102 = scmp.ne.s32.totalorder %s94, %s96
      %p103 = scmp.eq.s32.totalorder %s23, 1
      %p104 = por %p102, %p103
      %p105 = scmp.ne.s32.totalorder %s96, %s97
      %p106 = scmp.eq.s32.totalorder %s23, 0
      %p107 = por %p105, %p106
      %p108 = scmp.ne.s32.totalorder %s96, %s97
      %p109 = scmp.eq.s32.totalorder %s24, 1
      %p110 = por %p108, %p109
      %p112 = scmp.ne.s32.totalorder %s97, %s111
      %p113 = scmp.eq.s32.totalorder %s24, 0
      %p114 = por %p112, %p113
      %s116 = sadd.s32 %s115, 1
      %p119 = scmp.eq.s32.totalorder %s18, 1
      %p120 = scmp.ne.s32.totalorder %s115, %s117
      %p121 = scmp.eq.s32.totalorder %s18, 0
      %p122 = por %p120, %p121
      %p123 = scmp.ne.s32.totalorder %s115, %s117
      %p124 = scmp.eq.s32.totalorder %s23, 1
      %p125 = por %p123, %p124
      %p126 = scmp.ne.s32.totalorder %s117, %s118
      %p127 = scmp.eq.s32.totalorder %s23, 0
      %p128 = por %p126, %p127
      %p129 = scmp.ne.s32.totalorder %s117, %s118
      %p130 = scmp.eq.s32.totalorder %s24, 1
      %p131 = por %p129, %p130
      %p133 = scmp.ne.s32.totalorder %s118, %s132
      %p134 = scmp.eq.s32.totalorder %s24, 0
      %p135 = por %p133, %p134
      %s137 = sadd.s32 %s136, 1
      %p140 = scmp.eq.s32.totalorder %s18, 1
      %p141 = scmp.ne.s32.totalorder %s136, %s138
      %p142 = scmp.eq.s32.totalorder %s18, 0
      %p143 = por %p141, %p142
      %p144 = scmp.ne.s32.totalorder %s136, %s138
      %p145 = scmp.eq.s32.totalorder %s23, 1
      %p146 = por %p144, %p145
      %p147 = scmp.ne.s32.totalorder %s138, %s139
      %p148 = scmp.eq.s32.totalorder %s23, 0
      %p149 = por %p147, %p148
      %p150 = scmp.ne.s32.totalorder %s138, %s139
      %p151 = scmp.eq.s32.totalorder %s24, 1
      %p152 = por %p150, %p151
      %p154 = scmp.ne.s32.totalorder %s139, %s153
      %p155 = scmp.eq.s32.totalorder %s24, 0
      %p156 = por %p154, %p155
      %s158 = sadd.s32 %s157, 1
      %p161 = scmp.eq.s32.totalorder %s18, 1
      %p162 = scmp.ne.s32.totalorder %s157, %s159
      %p163 = scmp.eq.s32.totalorder %s18, 0
      %p164 = por %p162, %p163
      %p165 = scmp.ne.s32.totalorder %s157, %s159
      %p166 = scmp.eq.s32.totalorder %s23, 1
      %p167 = por %p165, %p166
      %p168 = scmp.ne.s32.totalorder %s159, %s160
      %p169 = scmp.eq.s32.totalorder %s23, 0
      %p170 = por %p168, %p169
      %p171 = scmp.ne.s32.totalorder %s159, %s160
      %p172 = scmp.eq.s32.totalorder %s24, 1
      %p173 = por %p171, %p172
      %p175 = scmp.ne.s32.totalorder %s160, %s174
      %p176 = scmp.eq.s32.totalorder %s24, 0
      %p177 = por %p175, %p176
      %s179 = sadd.s32 %s178, 1
      %p182 = scmp.eq.s32.totalorder %s18, 1
      %p183 = scmp.ne.s32.totalorder %s178, %s180
      %p184 = scmp.eq.s32.totalorder %s18, 0
      %p185 = por %p183, %p184
      %p186 = scmp.ne.s32.totalorder %s178, %s180
      %p187 = scmp.eq.s32.totalorder %s23, 1
      %p188 = por %p186, %p187
      %p189 = scmp.ne.s32.totalorder %s180, %s181
      %p190 = scmp.eq.s32.totalorder %s23, 0
      %p191 = por %p189, %p190
      %p192 = scmp.ne.s32.totalorder %s180, %s181
      %p193 = scmp.eq.s32.totalorder %s24, 1
      %p194 = por %p192, %p193
      %p196 = scmp.ne.s32.totalorder %s181, %s195
      %p197 = scmp.eq.s32.totalorder %s24, 0
      %p198 = por %p196, %p197
      %s200 = sadd.s32 %s199, 1
      %p203 = scmp.eq.s32.totalorder %s18, 1
      %p204 = scmp.ne.s32.totalorder %s199, %s201
      %p205 = scmp.eq.s32.totalorder %s18, 0
      %p206 = por %p204, %p205
      %p207 = scmp.ne.s32.totalorder %s199, %s201
      %p208 = scmp.eq.s32.totalorder %s23, 1
      %p209 = por %p207, %p208
      %p210 = scmp.ne.s32.totalorder %s201, %s202
      %p211 = scmp.eq.s32.totalorder %s23, 0
      %p212 = por %p210, %p211
      %p213 = scmp.ne.s32.totalorder %s201, %s202
      %p214 = scmp.eq.s32.totalorder %s24, 1
      %p215 = por %p213, %p214
      %p217 = scmp.ne.s32.totalorder %s202, %s216
      %p218 = scmp.eq.s32.totalorder %s24, 0
      %p219 = por %p217, %p218
      %s220 = ssub.s32 %s18, %s25
      %p221 = scmp.eq.s32.totalorder %s220, 0
      %s223 = sadd.s32 %s222, 1
      %s224 = scalar_select %p221, %s222, %s223
      %p227 = pneg %p221
      %p228 = scmp.eq.s32.totalorder %s18, 1
      %p229 = por %p227, %p228
      %p230 = scmp.ne.s32.totalorder %s222, %s225
      %p231 = scmp.eq.s32.totalorder %s18, 0
      %p232 = por %p230, %p231
      %p233 = scmp.ne.s32.totalorder %s222, %s225
      %p234 = scmp.eq.s32.totalorder %s23, 1
      %p235 = por %p233, %p234
      %p236 = scmp.ne.s32.totalorder %s225, %s226
      %p237 = scmp.eq.s32.totalorder %s23, 0
      %p238 = por %p236, %p237
      %p239 = scmp.ne.s32.totalorder %s225, %s226
      %p240 = scmp.eq.s32.totalorder %s24, 1
      %p241 = por %p239, %p240
      %p243 = scmp.ne.s32.totalorder %s226, %s242
      %p244 = scmp.eq.s32.totalorder %s24, 0
      %p245 = por %p243, %p244
      %p246 = scmp.le.s32.totalorder 1, %s18
      %p247 = scmp.lt.s32.totalorder %s18, 3
      %p248 = pnand %p246, %p247
      %p249 = pneg %p248
      // Predicated region
      $region9: #{net_forward.1} parent=5 // pred_check
        _
      $region10: #{net_forward.1} parent=5 // pred_check_branch
        %251 = sbr.rel (%p248) target = $region12
      $region11: #{net_forward.1} parent=5 // pred_region
        %s252 = ssub.s32 %s18, 1
        // Predicated region
        $region13: #{net_forward.1} parent=11 // pred_check
          %p253 = pneg %p65
        $region14: #{net_forward.1} parent=11 // pred_check_branch
          %255 = sbr.rel (%p253) target = $region16
        $region15: #{net_forward.1} parent=11 // pred_region
          _
        $region16: #{net_forward.1} parent=11 // pred_fallthru
          _
        // Predicated region
        $region17: #{net_forward.1} parent=11 // pred_check
          %p256 = pneg %p86
        $region18: #{net_forward.1} parent=11 // pred_check_branch
          %258 = sbr.rel (%p256) target = $region20
        $region19: #{net_forward.1} parent=11 // pred_region
          _
        $region20: #{net_forward.1} parent=11 // pred_fallthru
          _
        // Predicated region
        $region21: #{net_forward.1} parent=11 // pred_check
          %p259 = pneg %p107
        $region22: #{net_forward.1} parent=11 // pred_check_branch
          %261 = sbr.rel (%p259) target = $region24
        $region23: #{net_forward.1} parent=11 // pred_region
          _
        $region24: #{net_forward.1} parent=11 // pred_fallthru
          _
        // Predicated region
        $region25: #{net_forward.1} parent=11 // pred_check
          %p262 = pneg %p128
        $region26: #{net_forward.1} parent=11 // pred_check_branch
          %264 = sbr.rel (%p262) target = $region28
        $region27: #{net_forward.1} parent=11 // pred_region
          _
        $region28: #{net_forward.1} parent=11 // pred_fallthru
          _
        // Predicated region
        $region29: #{net_forward.1} parent=11 // pred_check
          %p265 = pneg %p149
        $region30: #{net_forward.1} parent=11 // pred_check_branch
          %267 = sbr.rel (%p265) target = $region32
        $region31: #{net_forward.1} parent=11 // pred_region
          _
        $region32: #{net_forward.1} parent=11 // pred_fallthru
          _
        // Predicated region
        $region33: #{net_forward.1} parent=11 // pred_check
          %p268 = pneg %p170
        $region34: #{net_forward.1} parent=11 // pred_check_branch
          %270 = sbr.rel (%p268) target = $region36
        $region35: #{net_forward.1} parent=11 // pred_region
          _
        $region36: #{net_forward.1} parent=11 // pred_fallthru
          _
        // Predicated region
        $region37: #{net_forward.1} parent=11 // pred_check
          %p271 = pneg %p191
        $region38: #{net_forward.1} parent=11 // pred_check_branch
          %273 = sbr.rel (%p271) target = $region40
        $region39: #{net_forward.1} parent=11 // pred_region
          _
        $region40: #{net_forward.1} parent=11 // pred_fallthru
          _
        // Predicated region
        $region41: #{net_forward.1} parent=11 // pred_check
          %p274 = pneg %p212
        $region42: #{net_forward.1} parent=11 // pred_check_branch
          %276 = sbr.rel (%p274) target = $region44
        $region43: #{net_forward.1} parent=11 // pred_region
          _
        $region44: #{net_forward.1} parent=11 // pred_fallthru
          _
      $region12: #{net_forward.1} parent=5 // pred_fallthru
        _
      %p277 = scmp.lt.s32.totalorder %s18, 2
      // Predicated region
      $region45: #{net_forward.1} parent=5 // pred_check
        %p278 = pneg %p277
      $region46: #{net_forward.1} parent=5 // pred_check_branch
        %280 = sbr.rel (%p278) target = $region48
      $region47: #{net_forward.1} parent=5 // pred_region
        // Predicated region
        $region49: #{net_forward.1} parent=47 // pred_check
          %p281 = pneg %p38
        $region50: #{net_forward.1} parent=47 // pred_check_branch
          %283 = sbr.rel (%p281) target = $region52
        $region51: #{net_forward.1} parent=47 // pred_region
          %p284 = scmp.lt.s32.totalorder %s18, 1
          %s285 = scalar_select %p284, %s18, 1
          %s286 = smul.addr %s285, 4
          %s287 = smul.addr %s286, 8
          %s288 = scalar_lea.vmem %s0, %s287
        $region52: #{net_forward.1} parent=47 // pred_fallthru
          _
      $region48: #{net_forward.1} parent=5 // pred_fallthru
        _
      %p289 = scmp.le.s32.totalorder 1, %s18
      %p290 = scmp.lt.s32.totalorder %s18, 3
      %p291 = pnand %p289, %p290
      %p292 = pneg %p291
      // Predicated region
      $region53: #{net_forward.1} parent=5 // pred_check
        _
      $region54: #{net_forward.1} parent=5 // pred_check_branch
        %294 = sbr.rel (%p291) target = $region56
      $region55: #{net_forward.1} parent=5 // pred_region
        %s295 = ssub.s32 %s18, 1
        %p296 = scmp.lt.s32.totalorder %s23, 1
        %s297 = scalar_select %p296, %s23, 1
        %s298 = smul.addr %s297, 4
        %s299 = smul.addr %s298, 8
        %s300 = scalar_lea.vmem %s0, %s299
        %p301 = pneg %p44
        %p302 = pneg %p41
        %p303 = pneg %p65
        %p304 = pneg %p62
        %p305 = pneg %p86
        %p306 = pneg %p83
        %p307 = pneg %p107
        %p308 = pneg %p104
        %p309 = pneg %p128
        %p310 = pneg %p125
        %p311 = pneg %p149
        %p312 = pneg %p146
        %p313 = pneg %p170
        %p314 = pneg %p167
        %p315 = pneg %p191
        %p316 = pneg %p188
        %p317 = pneg %p212
        %p318 = pneg %p209
        %p319 = pneg %p238
        %p320 = pneg %p235
        %s321 = sand.u32 %s225, 1
        %s322 = scalar_lea.sflag [#allocation3], %s321
        %s323 = sand.u32 %s225, 1
        %s324 = scalar_lea.vmem [#allocation2], %s323
        %p325 = scmp.lt.s32.totalorder %s23, 1
        %s326 = scalar_select %p325, %s23, 1
        %s327 = smul.addr %s326, 4
        %s328 = smul.addr %s327, 8
        %s329 = scalar_lea.vmem %s0, %s328
        %v330 = vld [vmem:[%s329] sm:$0xff]
        %v331 = vld [vmem:[%s329 + $0x8] sm:$0xff]
        %v332 = vld [vmem:[%s329 + $0x10] sm:$0xff]
        %v333 = vld [vmem:[%s329 + $0x18] sm:$0xf]
        %v334 = vld [vmem:[%s1] sm:$0xff]
        %v335 = vld [vmem:[%s1 + $0x8] sm:$0xff]
        %v336 = vld [vmem:[%s1 + $0x10] sm:$0xff]
        %v337 = vld [vmem:[%s1 + $0x18] sm:$0x1]
        %v338 = vld [vmem:[%s2] sm:$0x1]
        %v339 = vld [vmem:[%s3] sm:$0xff]
        %v340 = vld [vmem:[%s3 + $0x8] sm:$0xff]
        %v341 = vld [vmem:[%s3 + $0x10] sm:$0xff]
        %v342 = vld [vmem:[%s3 + $0x18] sm:$0xff]
        %v343 = vld [vmem:[%s3 + $0x20] sm:$0xff]
        %v344 = vld [vmem:[%s3 + $0x28] sm:$0xff]
        %v345 = vld [vmem:[%s3 + $0x30] sm:$0xff]
        %v346 = vld [vmem:[%s3 + $0x38] sm:$0xff]
        %v347 = vld [vmem:[%s3 + $0x40] sm:$0xff]
        %v348 = vld [vmem:[%s3 + $0x48] sm:$0xff]
        %v349 = vld [vmem:[%s3 + $0x50] sm:$0xff]
        %v350 = vld [vmem:[%s3 + $0x58] sm:$0xff]
        %v351 = vld [vmem:[%s3 + $0x60] sm:$0xff]
        %v352 = vld [vmem:[%s3 + $0x68] sm:$0xff]
        %v353 = vld [vmem:[%s3 + $0x70] sm:$0xff]
        %v354 = vld [vmem:[%s3 + $0x78] sm:$0xff]
        %v355 = vld [vmem:[%s3 + $0x80] sm:$0xff]
        %v356 = vld [vmem:[%s3 + $0x88] sm:$0xff]
        %v357 = vld [vmem:[%s3 + $0x90] sm:$0xff]
        %v358 = vld [vmem:[%s3 + $0x98] sm:$0xff]
        %v359 = vld [vmem:[%s3 + $0xa0] sm:$0xff]
        %v360 = vld [vmem:[%s3 + $0xa8] sm:$0xff]
        %v361 = vld [vmem:[%s3 + $0xb0] sm:$0xff]
        %v362 = vld [vmem:[%s3 + $0xb8] sm:$0xff]
        %v363 = vld [vmem:[%s3 + $0xc0] sm:$0xff]
        %v364 = vld [vmem:[%s3 + $0xc8] sm:$0xff]
        %v365 = vld [vmem:[%s3 + $0xd0] sm:$0xff]
        %v366 = vld [vmem:[%s3 + $0xd8] sm:$0xff]
        %v367 = vld [vmem:[%s3 + $0xe0] sm:$0xff]
        %v368 = vld [vmem:[%s3 + $0xe8] sm:$0xff]
        %v369 = vld [vmem:[%s3 + $0xf0] sm:$0xff]
        %v370 = vld [vmem:[%s3 + $0xf8] sm:$0x3]
        %v371 = vld [vmem:[%s4] sm:$0x1]
        %v372 = vld [vmem:[%s5] sm:$0xff]
        %v373 = vld [vmem:[%s5 + $0x8] sm:$0xff]
        %v374 = vld [vmem:[%s5 + $0x10] sm:$0xff]
        %v375 = vld [vmem:[%s5 + $0x18] sm:$0xff]
        %v376 = vld [vmem:[%s5 + $0x20] sm:$0xff]
        %v377 = vld [vmem:[%s5 + $0x28] sm:$0xff]
        %v378 = vld [vmem:[%s5 + $0x30] sm:$0xff]
        %v379 = vld [vmem:[%s5 + $0x38] sm:$0xff]
        %v380 = vld [vmem:[%s5 + $0x40] sm:$0xff]
        %v381 = vld [vmem:[%s5 + $0x48] sm:$0xff]
        %v382 = vld [vmem:[%s5 + $0x50] sm:$0xff]
        %v383 = vld [vmem:[%s5 + $0x58] sm:$0xff]
        %v384 = vld [vmem:[%s5 + $0x60] sm:$0xff]
        %v385 = vld [vmem:[%s5 + $0x68] sm:$0xff]
        %v386 = vld [vmem:[%s5 + $0x70] sm:$0xff]
        %v387 = vld [vmem:[%s5 + $0x78] sm:$0xff]
        %v388 = vld [vmem:[%s5 + $0x80] sm:$0xff]
        %v389 = vld [vmem:[%s5 + $0x88] sm:$0xff]
        %v390 = vld [vmem:[%s5 + $0x90] sm:$0xff]
        %v391 = vld [vmem:[%s5 + $0x98] sm:$0xff]
        %v392 = vld [vmem:[%s5 + $0xa0] sm:$0xff]
        %v393 = vld [vmem:[%s5 + $0xa8] sm:$0xff]
        %v394 = vld [vmem:[%s5 + $0xb0] sm:$0xff]
        %v395 = vld [vmem:[%s5 + $0xb8] sm:$0xff]
        %v396 = vld [vmem:[%s5 + $0xc0] sm:$0xff]
        %v397 = vld [vmem:[%s5 + $0xc8] sm:$0xff]
        %v398 = vld [vmem:[%s5 + $0xd0] sm:$0xff]
        %v399 = vld [vmem:[%s5 + $0xd8] sm:$0xff]
        %v400 = vld [vmem:[%s5 + $0xe0] sm:$0xff]
        %v401 = vld [vmem:[%s5 + $0xe8] sm:$0xff]
        %v402 = vld [vmem:[%s5 + $0xf0] sm:$0xff]
        %v403 = vld [vmem:[%s5 + $0xf8] sm:$0xff]
        %v404 = vld [vmem:[%s5 + $0x100] sm:$0xff]
        %v405 = vld [vmem:[%s5 + $0x108] sm:$0xff]
        %v406 = vld [vmem:[%s5 + $0x110] sm:$0xff]
        %v407 = vld [vmem:[%s5 + $0x118] sm:$0xff]
        %v408 = vld [vmem:[%s5 + $0x120] sm:$0xff]
        %v409 = vld [vmem:[%s5 + $0x128] sm:$0xff]
        %v410 = vld [vmem:[%s5 + $0x130] sm:$0xff]
        %v411 = vld [vmem:[%s5 + $0x138] sm:$0xff]
        %v412 = vld [vmem:[%s6] sm:$0x1]
        %v413 = vld [vmem:[%s7] sm:$0xff]
        %v414 = vld [vmem:[%s7 + $0x8] sm:$0xff]
        %v415 = vld [vmem:[%s7 + $0x10] sm:$0xff]
        %v416 = vld [vmem:[%s7 + $0x18] sm:$0xff]
        %v417 = vld [vmem:[%s7 + $0x20] sm:$0xff]
        %v418 = vld [vmem:[%s7 + $0x28] sm:$0xff]
        %v419 = vld [vmem:[%s7 + $0x30] sm:$0x3]
        %v420 = vld [vmem:[%s8] sm:$0x1]
        %v421 = vlaneseq
        %v422 = vshrl.u32 %v421, 7
        %v423 = vadd.s32 %v422, 8
        %v424 = vlaneseq
        %v425 = vand.u32 %v424, 127
        %v426 = vmul.u32 %v422, 2
        %v427 = vmul.u32 %v423, 2
        %vm428 = vcmp.eq.s32.totalorder %v425, %v426
        %vm429 = vcmp.eq.s32.totalorder %v425, %v427
        %v430 = vsel %vm428, 1.0, 0.0
        %v431 = vsel %vm429, 1.0, 0.0
        %v432 = vadd.s32 %v426, 1
        %v433 = vadd.s32 %v427, 1
        %vm434 = vcmp.eq.s32.totalorder %v425, %v432
        %vm435 = vcmp.eq.s32.totalorder %v425, %v433
        %v436 = vsel %vm434, 1.0, 0.0
        %v437 = vsel %vm435, 1.0, 0.0
        %vm442 = vcmask 1046528
        %v443 = vrot.slane %v330, 1
        %v444 = vrot.slane %v331, 1
        %v445 = vsel %vm442, %v443, %v444
        %v446 = vrot.slane %v332, 1
        %v447 = vsel %vm442, %v444, %v446
        %v448 = vrot.slane %v333, 1
        %v449 = vsel %vm442, %v446, %v448
        %450 = vrot.lane.b32.xlu0 %v445, 5
        %v451 = vpop.permute.xlu0 %450
        %452 = vrot.lane.b32.xlu0 %v447, 5
        %v453 = vpop.permute.xlu0 %452
        %454 = vrot.lane.b32.xlu0 %v449, 5
        %v455 = vpop.permute.xlu0 %454
        %vm459 = vcmask 1045504
        %v460 = vrot.slane %v330, 2
        %v461 = vrot.slane %v331, 2
        %v462 = vsel %vm459, %v460, %v461
        %v463 = vrot.slane %v332, 2
        %v464 = vsel %vm459, %v461, %v463
        %v465 = vrot.slane %v333, 2
        %v466 = vsel %vm459, %v463, %v465
        %467 = vrot.lane.b32.xlu0 %v462, 10
        %v468 = vpop.permute.xlu0 %467
        %469 = vrot.lane.b32.xlu0 %v464, 10
        %v470 = vpop.permute.xlu0 %469
        %471 = vrot.lane.b32.xlu0 %v466, 10
        %v472 = vpop.permute.xlu0 %471
        %vm476 = vcmask 1044480
        %v477 = vrot.slane %v330, 3
        %v478 = vrot.slane %v331, 3
        %v479 = vsel %vm476, %v477, %v478
        %v480 = vrot.slane %v332, 3
        %v481 = vsel %vm476, %v478, %v480
        %v482 = vrot.slane %v333, 3
        %v483 = vsel %vm476, %v480, %v482
        %484 = vrot.lane.b32.xlu0 %v479, 15
        %v485 = vpop.permute.xlu0 %484
        %486 = vrot.lane.b32.xlu0 %v481, 15
        %v487 = vpop.permute.xlu0 %486
        %488 = vrot.lane.b32.xlu0 %v483, 15
        %v489 = vpop.permute.xlu0 %488
        %vm493 = vcmask 1043456
        %v494 = vrot.slane %v330, 4
        %v495 = vrot.slane %v331, 4
        %v496 = vsel %vm493, %v494, %v495
        %v497 = vrot.slane %v332, 4
        %v498 = vsel %vm493, %v495, %v497
        %v499 = vrot.slane %v333, 4
        %v500 = vsel %vm493, %v497, %v499
        %501 = vrot.lane.b32.xlu0 %v496, 20
        %v502 = vpop.permute.xlu0 %501
        %503 = vrot.lane.b32.xlu0 %v498, 20
        %v504 = vpop.permute.xlu0 %503
        %505 = vrot.lane.b32.xlu0 %v500, 20
        %v506 = vpop.permute.xlu0 %505
        %vm510 = vcmask 39936
        %v511 = vsel %vm510, %v330, %v451
        %v512 = vsel %vm510, %v331, %v453
        %v513 = vsel %vm510, %v332, %v455
        %vm514 = vcmask 80896
        %v515 = vsel %vm514, %v511, %v468
        %v516 = vsel %vm514, %v512, %v470
        %v517 = vsel %vm514, %v513, %v472
        %vm518 = vcmask 121856
        %v519 = vsel %vm518, %v515, %v485
        %v520 = vsel %vm518, %v516, %v487
        %v521 = vsel %vm518, %v517, %v489
        %vm522 = vcmask 162816
        %v523 = vsel %vm522, %v519, %v502
        %v524 = vsel %vm522, %v520, %v504
        %v525 = vsel %vm522, %v521, %v506
        %v527 = vperm.slane %v338, 0
        %vm529 = vcmask 203776
        %v531 = vsel %vm529, %v523, 0
        %v534 = vsel %vm529, %v524, 0
        %v537 = vsel %vm529, %v525, 0
        %vm539 = vcmask 1040384
        %v541 = vsel %vm539, %v337, 0
        %543 = vmatpush.msra.mxu0 0.0
        %544 = vmatpush.msra.mxu0 0.0
        %545 = vmatpush.msra.mxu0 0.0
        %546 = vmatpush.msra.mxu0 0.0
        %547 = vmatpush.msra.mxu0 0.0
        %548 = vmatpush.msra.mxu0 0.0
        %549 = vmatpush.msra.mxu0 0.0
        %550 = vmatpush.msra.mxu0 0.0
        %551 = vmatpush.msra.mxu0 0.0
        %552 = vmatpush.msra.mxu0 0.0
        %553 = vmatpush.msra.mxu0 0.0
        %554 = vmatpush.msra.mxu0 0.0
        %555 = vmatpush.msra.mxu0 %v541
        %556 = vmatpush.msra.mxu0 %v336
        %557 = vmatpush.msra.mxu0 %v335
        %558 = vmatpush.msra.mxu0 %v334
        %559 = vmatmul.f32.gmra.mxu0 %v531
        %v560 = vpop.f32.mrf.mxu0
        %v561 = vadd.f32 %v527, %v560
        %562 = vmatmul.f32.gmra.mxu0 %v534
        %v563 = vpop.f32.mrf.mxu0
        %v564 = vadd.f32 %v527, %v563
        %565 = vmatmul.f32.gmra.mxu0 %v537
        %v566 = vpop.f32.mrf.mxu0
        %v567 = vadd.f32 %v527, %v566
        %568 = vdwg.mxu0
        %569 = vrot.lane.b32.xlu0 %v330, 127
        %v570 = vpop.permute.xlu0 %569
        %571 = vrot.lane.b32.xlu0 %v331, 127
        %v572 = vpop.permute.xlu0 %571
        %573 = vrot.lane.b32.xlu0 %v332, 127
        %v574 = vpop.permute.xlu0 %573
        %578 = vrot.lane.b32.xlu0 %v445, 4
        %v579 = vpop.permute.xlu0 %578
        %580 = vrot.lane.b32.xlu0 %v447, 4
        %v581 = vpop.permute.xlu0 %580
        %582 = vrot.lane.b32.xlu0 %v449, 4
        %v583 = vpop.permute.xlu0 %582
        %587 = vrot.lane.b32.xlu0 %v462, 9
        %v588 = vpop.permute.xlu0 %587
        %589 = vrot.lane.b32.xlu0 %v464, 9
        %v590 = vpop.permute.xlu0 %589
        %591 = vrot.lane.b32.xlu0 %v466, 9
        %v592 = vpop.permute.xlu0 %591
        %596 = vrot.lane.b32.xlu0 %v479, 14
        %v597 = vpop.permute.xlu0 %596
        %598 = vrot.lane.b32.xlu0 %v481, 14
        %v599 = vpop.permute.xlu0 %598
        %600 = vrot.lane.b32.xlu0 %v483, 14
        %v601 = vpop.permute.xlu0 %600
        %605 = vrot.lane.b32.xlu0 %v496, 19
        %v606 = vpop.permute.xlu0 %605
        %607 = vrot.lane.b32.xlu0 %v498, 19
        %v608 = vpop.permute.xlu0 %607
        %609 = vrot.lane.b32.xlu0 %v500, 19
        %v610 = vpop.permute.xlu0 %609
        %v614 = vsel %vm510, %v570, %v579
        %v615 = vsel %vm510, %v572, %v581
        %v616 = vsel %vm510, %v574, %v583
        %v617 = vsel %vm514, %v614, %v588
        %v618 = vsel %vm514, %v615, %v590
        %v619 = vsel %vm514, %v616, %v592
        %v620 = vsel %vm518, %v617, %v597
        %v621 = vsel %vm518, %v618, %v599
        %v622 = vsel %vm518, %v619, %v601
        %v623 = vsel %vm522, %v620, %v606
        %v624 = vsel %vm522, %v621, %v608
        %v625 = vsel %vm522, %v622, %v610
        %v627 = vsel %vm529, %v623, 0
        %v630 = vsel %vm529, %v624, 0
        %v633 = vsel %vm529, %v625, 0
        %635 = vmatpush.msra.mxu0 0.0
        %636 = vmatpush.msra.mxu0 0.0
        %637 = vmatpush.msra.mxu0 0.0
        %638 = vmatpush.msra.mxu0 0.0
        %639 = vmatpush.msra.mxu0 0.0
        %640 = vmatpush.msra.mxu0 0.0
        %641 = vmatpush.msra.mxu0 0.0
        %642 = vmatpush.msra.mxu0 0.0
        %643 = vmatpush.msra.mxu0 0.0
        %644 = vmatpush.msra.mxu0 0.0
        %645 = vmatpush.msra.mxu0 0.0
        %646 = vmatpush.msra.mxu0 0.0
        %647 = vmatpush.msra.mxu0 %v541
        %648 = vmatpush.msra.mxu0 %v336
        %649 = vmatpush.msra.mxu0 %v335
        %650 = vmatpush.msra.mxu0 %v334
        %651 = vmatmul.f32.gmra.mxu0 %v627
        %v652 = vpop.f32.mrf.mxu0
        %v653 = vadd.f32 %v527, %v652
        %654 = vmatmul.f32.gmra.mxu0 %v630
        %v655 = vpop.f32.mrf.mxu0
        %v656 = vadd.f32 %v527, %v655
        %657 = vmatmul.f32.gmra.mxu0 %v633
        %v658 = vpop.f32.mrf.mxu0
        %v659 = vadd.f32 %v527, %v658
        %660 = vdwg.mxu0
        %v661 = vmax.f32 %v561, %v653
        %v662 = vmax.f32 %v564, %v656
        %v663 = vmax.f32 %v567, %v659
        %vm664 = vcmask 195584
        %v666 = vsel %vm664, %v430, 0
        %v669 = vsel %vm664, %v431, 0
        %671 = vmatpush.msra.mxu0 0.0
        %672 = vmatpush.msra.mxu0 0.0
        %673 = vmatpush.msra.mxu0 0.0
        %674 = vmatpush.msra.mxu0 0.0
        %675 = vmatpush.msra.mxu0 0.0
        %676 = vmatpush.msra.mxu0 0.0
        %677 = vmatpush.msra.mxu0 0.0
        %678 = vmatpush.msra.mxu0 0.0
        %679 = vmatpush.msra.mxu0 0.0
        %680 = vmatpush.msra.mxu0 0.0
        %681 = vmatpush.msra.mxu0 0.0
        %682 = vmatpush.msra.mxu0 0.0
        %683 = vmatpush.msra.mxu0 0.0
        %684 = vmatpush.msra.mxu0 %v663
        %685 = vmatpush.msra.mxu0 %v662
        %686 = vmatpush.msra.mxu0 %v661
        %687 = vmatmul.f32.gmra.mxu0 %v666
        %v688 = vpop.f32.mrf.mxu0
        %v689 = vadd.f32 0.0, %v688
        %690 = vmatmul.f32.gmra.mxu0 %v669
        %v691 = vpop.f32.mrf.mxu0
        %v692 = vadd.f32 0.0, %v691
        %693 = vdwg.mxu0
        %v695 = vsel %vm664, %v436, 0
        %v698 = vsel %vm664, %v437, 0
        %700 = vmatpush.msra.mxu0 0.0
        %701 = vmatpush.msra.mxu0 0.0
        %702 = vmatpush.msra.mxu0 0.0
        %703 = vmatpush.msra.mxu0 0.0
        %704 = vmatpush.msra.mxu0 0.0
        %705 = vmatpush.msra.mxu0 0.0
        %706 = vmatpush.msra.mxu0 0.0
        %707 = vmatpush.msra.mxu0 0.0
        %708 = vmatpush.msra.mxu0 0.0
        %709 = vmatpush.msra.mxu0 0.0
        %710 = vmatpush.msra.mxu0 0.0
        %711 = vmatpush.msra.mxu0 0.0
        %712 = vmatpush.msra.mxu0 0.0
        %713 = vmatpush.msra.mxu0 %v663
        %714 = vmatpush.msra.mxu0 %v662
        %715 = vmatpush.msra.mxu0 %v661
        %716 = vmatmul.f32.gmra.mxu0 %v695
        %v717 = vpop.f32.mrf.mxu0
        %v718 = vadd.f32 0.0, %v717
        %719 = vmatmul.f32.gmra.mxu0 %v698
        %v720 = vpop.f32.mrf.mxu0
        %v721 = vadd.f32 0.0, %v720
        %722 = vdwg.mxu0
        %v723 = vmax.f32 %v689, %v718
        %v724 = vmax.f32 %v692, %v721
        %v725 = vmax.f32 %v723, 0.0
        %v726 = vmax.f32 %v724, 0.0
        %727 = vrot.lane.b32.xlu0 %v330, 126
        %v728 = vpop.permute.xlu0 %727
        %729 = vrot.lane.b32.xlu0 %v331, 126
        %v730 = vpop.permute.xlu0 %729
        %731 = vrot.lane.b32.xlu0 %v332, 126
        %v732 = vpop.permute.xlu0 %731
        %736 = vrot.lane.b32.xlu0 %v445, 3
        %v737 = vpop.permute.xlu0 %736
        %738 = vrot.lane.b32.xlu0 %v447, 3
        %v739 = vpop.permute.xlu0 %738
        %740 = vrot.lane.b32.xlu0 %v449, 3
        %v741 = vpop.permute.xlu0 %740
        %745 = vrot.lane.b32.xlu0 %v462, 8
        %v746 = vpop.permute.xlu0 %745
        %747 = vrot.lane.b32.xlu0 %v464, 8
        %v748 = vpop.permute.xlu0 %747
        %749 = vrot.lane.b32.xlu0 %v466, 8
        %v750 = vpop.permute.xlu0 %749
        %754 = vrot.lane.b32.xlu0 %v479, 13
        %v755 = vpop.permute.xlu0 %754
        %756 = vrot.lane.b32.xlu0 %v481, 13
        %v757 = vpop.permute.xlu0 %756
        %758 = vrot.lane.b32.xlu0 %v483, 13
        %v759 = vpop.permute.xlu0 %758
        %763 = vrot.lane.b32.xlu0 %v496, 18
        %v764 = vpop.permute.xlu0 %763
        %765 = vrot.lane.b32.xlu0 %v498, 18
        %v766 = vpop.permute.xlu0 %765
        %767 = vrot.lane.b32.xlu0 %v500, 18
        %v768 = vpop.permute.xlu0 %767
        %v772 = vsel %vm510, %v728, %v737
        %v773 = vsel %vm510, %v730, %v739
        %v774 = vsel %vm510, %v732, %v741
        %v775 = vsel %vm514, %v772, %v746
        %v776 = vsel %vm514, %v773, %v748
        %v777 = vsel %vm514, %v774, %v750
        %v778 = vsel %vm518, %v775, %v755
        %v779 = vsel %vm518, %v776, %v757
        %v780 = vsel %vm518, %v777, %v759
        %v781 = vsel %vm522, %v778, %v764
        %v782 = vsel %vm522, %v779, %v766
        %v783 = vsel %vm522, %v780, %v768
        %v785 = vsel %vm529, %v781, 0
        %v788 = vsel %vm529, %v782, 0
        %v791 = vsel %vm529, %v783, 0
        %793 = vmatpush.msra.mxu0 0.0
        %794 = vmatpush.msra.mxu0 0.0
        %795 = vmatpush.msra.mxu0 0.0
        %796 = vmatpush.msra.mxu0 0.0
        %797 = vmatpush.msra.mxu0 0.0
        %798 = vmatpush.msra.mxu0 0.0
        %799 = vmatpush.msra.mxu0 0.0
        %800 = vmatpush.msra.mxu0 0.0
        %801 = vmatpush.msra.mxu0 0.0
        %802 = vmatpush.msra.mxu0 0.0
        %803 = vmatpush.msra.mxu0 0.0
        %804 = vmatpush.msra.mxu0 0.0
        %805 = vmatpush.msra.mxu0 %v541
        %806 = vmatpush.msra.mxu0 %v336
        %807 = vmatpush.msra.mxu0 %v335
        %808 = vmatpush.msra.mxu0 %v334
        %809 = vmatmul.f32.gmra.mxu0 %v785
        %v810 = vpop.f32.mrf.mxu0
        %v811 = vadd.f32 %v527, %v810
        %812 = vmatmul.f32.gmra.mxu0 %v788
        %v813 = vpop.f32.mrf.mxu0
        %v814 = vadd.f32 %v527, %v813
        %815 = vmatmul.f32.gmra.mxu0 %v791
        %v816 = vpop.f32.mrf.mxu0
        %v817 = vadd.f32 %v527, %v816
        %818 = vdwg.mxu0
        %819 = vrot.lane.b32.xlu0 %v330, 125
        %v820 = vpop.permute.xlu0 %819
        %821 = vrot.lane.b32.xlu0 %v331, 125
        %v822 = vpop.permute.xlu0 %821
        %823 = vrot.lane.b32.xlu0 %v332, 125
        %v824 = vpop.permute.xlu0 %823
        %828 = vrot.lane.b32.xlu0 %v445, 2
        %v829 = vpop.permute.xlu0 %828
        %830 = vrot.lane.b32.xlu0 %v447, 2
        %v831 = vpop.permute.xlu0 %830
        %832 = vrot.lane.b32.xlu0 %v449, 2
        %v833 = vpop.permute.xlu0 %832
        %837 = vrot.lane.b32.xlu0 %v462, 7
        %v838 = vpop.permute.xlu0 %837
        %839 = vrot.lane.b32.xlu0 %v464, 7
        %v840 = vpop.permute.xlu0 %839
        %841 = vrot.lane.b32.xlu0 %v466, 7
        %v842 = vpop.permute.xlu0 %841
        %846 = vrot.lane.b32.xlu0 %v479, 12
        %v847 = vpop.permute.xlu0 %846
        %848 = vrot.lane.b32.xlu0 %v481, 12
        %v849 = vpop.permute.xlu0 %848
        %850 = vrot.lane.b32.xlu0 %v483, 12
        %v851 = vpop.permute.xlu0 %850
        %855 = vrot.lane.b32.xlu0 %v496, 17
        %v856 = vpop.permute.xlu0 %855
        %857 = vrot.lane.b32.xlu0 %v498, 17
        %v858 = vpop.permute.xlu0 %857
        %859 = vrot.lane.b32.xlu0 %v500, 17
        %v860 = vpop.permute.xlu0 %859
        %v864 = vsel %vm510, %v820, %v829
        %v865 = vsel %vm510, %v822, %v831
        %v866 = vsel %vm510, %v824, %v833
        %v867 = vsel %vm514, %v864, %v838
        %v868 = vsel %vm514, %v865, %v840
        %v869 = vsel %vm514, %v866, %v842
        %v870 = vsel %vm518, %v867, %v847
        %v871 = vsel %vm518, %v868, %v849
        %v872 = vsel %vm518, %v869, %v851
        %v873 = vsel %vm522, %v870, %v856
        %v874 = vsel %vm522, %v871, %v858
        %v875 = vsel %vm522, %v872, %v860
        %v877 = vsel %vm529, %v873, 0
        %v880 = vsel %vm529, %v874, 0
        %v883 = vsel %vm529, %v875, 0
        %885 = vmatpush.msra.mxu0 0.0
        %886 = vmatpush.msra.mxu0 0.0
        %887 = vmatpush.msra.mxu0 0.0
        %888 = vmatpush.msra.mxu0 0.0
        %889 = vmatpush.msra.mxu0 0.0
        %890 = vmatpush.msra.mxu0 0.0
        %891 = vmatpush.msra.mxu0 0.0
        %892 = vmatpush.msra.mxu0 0.0
        %893 = vmatpush.msra.mxu0 0.0
        %894 = vmatpush.msra.mxu0 0.0
        %895 = vmatpush.msra.mxu0 0.0
        %896 = vmatpush.msra.mxu0 0.0
        %897 = vmatpush.msra.mxu0 %v541
        %898 = vmatpush.msra.mxu0 %v336
        %899 = vmatpush.msra.mxu0 %v335
        %900 = vmatpush.msra.mxu0 %v334
        %901 = vmatmul.f32.gmra.mxu0 %v877
        %v902 = vpop.f32.mrf.mxu0
        %v903 = vadd.f32 %v527, %v902
        %904 = vmatmul.f32.gmra.mxu0 %v880
        %v905 = vpop.f32.mrf.mxu0
        %v906 = vadd.f32 %v527, %v905
        %907 = vmatmul.f32.gmra.mxu0 %v883
        %v908 = vpop.f32.mrf.mxu0
        %v909 = vadd.f32 %v527, %v908
        %910 = vdwg.mxu0
        %v911 = vmax.f32 %v811, %v903
        %v912 = vmax.f32 %v814, %v906
        %v913 = vmax.f32 %v817, %v909
        %914 = vmatpush.msra.mxu0 0.0
        %915 = vmatpush.msra.mxu0 0.0
        %916 = vmatpush.msra.mxu0 0.0
        %917 = vmatpush.msra.mxu0 0.0
        %918 = vmatpush.msra.mxu0 0.0
        %919 = vmatpush.msra.mxu0 0.0
        %920 = vmatpush.msra.mxu0 0.0
        %921 = vmatpush.msra.mxu0 0.0
        %922 = vmatpush.msra.mxu0 0.0
        %923 = vmatpush.msra.mxu0 0.0
        %924 = vmatpush.msra.mxu0 0.0
        %925 = vmatpush.msra.mxu0 0.0
        %926 = vmatpush.msra.mxu0 0.0
        %927 = vmatpush.msra.mxu0 %v913
        %928 = vmatpush.msra.mxu0 %v912
        %929 = vmatpush.msra.mxu0 %v911
        %930 = vmatmul.f32.gmra.mxu0 %v666
        %v931 = vpop.f32.mrf.mxu0
        %v932 = vadd.f32 0.0, %v931
        %933 = vmatmul.f32.gmra.mxu0 %v669
        %v934 = vpop.f32.mrf.mxu0
        %v935 = vadd.f32 0.0, %v934
        %936 = vdwg.mxu0
        %937 = vmatpush.msra.mxu0 0.0
        %938 = vmatpush.msra.mxu0 0.0
        %939 = vmatpush.msra.mxu0 0.0
        %940 = vmatpush.msra.mxu0 0.0
        %941 = vmatpush.msra.mxu0 0.0
        %942 = vmatpush.msra.mxu0 0.0
        %943 = vmatpush.msra.mxu0 0.0
        %944 = vmatpush.msra.mxu0 0.0
        %945 = vmatpush.msra.mxu0 0.0
        %946 = vmatpush.msra.mxu0 0.0
        %947 = vmatpush.msra.mxu0 0.0
        %948 = vmatpush.msra.mxu0 0.0
        %949 = vmatpush.msra.mxu0 0.0
        %950 = vmatpush.msra.mxu0 %v913
        %951 = vmatpush.msra.mxu0 %v912
        %952 = vmatpush.msra.mxu0 %v911
        %953 = vmatmul.f32.gmra.mxu0 %v695
        %v954 = vpop.f32.mrf.mxu0
        %v955 = vadd.f32 0.0, %v954
        %956 = vmatmul.f32.gmra.mxu0 %v698
        %v957 = vpop.f32.mrf.mxu0
        %v958 = vadd.f32 0.0, %v957
        %959 = vdwg.mxu0
        %v960 = vmax.f32 %v932, %v955
        %v961 = vmax.f32 %v935, %v958
        %v962 = vmax.f32 %v960, 0.0
        %v963 = vmax.f32 %v961, 0.0
        %964 = vrot.lane.b32.xlu0 %v330, 124
        %v965 = vpop.permute.xlu0 %964
        %966 = vrot.lane.b32.xlu0 %v331, 124
        %v967 = vpop.permute.xlu0 %966
        %968 = vrot.lane.b32.xlu0 %v332, 124
        %v969 = vpop.permute.xlu0 %968
        %973 = vrot.lane.b32.xlu0 %v445, 1
        %v974 = vpop.permute.xlu0 %973
        %975 = vrot.lane.b32.xlu0 %v447, 1
        %v976 = vpop.permute.xlu0 %975
        %977 = vrot.lane.b32.xlu0 %v449, 1
        %v978 = vpop.permute.xlu0 %977
        %982 = vrot.lane.b32.xlu0 %v462, 6
        %v983 = vpop.permute.xlu0 %982
        %984 = vrot.lane.b32.xlu0 %v464, 6
        %v985 = vpop.permute.xlu0 %984
        %986 = vrot.lane.b32.xlu0 %v466, 6
        %v987 = vpop.permute.xlu0 %986
        %991 = vrot.lane.b32.xlu0 %v479, 11
        %v992 = vpop.permute.xlu0 %991
        %993 = vrot.lane.b32.xlu0 %v481, 11
        %v994 = vpop.permute.xlu0 %993
        %995 = vrot.lane.b32.xlu0 %v483, 11
        %v996 = vpop.permute.xlu0 %995
        %1000 = vrot.lane.b32.xlu0 %v496, 16
        %v1001 = vpop.permute.xlu0 %1000
        %1002 = vrot.lane.b32.xlu0 %v498, 16
        %v1003 = vpop.permute.xlu0 %1002
        %1004 = vrot.lane.b32.xlu0 %v500, 16
        %v1005 = vpop.permute.xlu0 %1004
        %v1009 = vsel %vm510, %v965, %v974
        %v1010 = vsel %vm510, %v967, %v976
        %v1011 = vsel %vm510, %v969, %v978
        %v1012 = vsel %vm514, %v1009, %v983
        %v1013 = vsel %vm514, %v1010, %v985
        %v1014 = vsel %vm514, %v1011, %v987
        %v1015 = vsel %vm518, %v1012, %v992
        %v1016 = vsel %vm518, %v1013, %v994
        %v1017 = vsel %vm518, %v1014, %v996
        %v1018 = vsel %vm522, %v1015, %v1001
        %v1019 = vsel %vm522, %v1016, %v1003
        %v1020 = vsel %vm522, %v1017, %v1005
        %v1022 = vsel %vm529, %v1018, 0
        %v1025 = vsel %vm529, %v1019, 0
        %v1028 = vsel %vm529, %v1020, 0
        %1030 = vmatpush.msra.mxu0 0.0
        %1031 = vmatpush.msra.mxu0 0.0
        %1032 = vmatpush.msra.mxu0 0.0
        %1033 = vmatpush.msra.mxu0 0.0
        %1034 = vmatpush.msra.mxu0 0.0
        %1035 = vmatpush.msra.mxu0 0.0
        %1036 = vmatpush.msra.mxu0 0.0
        %1037 = vmatpush.msra.mxu0 0.0
        %1038 = vmatpush.msra.mxu0 0.0
        %1039 = vmatpush.msra.mxu0 0.0
        %1040 = vmatpush.msra.mxu0 0.0
        %1041 = vmatpush.msra.mxu0 0.0
        %1042 = vmatpush.msra.mxu0 %v541
        %1043 = vmatpush.msra.mxu0 %v336
        %1044 = vmatpush.msra.mxu0 %v335
        %1045 = vmatpush.msra.mxu0 %v334
        %1046 = vmatmul.f32.gmra.mxu0 %v1022
        %v1047 = vpop.f32.mrf.mxu0
        %v1048 = vadd.f32 %v527, %v1047
        %1049 = vmatmul.f32.gmra.mxu0 %v1025
        %v1050 = vpop.f32.mrf.mxu0
        %v1051 = vadd.f32 %v527, %v1050
        %1052 = vmatmul.f32.gmra.mxu0 %v1028
        %v1053 = vpop.f32.mrf.mxu0
        %v1054 = vadd.f32 %v527, %v1053
        %1055 = vdwg.mxu0
        %1056 = vrot.lane.b32.xlu0 %v330, 123
        %v1057 = vpop.permute.xlu0 %1056
        %1058 = vrot.lane.b32.xlu0 %v331, 123
        %v1059 = vpop.permute.xlu0 %1058
        %1060 = vrot.lane.b32.xlu0 %v332, 123
        %v1061 = vpop.permute.xlu0 %1060
        %1068 = vrot.lane.b32.xlu0 %v462, 5
        %v1069 = vpop.permute.xlu0 %1068
        %1070 = vrot.lane.b32.xlu0 %v464, 5
        %v1071 = vpop.permute.xlu0 %1070
        %1072 = vrot.lane.b32.xlu0 %v466, 5
        %v1073 = vpop.permute.xlu0 %1072
        %1077 = vrot.lane.b32.xlu0 %v479, 10
        %v1078 = vpop.permute.xlu0 %1077
        %1079 = vrot.lane.b32.xlu0 %v481, 10
        %v1080 = vpop.permute.xlu0 %1079
        %1081 = vrot.lane.b32.xlu0 %v483, 10
        %v1082 = vpop.permute.xlu0 %1081
        %1086 = vrot.lane.b32.xlu0 %v496, 15
        %v1087 = vpop.permute.xlu0 %1086
        %1088 = vrot.lane.b32.xlu0 %v498, 15
        %v1089 = vpop.permute.xlu0 %1088
        %1090 = vrot.lane.b32.xlu0 %v500, 15
        %v1091 = vpop.permute.xlu0 %1090
        %v1095 = vsel %vm510, %v1057, %v445
        %v1096 = vsel %vm510, %v1059, %v447
        %v1097 = vsel %vm510, %v1061, %v449
        %v1098 = vsel %vm514, %v1095, %v1069
        %v1099 = vsel %vm514, %v1096, %v1071
        %v1100 = vsel %vm514, %v1097, %v1073
        %v1101 = vsel %vm518, %v1098, %v1078
        %v1102 = vsel %vm518, %v1099, %v1080
        %v1103 = vsel %vm518, %v1100, %v1082
        %v1104 = vsel %vm522, %v1101, %v1087
        %v1105 = vsel %vm522, %v1102, %v1089
        %v1106 = vsel %vm522, %v1103, %v1091
        %v1108 = vsel %vm529, %v1104, 0
        %v1111 = vsel %vm529, %v1105, 0
        %v1114 = vsel %vm529, %v1106, 0
        %1116 = vmatpush.msra.mxu0 0.0
        %1117 = vmatpush.msra.mxu0 0.0
        %1118 = vmatpush.msra.mxu0 0.0
        %1119 = vmatpush.msra.mxu0 0.0
        %1120 = vmatpush.msra.mxu0 0.0
        %1121 = vmatpush.msra.mxu0 0.0
        %1122 = vmatpush.msra.mxu0 0.0
        %1123 = vmatpush.msra.mxu0 0.0
        %1124 = vmatpush.msra.mxu0 0.0
        %1125 = vmatpush.msra.mxu0 0.0
        %1126 = vmatpush.msra.mxu0 0.0
        %1127 = vmatpush.msra.mxu0 0.0
        %1128 = vmatpush.msra.mxu0 %v541
        %1129 = vmatpush.msra.mxu0 %v336
        %1130 = vmatpush.msra.mxu0 %v335
        %1131 = vmatpush.msra.mxu0 %v334
        %1132 = vmatmul.f32.gmra.mxu0 %v1108
        %v1133 = vpop.f32.mrf.mxu0
        %v1134 = vadd.f32 %v527, %v1133
        %1135 = vmatmul.f32.gmra.mxu0 %v1111
        %v1136 = vpop.f32.mrf.mxu0
        %v1137 = vadd.f32 %v527, %v1136
        %1138 = vmatmul.f32.gmra.mxu0 %v1114
        %v1139 = vpop.f32.mrf.mxu0
        %v1140 = vadd.f32 %v527, %v1139
        %1141 = vdwg.mxu0
        %v1142 = vmax.f32 %v1048, %v1134
        %v1143 = vmax.f32 %v1051, %v1137
        %v1144 = vmax.f32 %v1054, %v1140
        %1145 = vmatpush.msra.mxu0 0.0
        %1146 = vmatpush.msra.mxu0 0.0
        %1147 = vmatpush.msra.mxu0 0.0
        %1148 = vmatpush.msra.mxu0 0.0
        %1149 = vmatpush.msra.mxu0 0.0
        %1150 = vmatpush.msra.mxu0 0.0
        %1151 = vmatpush.msra.mxu0 0.0
        %1152 = vmatpush.msra.mxu0 0.0
        %1153 = vmatpush.msra.mxu0 0.0
        %1154 = vmatpush.msra.mxu0 0.0
        %1155 = vmatpush.msra.mxu0 0.0
        %1156 = vmatpush.msra.mxu0 0.0
        %1157 = vmatpush.msra.mxu0 0.0
        %1158 = vmatpush.msra.mxu0 %v1144
        %1159 = vmatpush.msra.mxu0 %v1143
        %1160 = vmatpush.msra.mxu0 %v1142
        %1161 = vmatmul.f32.gmra.mxu0 %v666
        %v1162 = vpop.f32.mrf.mxu0
        %v1163 = vadd.f32 0.0, %v1162
        %1164 = vmatmul.f32.gmra.mxu0 %v669
        %v1165 = vpop.f32.mrf.mxu0
        %v1166 = vadd.f32 0.0, %v1165
        %1167 = vdwg.mxu0
        %1168 = vmatpush.msra.mxu0 0.0
        %1169 = vmatpush.msra.mxu0 0.0
        %1170 = vmatpush.msra.mxu0 0.0
        %1171 = vmatpush.msra.mxu0 0.0
        %1172 = vmatpush.msra.mxu0 0.0
        %1173 = vmatpush.msra.mxu0 0.0
        %1174 = vmatpush.msra.mxu0 0.0
        %1175 = vmatpush.msra.mxu0 0.0
        %1176 = vmatpush.msra.mxu0 0.0
        %1177 = vmatpush.msra.mxu0 0.0
        %1178 = vmatpush.msra.mxu0 0.0
        %1179 = vmatpush.msra.mxu0 0.0
        %1180 = vmatpush.msra.mxu0 0.0
        %1181 = vmatpush.msra.mxu0 %v1144
        %1182 = vmatpush.msra.mxu0 %v1143
        %1183 = vmatpush.msra.mxu0 %v1142
        %1184 = vmatmul.f32.gmra.mxu0 %v695
        %v1185 = vpop.f32.mrf.mxu0
        %v1186 = vadd.f32 0.0, %v1185
        %1187 = vmatmul.f32.gmra.mxu0 %v698
        %v1188 = vpop.f32.mrf.mxu0
        %v1189 = vadd.f32 0.0, %v1188
        %1190 = vdwg.mxu0
        %v1191 = vmax.f32 %v1163, %v1186
        %v1192 = vmax.f32 %v1166, %v1189
        %v1193 = vmax.f32 %v1191, 0.0
        %v1194 = vmax.f32 %v1192, 0.0
        %1195 = vrot.lane.b32.xlu0 %v330, 122
        %v1196 = vpop.permute.xlu0 %1195
        %1197 = vrot.lane.b32.xlu0 %v331, 122
        %v1198 = vpop.permute.xlu0 %1197
        %1199 = vrot.lane.b32.xlu0 %v332, 122
        %v1200 = vpop.permute.xlu0 %1199
        %1204 = vrot.lane.b32.xlu0 %v445, 127
        %v1205 = vpop.permute.xlu0 %1204
        %1206 = vrot.lane.b32.xlu0 %v447, 127
        %v1207 = vpop.permute.xlu0 %1206
        %1208 = vrot.lane.b32.xlu0 %v449, 127
        %v1209 = vpop.permute.xlu0 %1208
        %1213 = vrot.lane.b32.xlu0 %v462, 4
        %v1214 = vpop.permute.xlu0 %1213
        %1215 = vrot.lane.b32.xlu0 %v464, 4
        %v1216 = vpop.permute.xlu0 %1215
        %1217 = vrot.lane.b32.xlu0 %v466, 4
        %v1218 = vpop.permute.xlu0 %1217
        %1222 = vrot.lane.b32.xlu0 %v479, 9
        %v1223 = vpop.permute.xlu0 %1222
        %1224 = vrot.lane.b32.xlu0 %v481, 9
        %v1225 = vpop.permute.xlu0 %1224
        %1226 = vrot.lane.b32.xlu0 %v483, 9
        %v1227 = vpop.permute.xlu0 %1226
        %1231 = vrot.lane.b32.xlu0 %v496, 14
        %v1232 = vpop.permute.xlu0 %1231
        %1233 = vrot.lane.b32.xlu0 %v498, 14
        %v1234 = vpop.permute.xlu0 %1233
        %1235 = vrot.lane.b32.xlu0 %v500, 14
        %v1236 = vpop.permute.xlu0 %1235
        %v1240 = vsel %vm510, %v1196, %v1205
        %v1241 = vsel %vm510, %v1198, %v1207
        %v1242 = vsel %vm510, %v1200, %v1209
        %v1243 = vsel %vm514, %v1240, %v1214
        %v1244 = vsel %vm514, %v1241, %v1216
        %v1245 = vsel %vm514, %v1242, %v1218
        %v1246 = vsel %vm518, %v1243, %v1223
        %v1247 = vsel %vm518, %v1244, %v1225
        %v1248 = vsel %vm518, %v1245, %v1227
        %v1249 = vsel %vm522, %v1246, %v1232
        %v1250 = vsel %vm522, %v1247, %v1234
        %v1251 = vsel %vm522, %v1248, %v1236
        %v1253 = vsel %vm529, %v1249, 0
        %v1256 = vsel %vm529, %v1250, 0
        %v1259 = vsel %vm529, %v1251, 0
        %1261 = vmatpush.msra.mxu0 0.0
        %1262 = vmatpush.msra.mxu0 0.0
        %1263 = vmatpush.msra.mxu0 0.0
        %1264 = vmatpush.msra.mxu0 0.0
        %1265 = vmatpush.msra.mxu0 0.0
        %1266 = vmatpush.msra.mxu0 0.0
        %1267 = vmatpush.msra.mxu0 0.0
        %1268 = vmatpush.msra.mxu0 0.0
        %1269 = vmatpush.msra.mxu0 0.0
        %1270 = vmatpush.msra.mxu0 0.0
        %1271 = vmatpush.msra.mxu0 0.0
        %1272 = vmatpush.msra.mxu0 0.0
        %1273 = vmatpush.msra.mxu0 %v541
        %1274 = vmatpush.msra.mxu0 %v336
        %1275 = vmatpush.msra.mxu0 %v335
        %1276 = vmatpush.msra.mxu0 %v334
        %1277 = vmatmul.f32.gmra.mxu0 %v1253
        %v1278 = vpop.f32.mrf.mxu0
        %v1279 = vadd.f32 %v527, %v1278
        %1280 = vmatmul.f32.gmra.mxu0 %v1256
        %v1281 = vpop.f32.mrf.mxu0
        %v1282 = vadd.f32 %v527, %v1281
        %1283 = vmatmul.f32.gmra.mxu0 %v1259
        %v1284 = vpop.f32.mrf.mxu0
        %v1285 = vadd.f32 %v527, %v1284
        %1286 = vdwg.mxu0
        %1287 = vrot.lane.b32.xlu0 %v330, 121
        %v1288 = vpop.permute.xlu0 %1287
        %1289 = vrot.lane.b32.xlu0 %v331, 121
        %v1290 = vpop.permute.xlu0 %1289
        %1291 = vrot.lane.b32.xlu0 %v332, 121
        %v1292 = vpop.permute.xlu0 %1291
        %1296 = vrot.lane.b32.xlu0 %v445, 126
        %v1297 = vpop.permute.xlu0 %1296
        %1298 = vrot.lane.b32.xlu0 %v447, 126
        %v1299 = vpop.permute.xlu0 %1298
        %1300 = vrot.lane.b32.xlu0 %v449, 126
        %v1301 = vpop.permute.xlu0 %1300
        %1305 = vrot.lane.b32.xlu0 %v462, 3
        %v1306 = vpop.permute.xlu0 %1305
        %1307 = vrot.lane.b32.xlu0 %v464, 3
        %v1308 = vpop.permute.xlu0 %1307
        %1309 = vrot.lane.b32.xlu0 %v466, 3
        %v1310 = vpop.permute.xlu0 %1309
        %1314 = vrot.lane.b32.xlu0 %v479, 8
        %v1315 = vpop.permute.xlu0 %1314
        %1316 = vrot.lane.b32.xlu0 %v481, 8
        %v1317 = vpop.permute.xlu0 %1316
        %1318 = vrot.lane.b32.xlu0 %v483, 8
        %v1319 = vpop.permute.xlu0 %1318
        %1323 = vrot.lane.b32.xlu0 %v496, 13
        %v1324 = vpop.permute.xlu0 %1323
        %1325 = vrot.lane.b32.xlu0 %v498, 13
        %v1326 = vpop.permute.xlu0 %1325
        %1327 = vrot.lane.b32.xlu0 %v500, 13
        %v1328 = vpop.permute.xlu0 %1327
        %v1332 = vsel %vm510, %v1288, %v1297
        %v1333 = vsel %vm510, %v1290, %v1299
        %v1334 = vsel %vm510, %v1292, %v1301
        %v1335 = vsel %vm514, %v1332, %v1306
        %v1336 = vsel %vm514, %v1333, %v1308
        %v1337 = vsel %vm514, %v1334, %v1310
        %v1338 = vsel %vm518, %v1335, %v1315
        %v1339 = vsel %vm518, %v1336, %v1317
        %v1340 = vsel %vm518, %v1337, %v1319
        %v1341 = vsel %vm522, %v1338, %v1324
        %v1342 = vsel %vm522, %v1339, %v1326
        %v1343 = vsel %vm522, %v1340, %v1328
        %v1345 = vsel %vm529, %v1341, 0
        %v1348 = vsel %vm529, %v1342, 0
        %v1351 = vsel %vm529, %v1343, 0
        %1353 = vmatpush.msra.mxu0 0.0
        %1354 = vmatpush.msra.mxu0 0.0
        %1355 = vmatpush.msra.mxu0 0.0
        %1356 = vmatpush.msra.mxu0 0.0
        %1357 = vmatpush.msra.mxu0 0.0
        %1358 = vmatpush.msra.mxu0 0.0
        %1359 = vmatpush.msra.mxu0 0.0
        %1360 = vmatpush.msra.mxu0 0.0
        %1361 = vmatpush.msra.mxu0 0.0
        %1362 = vmatpush.msra.mxu0 0.0
        %1363 = vmatpush.msra.mxu0 0.0
        %1364 = vmatpush.msra.mxu0 0.0
        %1365 = vmatpush.msra.mxu0 %v541
        %1366 = vmatpush.msra.mxu0 %v336
        %1367 = vmatpush.msra.mxu0 %v335
        %1368 = vmatpush.msra.mxu0 %v334
        %1369 = vmatmul.f32.gmra.mxu0 %v1345
        %v1370 = vpop.f32.mrf.mxu0
        %v1371 = vadd.f32 %v527, %v1370
        %1372 = vmatmul.f32.gmra.mxu0 %v1348
        %v1373 = vpop.f32.mrf.mxu0
        %v1374 = vadd.f32 %v527, %v1373
        %1375 = vmatmul.f32.gmra.mxu0 %v1351
        %v1376 = vpop.f32.mrf.mxu0
        %v1377 = vadd.f32 %v527, %v1376
        %1378 = vdwg.mxu0
        %v1379 = vmax.f32 %v1279, %v1371
        %v1380 = vmax.f32 %v1282, %v1374
        %v1381 = vmax.f32 %v1285, %v1377
        %1382 = vmatpush.msra.mxu0 0.0
        %1383 = vmatpush.msra.mxu0 0.0
        %1384 = vmatpush.msra.mxu0 0.0
        %1385 = vmatpush.msra.mxu0 0.0
        %1386 = vmatpush.msra.mxu0 0.0
        %1387 = vmatpush.msra.mxu0 0.0
        %1388 = vmatpush.msra.mxu0 0.0
        %1389 = vmatpush.msra.mxu0 0.0
        %1390 = vmatpush.msra.mxu0 0.0
        %1391 = vmatpush.msra.mxu0 0.0
        %1392 = vmatpush.msra.mxu0 0.0
        %1393 = vmatpush.msra.mxu0 0.0
        %1394 = vmatpush.msra.mxu0 0.0
        %1395 = vmatpush.msra.mxu0 %v1381
        %1396 = vmatpush.msra.mxu0 %v1380
        %1397 = vmatpush.msra.mxu0 %v1379
        %1398 = vmatmul.f32.gmra.mxu0 %v666
        %v1399 = vpop.f32.mrf.mxu0
        %v1400 = vadd.f32 0.0, %v1399
        %1401 = vmatmul.f32.gmra.mxu0 %v669
        %v1402 = vpop.f32.mrf.mxu0
        %v1403 = vadd.f32 0.0, %v1402
        %1404 = vdwg.mxu0
        %1405 = vmatpush.msra.mxu0 0.0
        %1406 = vmatpush.msra.mxu0 0.0
        %1407 = vmatpush.msra.mxu0 0.0
        %1408 = vmatpush.msra.mxu0 0.0
        %1409 = vmatpush.msra.mxu0 0.0
        %1410 = vmatpush.msra.mxu0 0.0
        %1411 = vmatpush.msra.mxu0 0.0
        %1412 = vmatpush.msra.mxu0 0.0
        %1413 = vmatpush.msra.mxu0 0.0
        %1414 = vmatpush.msra.mxu0 0.0
        %1415 = vmatpush.msra.mxu0 0.0
        %1416 = vmatpush.msra.mxu0 0.0
        %1417 = vmatpush.msra.mxu0 0.0
        %1418 = vmatpush.msra.mxu0 %v1381
        %1419 = vmatpush.msra.mxu0 %v1380
        %1420 = vmatpush.msra.mxu0 %v1379
        %1421 = vmatmul.f32.gmra.mxu0 %v695
        %v1422 = vpop.f32.mrf.mxu0
        %v1423 = vadd.f32 0.0, %v1422
        %1424 = vmatmul.f32.gmra.mxu0 %v698
        %v1425 = vpop.f32.mrf.mxu0
        %v1426 = vadd.f32 0.0, %v1425
        %1427 = vdwg.mxu0
        %v1428 = vmax.f32 %v1400, %v1423
        %v1429 = vmax.f32 %v1403, %v1426
        %v1430 = vmax.f32 %v1428, 0.0
        %v1431 = vmax.f32 %v1429, 0.0
        %1432 = vrot.lane.b32.xlu0 %v330, 120
        %v1433 = vpop.permute.xlu0 %1432
        %1434 = vrot.lane.b32.xlu0 %v331, 120
        %v1435 = vpop.permute.xlu0 %1434
        %1436 = vrot.lane.b32.xlu0 %v332, 120
        %v1437 = vpop.permute.xlu0 %1436
        %1441 = vrot.lane.b32.xlu0 %v445, 125
        %v1442 = vpop.permute.xlu0 %1441
        %1443 = vrot.lane.b32.xlu0 %v447, 125
        %v1444 = vpop.permute.xlu0 %1443
        %1445 = vrot.lane.b32.xlu0 %v449, 125
        %v1446 = vpop.permute.xlu0 %1445
        %1450 = vrot.lane.b32.xlu0 %v462, 2
        %v1451 = vpop.permute.xlu0 %1450
        %1452 = vrot.lane.b32.xlu0 %v464, 2
        %v1453 = vpop.permute.xlu0 %1452
        %1454 = vrot.lane.b32.xlu0 %v466, 2
        %v1455 = vpop.permute.xlu0 %1454
        %1459 = vrot.lane.b32.xlu0 %v479, 7
        %v1460 = vpop.permute.xlu0 %1459
        %1461 = vrot.lane.b32.xlu0 %v481, 7
        %v1462 = vpop.permute.xlu0 %1461
        %1463 = vrot.lane.b32.xlu0 %v483, 7
        %v1464 = vpop.permute.xlu0 %1463
        %1468 = vrot.lane.b32.xlu0 %v496, 12
        %v1469 = vpop.permute.xlu0 %1468
        %1470 = vrot.lane.b32.xlu0 %v498, 12
        %v1471 = vpop.permute.xlu0 %1470
        %1472 = vrot.lane.b32.xlu0 %v500, 12
        %v1473 = vpop.permute.xlu0 %1472
        %v1477 = vsel %vm510, %v1433, %v1442
        %v1478 = vsel %vm510, %v1435, %v1444
        %v1479 = vsel %vm510, %v1437, %v1446
        %v1480 = vsel %vm514, %v1477, %v1451
        %v1481 = vsel %vm514, %v1478, %v1453
        %v1482 = vsel %vm514, %v1479, %v1455
        %v1483 = vsel %vm518, %v1480, %v1460
        %v1484 = vsel %vm518, %v1481, %v1462
        %v1485 = vsel %vm518, %v1482, %v1464
        %v1486 = vsel %vm522, %v1483, %v1469
        %v1487 = vsel %vm522, %v1484, %v1471
        %v1488 = vsel %vm522, %v1485, %v1473
        %v1490 = vsel %vm529, %v1486, 0
        %v1493 = vsel %vm529, %v1487, 0
        %v1496 = vsel %vm529, %v1488, 0
        %1498 = vmatpush.msra.mxu0 0.0
        %1499 = vmatpush.msra.mxu0 0.0
        %1500 = vmatpush.msra.mxu0 0.0
        %1501 = vmatpush.msra.mxu0 0.0
        %1502 = vmatpush.msra.mxu0 0.0
        %1503 = vmatpush.msra.mxu0 0.0
        %1504 = vmatpush.msra.mxu0 0.0
        %1505 = vmatpush.msra.mxu0 0.0
        %1506 = vmatpush.msra.mxu0 0.0
        %1507 = vmatpush.msra.mxu0 0.0
        %1508 = vmatpush.msra.mxu0 0.0
        %1509 = vmatpush.msra.mxu0 0.0
        %1510 = vmatpush.msra.mxu0 %v541
        %1511 = vmatpush.msra.mxu0 %v336
        %1512 = vmatpush.msra.mxu0 %v335
        %1513 = vmatpush.msra.mxu0 %v334
        %1514 = vmatmul.f32.gmra.mxu0 %v1490
        %v1515 = vpop.f32.mrf.mxu0
        %v1516 = vadd.f32 %v527, %v1515
        %1517 = vmatmul.f32.gmra.mxu0 %v1493
        %v1518 = vpop.f32.mrf.mxu0
        %v1519 = vadd.f32 %v527, %v1518
        %1520 = vmatmul.f32.gmra.mxu0 %v1496
        %v1521 = vpop.f32.mrf.mxu0
        %v1522 = vadd.f32 %v527, %v1521
        %1523 = vdwg.mxu0
        %1524 = vrot.lane.b32.xlu0 %v330, 119
        %v1525 = vpop.permute.xlu0 %1524
        %1526 = vrot.lane.b32.xlu0 %v331, 119
        %v1527 = vpop.permute.xlu0 %1526
        %1528 = vrot.lane.b32.xlu0 %v332, 119
        %v1529 = vpop.permute.xlu0 %1528
        %1533 = vrot.lane.b32.xlu0 %v445, 124
        %v1534 = vpop.permute.xlu0 %1533
        %1535 = vrot.lane.b32.xlu0 %v447, 124
        %v1536 = vpop.permute.xlu0 %1535
        %1537 = vrot.lane.b32.xlu0 %v449, 124
        %v1538 = vpop.permute.xlu0 %1537
        %1542 = vrot.lane.b32.xlu0 %v462, 1
        %v1543 = vpop.permute.xlu0 %1542
        %1544 = vrot.lane.b32.xlu0 %v464, 1
        %v1545 = vpop.permute.xlu0 %1544
        %1546 = vrot.lane.b32.xlu0 %v466, 1
        %v1547 = vpop.permute.xlu0 %1546
        %1551 = vrot.lane.b32.xlu0 %v479, 6
        %v1552 = vpop.permute.xlu0 %1551
        %1553 = vrot.lane.b32.xlu0 %v481, 6
        %v1554 = vpop.permute.xlu0 %1553
        %1555 = vrot.lane.b32.xlu0 %v483, 6
        %v1556 = vpop.permute.xlu0 %1555
        %1560 = vrot.lane.b32.xlu0 %v496, 11
        %v1561 = vpop.permute.xlu0 %1560
        %1562 = vrot.lane.b32.xlu0 %v498, 11
        %v1563 = vpop.permute.xlu0 %1562
        %1564 = vrot.lane.b32.xlu0 %v500, 11
        %v1565 = vpop.permute.xlu0 %1564
        %v1569 = vsel %vm510, %v1525, %v1534
        %v1570 = vsel %vm510, %v1527, %v1536
        %v1571 = vsel %vm510, %v1529, %v1538
        %v1572 = vsel %vm514, %v1569, %v1543
        %v1573 = vsel %vm514, %v1570, %v1545
        %v1574 = vsel %vm514, %v1571, %v1547
        %v1575 = vsel %vm518, %v1572, %v1552
        %v1576 = vsel %vm518, %v1573, %v1554
        %v1577 = vsel %vm518, %v1574, %v1556
        %v1578 = vsel %vm522, %v1575, %v1561
        %v1579 = vsel %vm522, %v1576, %v1563
        %v1580 = vsel %vm522, %v1577, %v1565
        %v1582 = vsel %vm529, %v1578, 0
        %v1585 = vsel %vm529, %v1579, 0
        %v1588 = vsel %vm529, %v1580, 0
        %1590 = vmatpush.msra.mxu0 0.0
        %1591 = vmatpush.msra.mxu0 0.0
        %1592 = vmatpush.msra.mxu0 0.0
        %1593 = vmatpush.msra.mxu0 0.0
        %1594 = vmatpush.msra.mxu0 0.0
        %1595 = vmatpush.msra.mxu0 0.0
        %1596 = vmatpush.msra.mxu0 0.0
        %1597 = vmatpush.msra.mxu0 0.0
        %1598 = vmatpush.msra.mxu0 0.0
        %1599 = vmatpush.msra.mxu0 0.0
        %1600 = vmatpush.msra.mxu0 0.0
        %1601 = vmatpush.msra.mxu0 0.0
        %1602 = vmatpush.msra.mxu0 %v541
        %1603 = vmatpush.msra.mxu0 %v336
        %1604 = vmatpush.msra.mxu0 %v335
        %1605 = vmatpush.msra.mxu0 %v334
        %1606 = vmatmul.f32.gmra.mxu0 %v1582
        %v1607 = vpop.f32.mrf.mxu0
        %v1608 = vadd.f32 %v527, %v1607
        %1609 = vmatmul.f32.gmra.mxu0 %v1585
        %v1610 = vpop.f32.mrf.mxu0
        %v1611 = vadd.f32 %v527, %v1610
        %1612 = vmatmul.f32.gmra.mxu0 %v1588
        %v1613 = vpop.f32.mrf.mxu0
        %v1614 = vadd.f32 %v527, %v1613
        %1615 = vdwg.mxu0
        %v1616 = vmax.f32 %v1516, %v1608
        %v1617 = vmax.f32 %v1519, %v1611
        %v1618 = vmax.f32 %v1522, %v1614
        %1619 = vmatpush.msra.mxu0 0.0
        %1620 = vmatpush.msra.mxu0 0.0
        %1621 = vmatpush.msra.mxu0 0.0
        %1622 = vmatpush.msra.mxu0 0.0
        %1623 = vmatpush.msra.mxu0 0.0
        %1624 = vmatpush.msra.mxu0 0.0
        %1625 = vmatpush.msra.mxu0 0.0
        %1626 = vmatpush.msra.mxu0 0.0
        %1627 = vmatpush.msra.mxu0 0.0
        %1628 = vmatpush.msra.mxu0 0.0
        %1629 = vmatpush.msra.mxu0 0.0
        %1630 = vmatpush.msra.mxu0 0.0
        %1631 = vmatpush.msra.mxu0 0.0
        %1632 = vmatpush.msra.mxu0 %v1618
        %1633 = vmatpush.msra.mxu0 %v1617
        %1634 = vmatpush.msra.mxu0 %v1616
        %1635 = vmatmul.f32.gmra.mxu0 %v666
        %v1636 = vpop.f32.mrf.mxu0
        %v1637 = vadd.f32 0.0, %v1636
        %1638 = vmatmul.f32.gmra.mxu0 %v669
        %v1639 = vpop.f32.mrf.mxu0
        %v1640 = vadd.f32 0.0, %v1639
        %1641 = vdwg.mxu0
        %1642 = vmatpush.msra.mxu0 0.0
        %1643 = vmatpush.msra.mxu0 0.0
        %1644 = vmatpush.msra.mxu0 0.0
        %1645 = vmatpush.msra.mxu0 0.0
        %1646 = vmatpush.msra.mxu0 0.0
        %1647 = vmatpush.msra.mxu0 0.0
        %1648 = vmatpush.msra.mxu0 0.0
        %1649 = vmatpush.msra.mxu0 0.0
        %1650 = vmatpush.msra.mxu0 0.0
        %1651 = vmatpush.msra.mxu0 0.0
        %1652 = vmatpush.msra.mxu0 0.0
        %1653 = vmatpush.msra.mxu0 0.0
        %1654 = vmatpush.msra.mxu0 0.0
        %1655 = vmatpush.msra.mxu0 %v1618
        %1656 = vmatpush.msra.mxu0 %v1617
        %1657 = vmatpush.msra.mxu0 %v1616
        %1658 = vmatmul.f32.gmra.mxu0 %v695
        %v1659 = vpop.f32.mrf.mxu0
        %v1660 = vadd.f32 0.0, %v1659
        %1661 = vmatmul.f32.gmra.mxu0 %v698
        %v1662 = vpop.f32.mrf.mxu0
        %v1663 = vadd.f32 0.0, %v1662
        %1664 = vdwg.mxu0
        %v1665 = vmax.f32 %v1637, %v1660
        %v1666 = vmax.f32 %v1640, %v1663
        %v1667 = vmax.f32 %v1665, 0.0
        %v1668 = vmax.f32 %v1666, 0.0
        %1669 = vrot.lane.b32.xlu0 %v330, 118
        %v1670 = vpop.permute.xlu0 %1669
        %1671 = vrot.lane.b32.xlu0 %v331, 118
        %v1672 = vpop.permute.xlu0 %1671
        %1673 = vrot.lane.b32.xlu0 %v332, 118
        %v1674 = vpop.permute.xlu0 %1673
        %1678 = vrot.lane.b32.xlu0 %v445, 123
        %v1679 = vpop.permute.xlu0 %1678
        %1680 = vrot.lane.b32.xlu0 %v447, 123
        %v1681 = vpop.permute.xlu0 %1680
        %1682 = vrot.lane.b32.xlu0 %v449, 123
        %v1683 = vpop.permute.xlu0 %1682
        %1690 = vrot.lane.b32.xlu0 %v479, 5
        %v1691 = vpop.permute.xlu0 %1690
        %1692 = vrot.lane.b32.xlu0 %v481, 5
        %v1693 = vpop.permute.xlu0 %1692
        %1694 = vrot.lane.b32.xlu0 %v483, 5
        %v1695 = vpop.permute.xlu0 %1694
        %1699 = vrot.lane.b32.xlu0 %v496, 10
        %v1700 = vpop.permute.xlu0 %1699
        %1701 = vrot.lane.b32.xlu0 %v498, 10
        %v1702 = vpop.permute.xlu0 %1701
        %1703 = vrot.lane.b32.xlu0 %v500, 10
        %v1704 = vpop.permute.xlu0 %1703
        %v1708 = vsel %vm510, %v1670, %v1679
        %v1709 = vsel %vm510, %v1672, %v1681
        %v1710 = vsel %vm510, %v1674, %v1683
        %v1711 = vsel %vm514, %v1708, %v462
        %v1712 = vsel %vm514, %v1709, %v464
        %v1713 = vsel %vm514, %v1710, %v466
        %v1714 = vsel %vm518, %v1711, %v1691
        %v1715 = vsel %vm518, %v1712, %v1693
        %v1716 = vsel %vm518, %v1713, %v1695
        %v1717 = vsel %vm522, %v1714, %v1700
        %v1718 = vsel %vm522, %v1715, %v1702
        %v1719 = vsel %vm522, %v1716, %v1704
        %v1721 = vsel %vm529, %v1717, 0
        %v1724 = vsel %vm529, %v1718, 0
        %v1727 = vsel %vm529, %v1719, 0
        %1729 = vmatpush.msra.mxu0 0.0
        %1730 = vmatpush.msra.mxu0 0.0
        %1731 = vmatpush.msra.mxu0 0.0
        %1732 = vmatpush.msra.mxu0 0.0
        %1733 = vmatpush.msra.mxu0 0.0
        %1734 = vmatpush.msra.mxu0 0.0
        %1735 = vmatpush.msra.mxu0 0.0
        %1736 = vmatpush.msra.mxu0 0.0
        %1737 = vmatpush.msra.mxu0 0.0
        %1738 = vmatpush.msra.mxu0 0.0
        %1739 = vmatpush.msra.mxu0 0.0
        %1740 = vmatpush.msra.mxu0 0.0
        %1741 = vmatpush.msra.mxu0 %v541
        %1742 = vmatpush.msra.mxu0 %v336
        %1743 = vmatpush.msra.mxu0 %v335
        %1744 = vmatpush.msra.mxu0 %v334
        %1745 = vmatmul.f32.gmra.mxu0 %v1721
        %v1746 = vpop.f32.mrf.mxu0
        %v1747 = vadd.f32 %v527, %v1746
        %1748 = vmatmul.f32.gmra.mxu0 %v1724
        %v1749 = vpop.f32.mrf.mxu0
        %v1750 = vadd.f32 %v527, %v1749
        %1751 = vmatmul.f32.gmra.mxu0 %v1727
        %v1752 = vpop.f32.mrf.mxu0
        %v1753 = vadd.f32 %v527, %v1752
        %1754 = vdwg.mxu0
        %1755 = vrot.lane.b32.xlu0 %v330, 117
        %v1756 = vpop.permute.xlu0 %1755
        %1757 = vrot.lane.b32.xlu0 %v331, 117
        %v1758 = vpop.permute.xlu0 %1757
        %1759 = vrot.lane.b32.xlu0 %v332, 117
        %v1760 = vpop.permute.xlu0 %1759
        %1764 = vrot.lane.b32.xlu0 %v445, 122
        %v1765 = vpop.permute.xlu0 %1764
        %1766 = vrot.lane.b32.xlu0 %v447, 122
        %v1767 = vpop.permute.xlu0 %1766
        %1768 = vrot.lane.b32.xlu0 %v449, 122
        %v1769 = vpop.permute.xlu0 %1768
        %1773 = vrot.lane.b32.xlu0 %v462, 127
        %v1774 = vpop.permute.xlu0 %1773
        %1775 = vrot.lane.b32.xlu0 %v464, 127
        %v1776 = vpop.permute.xlu0 %1775
        %1777 = vrot.lane.b32.xlu0 %v466, 127
        %v1778 = vpop.permute.xlu0 %1777
        %1782 = vrot.lane.b32.xlu0 %v479, 4
        %v1783 = vpop.permute.xlu0 %1782
        %1784 = vrot.lane.b32.xlu0 %v481, 4
        %v1785 = vpop.permute.xlu0 %1784
        %1786 = vrot.lane.b32.xlu0 %v483, 4
        %v1787 = vpop.permute.xlu0 %1786
        %1791 = vrot.lane.b32.xlu0 %v496, 9
        %v1792 = vpop.permute.xlu0 %1791
        %1793 = vrot.lane.b32.xlu0 %v498, 9
        %v1794 = vpop.permute.xlu0 %1793
        %1795 = vrot.lane.b32.xlu0 %v500, 9
        %v1796 = vpop.permute.xlu0 %1795
        %v1800 = vsel %vm510, %v1756, %v1765
        %v1801 = vsel %vm510, %v1758, %v1767
        %v1802 = vsel %vm510, %v1760, %v1769
        %v1803 = vsel %vm514, %v1800, %v1774
        %v1804 = vsel %vm514, %v1801, %v1776
        %v1805 = vsel %vm514, %v1802, %v1778
        %v1806 = vsel %vm518, %v1803, %v1783
        %v1807 = vsel %vm518, %v1804, %v1785
        %v1808 = vsel %vm518, %v1805, %v1787
        %v1809 = vsel %vm522, %v1806, %v1792
        %v1810 = vsel %vm522, %v1807, %v1794
        %v1811 = vsel %vm522, %v1808, %v1796
        %v1813 = vsel %vm529, %v1809, 0
        %v1816 = vsel %vm529, %v1810, 0
        %v1819 = vsel %vm529, %v1811, 0
        %1821 = vmatpush.msra.mxu0 0.0
        %1822 = vmatpush.msra.mxu0 0.0
        %1823 = vmatpush.msra.mxu0 0.0
        %1824 = vmatpush.msra.mxu0 0.0
        %1825 = vmatpush.msra.mxu0 0.0
        %1826 = vmatpush.msra.mxu0 0.0
        %1827 = vmatpush.msra.mxu0 0.0
        %1828 = vmatpush.msra.mxu0 0.0
        %1829 = vmatpush.msra.mxu0 0.0
        %1830 = vmatpush.msra.mxu0 0.0
        %1831 = vmatpush.msra.mxu0 0.0
        %1832 = vmatpush.msra.mxu0 0.0
        %1833 = vmatpush.msra.mxu0 %v541
        %1834 = vmatpush.msra.mxu0 %v336
        %1835 = vmatpush.msra.mxu0 %v335
        %1836 = vmatpush.msra.mxu0 %v334
        %1837 = vmatmul.f32.gmra.mxu0 %v1813
        %v1838 = vpop.f32.mrf.mxu0
        %v1839 = vadd.f32 %v527, %v1838
        %1840 = vmatmul.f32.gmra.mxu0 %v1816
        %v1841 = vpop.f32.mrf.mxu0
        %v1842 = vadd.f32 %v527, %v1841
        %1843 = vmatmul.f32.gmra.mxu0 %v1819
        %v1844 = vpop.f32.mrf.mxu0
        %v1845 = vadd.f32 %v527, %v1844
        %1846 = vdwg.mxu0
        %v1847 = vmax.f32 %v1747, %v1839
        %v1848 = vmax.f32 %v1750, %v1842
        %v1849 = vmax.f32 %v1753, %v1845
        %1850 = vmatpush.msra.mxu0 0.0
        %1851 = vmatpush.msra.mxu0 0.0
        %1852 = vmatpush.msra.mxu0 0.0
        %1853 = vmatpush.msra.mxu0 0.0
        %1854 = vmatpush.msra.mxu0 0.0
        %1855 = vmatpush.msra.mxu0 0.0
        %1856 = vmatpush.msra.mxu0 0.0
        %1857 = vmatpush.msra.mxu0 0.0
        %1858 = vmatpush.msra.mxu0 0.0
        %1859 = vmatpush.msra.mxu0 0.0
        %1860 = vmatpush.msra.mxu0 0.0
        %1861 = vmatpush.msra.mxu0 0.0
        %1862 = vmatpush.msra.mxu0 0.0
        %1863 = vmatpush.msra.mxu0 %v1849
        %1864 = vmatpush.msra.mxu0 %v1848
        %1865 = vmatpush.msra.mxu0 %v1847
        %1866 = vmatmul.f32.gmra.mxu0 %v666
        %v1867 = vpop.f32.mrf.mxu0
        %v1868 = vadd.f32 0.0, %v1867
        %1869 = vmatmul.f32.gmra.mxu0 %v669
        %v1870 = vpop.f32.mrf.mxu0
        %v1871 = vadd.f32 0.0, %v1870
        %1872 = vdwg.mxu0
        %1873 = vmatpush.msra.mxu0 0.0
        %1874 = vmatpush.msra.mxu0 0.0
        %1875 = vmatpush.msra.mxu0 0.0
        %1876 = vmatpush.msra.mxu0 0.0
        %1877 = vmatpush.msra.mxu0 0.0
        %1878 = vmatpush.msra.mxu0 0.0
        %1879 = vmatpush.msra.mxu0 0.0
        %1880 = vmatpush.msra.mxu0 0.0
        %1881 = vmatpush.msra.mxu0 0.0
        %1882 = vmatpush.msra.mxu0 0.0
        %1883 = vmatpush.msra.mxu0 0.0
        %1884 = vmatpush.msra.mxu0 0.0
        %1885 = vmatpush.msra.mxu0 0.0
        %1886 = vmatpush.msra.mxu0 %v1849
        %1887 = vmatpush.msra.mxu0 %v1848
        %1888 = vmatpush.msra.mxu0 %v1847
        %1889 = vmatmul.f32.gmra.mxu0 %v695
        %v1890 = vpop.f32.mrf.mxu0
        %v1891 = vadd.f32 0.0, %v1890
        %1892 = vmatmul.f32.gmra.mxu0 %v698
        %v1893 = vpop.f32.mrf.mxu0
        %v1894 = vadd.f32 0.0, %v1893
        %1895 = vdwg.mxu0
        %v1896 = vmax.f32 %v1868, %v1891
        %v1897 = vmax.f32 %v1871, %v1894
        %v1898 = vmax.f32 %v1896, 0.0
        %v1899 = vmax.f32 %v1897, 0.0
        %1900 = vrot.lane.b32.xlu0 %v330, 116
        %v1901 = vpop.permute.xlu0 %1900
        %1902 = vrot.lane.b32.xlu0 %v331, 116
        %v1903 = vpop.permute.xlu0 %1902
        %1904 = vrot.lane.b32.xlu0 %v332, 116
        %v1905 = vpop.permute.xlu0 %1904
        %1909 = vrot.lane.b32.xlu0 %v445, 121
        %v1910 = vpop.permute.xlu0 %1909
        %1911 = vrot.lane.b32.xlu0 %v447, 121
        %v1912 = vpop.permute.xlu0 %1911
        %1913 = vrot.lane.b32.xlu0 %v449, 121
        %v1914 = vpop.permute.xlu0 %1913
        %1918 = vrot.lane.b32.xlu0 %v462, 126
        %v1919 = vpop.permute.xlu0 %1918
        %1920 = vrot.lane.b32.xlu0 %v464, 126
        %v1921 = vpop.permute.xlu0 %1920
        %1922 = vrot.lane.b32.xlu0 %v466, 126
        %v1923 = vpop.permute.xlu0 %1922
        %1927 = vrot.lane.b32.xlu0 %v479, 3
        %v1928 = vpop.permute.xlu0 %1927
        %1929 = vrot.lane.b32.xlu0 %v481, 3
        %v1930 = vpop.permute.xlu0 %1929
        %1931 = vrot.lane.b32.xlu0 %v483, 3
        %v1932 = vpop.permute.xlu0 %1931
        %1936 = vrot.lane.b32.xlu0 %v496, 8
        %v1937 = vpop.permute.xlu0 %1936
        %1938 = vrot.lane.b32.xlu0 %v498, 8
        %v1939 = vpop.permute.xlu0 %1938
        %1940 = vrot.lane.b32.xlu0 %v500, 8
        %v1941 = vpop.permute.xlu0 %1940
        %v1945 = vsel %vm510, %v1901, %v1910
        %v1946 = vsel %vm510, %v1903, %v1912
        %v1947 = vsel %vm510, %v1905, %v1914
        %v1948 = vsel %vm514, %v1945, %v1919
        %v1949 = vsel %vm514, %v1946, %v1921
        %v1950 = vsel %vm514, %v1947, %v1923
        %v1951 = vsel %vm518, %v1948, %v1928
        %v1952 = vsel %vm518, %v1949, %v1930
        %v1953 = vsel %vm518, %v1950, %v1932
        %v1954 = vsel %vm522, %v1951, %v1937
        %v1955 = vsel %vm522, %v1952, %v1939
        %v1956 = vsel %vm522, %v1953, %v1941
        %v1958 = vsel %vm529, %v1954, 0
        %v1961 = vsel %vm529, %v1955, 0
        %v1964 = vsel %vm529, %v1956, 0
        %1966 = vmatpush.msra.mxu0 0.0
        %1967 = vmatpush.msra.mxu0 0.0
        %1968 = vmatpush.msra.mxu0 0.0
        %1969 = vmatpush.msra.mxu0 0.0
        %1970 = vmatpush.msra.mxu0 0.0
        %1971 = vmatpush.msra.mxu0 0.0
        %1972 = vmatpush.msra.mxu0 0.0
        %1973 = vmatpush.msra.mxu0 0.0
        %1974 = vmatpush.msra.mxu0 0.0
        %1975 = vmatpush.msra.mxu0 0.0
        %1976 = vmatpush.msra.mxu0 0.0
        %1977 = vmatpush.msra.mxu0 0.0
        %1978 = vmatpush.msra.mxu0 %v541
        %1979 = vmatpush.msra.mxu0 %v336
        %1980 = vmatpush.msra.mxu0 %v335
        %1981 = vmatpush.msra.mxu0 %v334
        %1982 = vmatmul.f32.gmra.mxu0 %v1958
        %v1983 = vpop.f32.mrf.mxu0
        %v1984 = vadd.f32 %v527, %v1983
        %1985 = vmatmul.f32.gmra.mxu0 %v1961
        %v1986 = vpop.f32.mrf.mxu0
        %v1987 = vadd.f32 %v527, %v1986
        %1988 = vmatmul.f32.gmra.mxu0 %v1964
        %v1989 = vpop.f32.mrf.mxu0
        %v1990 = vadd.f32 %v527, %v1989
        %1991 = vdwg.mxu0
        %1992 = vrot.lane.b32.xlu0 %v330, 115
        %v1993 = vpop.permute.xlu0 %1992
        %1994 = vrot.lane.b32.xlu0 %v331, 115
        %v1995 = vpop.permute.xlu0 %1994
        %1996 = vrot.lane.b32.xlu0 %v332, 115
        %v1997 = vpop.permute.xlu0 %1996
        %2001 = vrot.lane.b32.xlu0 %v445, 120
        %v2002 = vpop.permute.xlu0 %2001
        %2003 = vrot.lane.b32.xlu0 %v447, 120
        %v2004 = vpop.permute.xlu0 %2003
        %2005 = vrot.lane.b32.xlu0 %v449, 120
        %v2006 = vpop.permute.xlu0 %2005
        %2010 = vrot.lane.b32.xlu0 %v462, 125
        %v2011 = vpop.permute.xlu0 %2010
        %2012 = vrot.lane.b32.xlu0 %v464, 125
        %v2013 = vpop.permute.xlu0 %2012
        %2014 = vrot.lane.b32.xlu0 %v466, 125
        %v2015 = vpop.permute.xlu0 %2014
        %2019 = vrot.lane.b32.xlu0 %v479, 2
        %v2020 = vpop.permute.xlu0 %2019
        %2021 = vrot.lane.b32.xlu0 %v481, 2
        %v2022 = vpop.permute.xlu0 %2021
        %2023 = vrot.lane.b32.xlu0 %v483, 2
        %v2024 = vpop.permute.xlu0 %2023
        %2028 = vrot.lane.b32.xlu0 %v496, 7
        %v2029 = vpop.permute.xlu0 %2028
        %2030 = vrot.lane.b32.xlu0 %v498, 7
        %v2031 = vpop.permute.xlu0 %2030
        %2032 = vrot.lane.b32.xlu0 %v500, 7
        %v2033 = vpop.permute.xlu0 %2032
        %v2037 = vsel %vm510, %v1993, %v2002
        %v2038 = vsel %vm510, %v1995, %v2004
        %v2039 = vsel %vm510, %v1997, %v2006
        %v2040 = vsel %vm514, %v2037, %v2011
        %v2041 = vsel %vm514, %v2038, %v2013
        %v2042 = vsel %vm514, %v2039, %v2015
        %v2043 = vsel %vm518, %v2040, %v2020
        %v2044 = vsel %vm518, %v2041, %v2022
        %v2045 = vsel %vm518, %v2042, %v2024
        %v2046 = vsel %vm522, %v2043, %v2029
        %v2047 = vsel %vm522, %v2044, %v2031
        %v2048 = vsel %vm522, %v2045, %v2033
        %v2050 = vsel %vm529, %v2046, 0
        %v2053 = vsel %vm529, %v2047, 0
        %v2056 = vsel %vm529, %v2048, 0
        %2058 = vmatpush.msra.mxu0 0.0
        %2059 = vmatpush.msra.mxu0 0.0
        %2060 = vmatpush.msra.mxu0 0.0
        %2061 = vmatpush.msra.mxu0 0.0
        %2062 = vmatpush.msra.mxu0 0.0
        %2063 = vmatpush.msra.mxu0 0.0
        %2064 = vmatpush.msra.mxu0 0.0
        %2065 = vmatpush.msra.mxu0 0.0
        %2066 = vmatpush.msra.mxu0 0.0
        %2067 = vmatpush.msra.mxu0 0.0
        %2068 = vmatpush.msra.mxu0 0.0
        %2069 = vmatpush.msra.mxu0 0.0
        %2070 = vmatpush.msra.mxu0 %v541
        %2071 = vmatpush.msra.mxu0 %v336
        %2072 = vmatpush.msra.mxu0 %v335
        %2073 = vmatpush.msra.mxu0 %v334
        %2074 = vmatmul.f32.gmra.mxu0 %v2050
        %v2075 = vpop.f32.mrf.mxu0
        %v2076 = vadd.f32 %v527, %v2075
        %2077 = vmatmul.f32.gmra.mxu0 %v2053
        %v2078 = vpop.f32.mrf.mxu0
        %v2079 = vadd.f32 %v527, %v2078
        %2080 = vmatmul.f32.gmra.mxu0 %v2056
        %v2081 = vpop.f32.mrf.mxu0
        %v2082 = vadd.f32 %v527, %v2081
        %2083 = vdwg.mxu0
        %v2084 = vmax.f32 %v1984, %v2076
        %v2085 = vmax.f32 %v1987, %v2079
        %v2086 = vmax.f32 %v1990, %v2082
        %2087 = vmatpush.msra.mxu0 0.0
        %2088 = vmatpush.msra.mxu0 0.0
        %2089 = vmatpush.msra.mxu0 0.0
        %2090 = vmatpush.msra.mxu0 0.0
        %2091 = vmatpush.msra.mxu0 0.0
        %2092 = vmatpush.msra.mxu0 0.0
        %2093 = vmatpush.msra.mxu0 0.0
        %2094 = vmatpush.msra.mxu0 0.0
        %2095 = vmatpush.msra.mxu0 0.0
        %2096 = vmatpush.msra.mxu0 0.0
        %2097 = vmatpush.msra.mxu0 0.0
        %2098 = vmatpush.msra.mxu0 0.0
        %2099 = vmatpush.msra.mxu0 0.0
        %2100 = vmatpush.msra.mxu0 %v2086
        %2101 = vmatpush.msra.mxu0 %v2085
        %2102 = vmatpush.msra.mxu0 %v2084
        %2103 = vmatmul.f32.gmra.mxu0 %v666
        %v2104 = vpop.f32.mrf.mxu0
        %v2105 = vadd.f32 0.0, %v2104
        %2106 = vmatmul.f32.gmra.mxu0 %v669
        %v2107 = vpop.f32.mrf.mxu0
        %v2108 = vadd.f32 0.0, %v2107
        %2109 = vdwg.mxu0
        %2110 = vmatpush.msra.mxu0 0.0
        %2111 = vmatpush.msra.mxu0 0.0
        %2112 = vmatpush.msra.mxu0 0.0
        %2113 = vmatpush.msra.mxu0 0.0
        %2114 = vmatpush.msra.mxu0 0.0
        %2115 = vmatpush.msra.mxu0 0.0
        %2116 = vmatpush.msra.mxu0 0.0
        %2117 = vmatpush.msra.mxu0 0.0
        %2118 = vmatpush.msra.mxu0 0.0
        %2119 = vmatpush.msra.mxu0 0.0
        %2120 = vmatpush.msra.mxu0 0.0
        %2121 = vmatpush.msra.mxu0 0.0
        %2122 = vmatpush.msra.mxu0 0.0
        %2123 = vmatpush.msra.mxu0 %v2086
        %2124 = vmatpush.msra.mxu0 %v2085
        %2125 = vmatpush.msra.mxu0 %v2084
        %2126 = vmatmul.f32.gmra.mxu0 %v695
        %v2127 = vpop.f32.mrf.mxu0
        %v2128 = vadd.f32 0.0, %v2127
        %2129 = vmatmul.f32.gmra.mxu0 %v698
        %v2130 = vpop.f32.mrf.mxu0
        %v2131 = vadd.f32 0.0, %v2130
        %2132 = vdwg.mxu0
        %v2133 = vmax.f32 %v2105, %v2128
        %v2134 = vmax.f32 %v2108, %v2131
        %v2135 = vmax.f32 %v2133, 0.0
        %v2136 = vmax.f32 %v2134, 0.0
        %2137 = vrot.lane.b32.xlu0 %v330, 114
        %v2138 = vpop.permute.xlu0 %2137
        %2139 = vrot.lane.b32.xlu0 %v331, 114
        %v2140 = vpop.permute.xlu0 %2139
        %2141 = vrot.lane.b32.xlu0 %v332, 114
        %v2142 = vpop.permute.xlu0 %2141
        %2146 = vrot.lane.b32.xlu0 %v445, 119
        %v2147 = vpop.permute.xlu0 %2146
        %2148 = vrot.lane.b32.xlu0 %v447, 119
        %v2149 = vpop.permute.xlu0 %2148
        %2150 = vrot.lane.b32.xlu0 %v449, 119
        %v2151 = vpop.permute.xlu0 %2150
        %2155 = vrot.lane.b32.xlu0 %v462, 124
        %v2156 = vpop.permute.xlu0 %2155
        %2157 = vrot.lane.b32.xlu0 %v464, 124
        %v2158 = vpop.permute.xlu0 %2157
        %2159 = vrot.lane.b32.xlu0 %v466, 124
        %v2160 = vpop.permute.xlu0 %2159
        %2164 = vrot.lane.b32.xlu0 %v479, 1
        %v2165 = vpop.permute.xlu0 %2164
        %2166 = vrot.lane.b32.xlu0 %v481, 1
        %v2167 = vpop.permute.xlu0 %2166
        %2168 = vrot.lane.b32.xlu0 %v483, 1
        %v2169 = vpop.permute.xlu0 %2168
        %2173 = vrot.lane.b32.xlu0 %v496, 6
        %v2174 = vpop.permute.xlu0 %2173
        %2175 = vrot.lane.b32.xlu0 %v498, 6
        %v2176 = vpop.permute.xlu0 %2175
        %2177 = vrot.lane.b32.xlu0 %v500, 6
        %v2178 = vpop.permute.xlu0 %2177
        %v2182 = vsel %vm510, %v2138, %v2147
        %v2183 = vsel %vm510, %v2140, %v2149
        %v2184 = vsel %vm510, %v2142, %v2151
        %v2185 = vsel %vm514, %v2182, %v2156
        %v2186 = vsel %vm514, %v2183, %v2158
        %v2187 = vsel %vm514, %v2184, %v2160
        %v2188 = vsel %vm518, %v2185, %v2165
        %v2189 = vsel %vm518, %v2186, %v2167
        %v2190 = vsel %vm518, %v2187, %v2169
        %v2191 = vsel %vm522, %v2188, %v2174
        %v2192 = vsel %vm522, %v2189, %v2176
        %v2193 = vsel %vm522, %v2190, %v2178
        %v2195 = vsel %vm529, %v2191, 0
        %v2198 = vsel %vm529, %v2192, 0
        %v2201 = vsel %vm529, %v2193, 0
        %2203 = vmatpush.msra.mxu0 0.0
        %2204 = vmatpush.msra.mxu0 0.0
        %2205 = vmatpush.msra.mxu0 0.0
        %2206 = vmatpush.msra.mxu0 0.0
        %2207 = vmatpush.msra.mxu0 0.0
        %2208 = vmatpush.msra.mxu0 0.0
        %2209 = vmatpush.msra.mxu0 0.0
        %2210 = vmatpush.msra.mxu0 0.0
        %2211 = vmatpush.msra.mxu0 0.0
        %2212 = vmatpush.msra.mxu0 0.0
        %2213 = vmatpush.msra.mxu0 0.0
        %2214 = vmatpush.msra.mxu0 0.0
        %2215 = vmatpush.msra.mxu0 %v541
        %2216 = vmatpush.msra.mxu0 %v336
        %2217 = vmatpush.msra.mxu0 %v335
        %2218 = vmatpush.msra.mxu0 %v334
        %2219 = vmatmul.f32.gmra.mxu0 %v2195
        %v2220 = vpop.f32.mrf.mxu0
        %v2221 = vadd.f32 %v527, %v2220
        %2222 = vmatmul.f32.gmra.mxu0 %v2198
        %v2223 = vpop.f32.mrf.mxu0
        %v2224 = vadd.f32 %v527, %v2223
        %2225 = vmatmul.f32.gmra.mxu0 %v2201
        %v2226 = vpop.f32.mrf.mxu0
        %v2227 = vadd.f32 %v527, %v2226
        %2228 = vdwg.mxu0
        %2229 = vrot.lane.b32.xlu0 %v330, 113
        %v2230 = vpop.permute.xlu0 %2229
        %2231 = vrot.lane.b32.xlu0 %v331, 113
        %v2232 = vpop.permute.xlu0 %2231
        %2233 = vrot.lane.b32.xlu0 %v332, 113
        %v2234 = vpop.permute.xlu0 %2233
        %2238 = vrot.lane.b32.xlu0 %v445, 118
        %v2239 = vpop.permute.xlu0 %2238
        %2240 = vrot.lane.b32.xlu0 %v447, 118
        %v2241 = vpop.permute.xlu0 %2240
        %2242 = vrot.lane.b32.xlu0 %v449, 118
        %v2243 = vpop.permute.xlu0 %2242
        %2247 = vrot.lane.b32.xlu0 %v462, 123
        %v2248 = vpop.permute.xlu0 %2247
        %2249 = vrot.lane.b32.xlu0 %v464, 123
        %v2250 = vpop.permute.xlu0 %2249
        %2251 = vrot.lane.b32.xlu0 %v466, 123
        %v2252 = vpop.permute.xlu0 %2251
        %2259 = vrot.lane.b32.xlu0 %v496, 5
        %v2260 = vpop.permute.xlu0 %2259
        %2261 = vrot.lane.b32.xlu0 %v498, 5
        %v2262 = vpop.permute.xlu0 %2261
        %2263 = vrot.lane.b32.xlu0 %v500, 5
        %v2264 = vpop.permute.xlu0 %2263
        %v2268 = vsel %vm510, %v2230, %v2239
        %v2269 = vsel %vm510, %v2232, %v2241
        %v2270 = vsel %vm510, %v2234, %v2243
        %v2271 = vsel %vm514, %v2268, %v2248
        %v2272 = vsel %vm514, %v2269, %v2250
        %v2273 = vsel %vm514, %v2270, %v2252
        %v2274 = vsel %vm518, %v2271, %v479
        %v2275 = vsel %vm518, %v2272, %v481
        %v2276 = vsel %vm518, %v2273, %v483
        %v2277 = vsel %vm522, %v2274, %v2260
        %v2278 = vsel %vm522, %v2275, %v2262
        %v2279 = vsel %vm522, %v2276, %v2264
        %v2281 = vsel %vm529, %v2277, 0
        %v2284 = vsel %vm529, %v2278, 0
        %v2287 = vsel %vm529, %v2279, 0
        %2289 = vmatpush.msra.mxu0 0.0
        %2290 = vmatpush.msra.mxu0 0.0
        %2291 = vmatpush.msra.mxu0 0.0
        %2292 = vmatpush.msra.mxu0 0.0
        %2293 = vmatpush.msra.mxu0 0.0
        %2294 = vmatpush.msra.mxu0 0.0
        %2295 = vmatpush.msra.mxu0 0.0
        %2296 = vmatpush.msra.mxu0 0.0
        %2297 = vmatpush.msra.mxu0 0.0
        %2298 = vmatpush.msra.mxu0 0.0
        %2299 = vmatpush.msra.mxu0 0.0
        %2300 = vmatpush.msra.mxu0 0.0
        %2301 = vmatpush.msra.mxu0 %v541
        %2302 = vmatpush.msra.mxu0 %v336
        %2303 = vmatpush.msra.mxu0 %v335
        %2304 = vmatpush.msra.mxu0 %v334
        %2305 = vmatmul.f32.gmra.mxu0 %v2281
        %v2306 = vpop.f32.mrf.mxu0
        %v2307 = vadd.f32 %v527, %v2306
        %2308 = vmatmul.f32.gmra.mxu0 %v2284
        %v2309 = vpop.f32.mrf.mxu0
        %v2310 = vadd.f32 %v527, %v2309
        %2311 = vmatmul.f32.gmra.mxu0 %v2287
        %v2312 = vpop.f32.mrf.mxu0
        %v2313 = vadd.f32 %v527, %v2312
        %2314 = vdwg.mxu0
        %v2315 = vmax.f32 %v2221, %v2307
        %v2316 = vmax.f32 %v2224, %v2310
        %v2317 = vmax.f32 %v2227, %v2313
        %2318 = vmatpush.msra.mxu0 0.0
        %2319 = vmatpush.msra.mxu0 0.0
        %2320 = vmatpush.msra.mxu0 0.0
        %2321 = vmatpush.msra.mxu0 0.0
        %2322 = vmatpush.msra.mxu0 0.0
        %2323 = vmatpush.msra.mxu0 0.0
        %2324 = vmatpush.msra.mxu0 0.0
        %2325 = vmatpush.msra.mxu0 0.0
        %2326 = vmatpush.msra.mxu0 0.0
        %2327 = vmatpush.msra.mxu0 0.0
        %2328 = vmatpush.msra.mxu0 0.0
        %2329 = vmatpush.msra.mxu0 0.0
        %2330 = vmatpush.msra.mxu0 0.0
        %2331 = vmatpush.msra.mxu0 %v2317
        %2332 = vmatpush.msra.mxu0 %v2316
        %2333 = vmatpush.msra.mxu0 %v2315
        %2334 = vmatmul.f32.gmra.mxu0 %v666
        %v2335 = vpop.f32.mrf.mxu0
        %v2336 = vadd.f32 0.0, %v2335
        %2337 = vmatmul.f32.gmra.mxu0 %v669
        %v2338 = vpop.f32.mrf.mxu0
        %v2339 = vadd.f32 0.0, %v2338
        %2340 = vdwg.mxu0
        %2341 = vmatpush.msra.mxu0 0.0
        %2342 = vmatpush.msra.mxu0 0.0
        %2343 = vmatpush.msra.mxu0 0.0
        %2344 = vmatpush.msra.mxu0 0.0
        %2345 = vmatpush.msra.mxu0 0.0
        %2346 = vmatpush.msra.mxu0 0.0
        %2347 = vmatpush.msra.mxu0 0.0
        %2348 = vmatpush.msra.mxu0 0.0
        %2349 = vmatpush.msra.mxu0 0.0
        %2350 = vmatpush.msra.mxu0 0.0
        %2351 = vmatpush.msra.mxu0 0.0
        %2352 = vmatpush.msra.mxu0 0.0
        %2353 = vmatpush.msra.mxu0 0.0
        %2354 = vmatpush.msra.mxu0 %v2317
        %2355 = vmatpush.msra.mxu0 %v2316
        %2356 = vmatpush.msra.mxu0 %v2315
        %2357 = vmatmul.f32.gmra.mxu0 %v695
        %v2358 = vpop.f32.mrf.mxu0
        %v2359 = vadd.f32 0.0, %v2358
        %2360 = vmatmul.f32.gmra.mxu0 %v698
        %v2361 = vpop.f32.mrf.mxu0
        %v2362 = vadd.f32 0.0, %v2361
        %2363 = vdwg.mxu0
        %v2364 = vmax.f32 %v2336, %v2359
        %v2365 = vmax.f32 %v2339, %v2362
        %v2366 = vmax.f32 %v2364, 0.0
        %v2367 = vmax.f32 %v2365, 0.0
        %2368 = vrot.lane.b32.xlu0 %v330, 112
        %v2369 = vpop.permute.xlu0 %2368
        %2370 = vrot.lane.b32.xlu0 %v331, 112
        %v2371 = vpop.permute.xlu0 %2370
        %2372 = vrot.lane.b32.xlu0 %v332, 112
        %v2373 = vpop.permute.xlu0 %2372
        %2377 = vrot.lane.b32.xlu0 %v445, 117
        %v2378 = vpop.permute.xlu0 %2377
        %2379 = vrot.lane.b32.xlu0 %v447, 117
        %v2380 = vpop.permute.xlu0 %2379
        %2381 = vrot.lane.b32.xlu0 %v449, 117
        %v2382 = vpop.permute.xlu0 %2381
        %2386 = vrot.lane.b32.xlu0 %v462, 122
        %v2387 = vpop.permute.xlu0 %2386
        %2388 = vrot.lane.b32.xlu0 %v464, 122
        %v2389 = vpop.permute.xlu0 %2388
        %2390 = vrot.lane.b32.xlu0 %v466, 122
        %v2391 = vpop.permute.xlu0 %2390
        %2395 = vrot.lane.b32.xlu0 %v479, 127
        %v2396 = vpop.permute.xlu0 %2395
        %2397 = vrot.lane.b32.xlu0 %v481, 127
        %v2398 = vpop.permute.xlu0 %2397
        %2399 = vrot.lane.b32.xlu0 %v483, 127
        %v2400 = vpop.permute.xlu0 %2399
        %2404 = vrot.lane.b32.xlu0 %v496, 4
        %v2405 = vpop.permute.xlu0 %2404
        %2406 = vrot.lane.b32.xlu0 %v498, 4
        %v2407 = vpop.permute.xlu0 %2406
        %2408 = vrot.lane.b32.xlu0 %v500, 4
        %v2409 = vpop.permute.xlu0 %2408
        %v2413 = vsel %vm510, %v2369, %v2378
        %v2414 = vsel %vm510, %v2371, %v2380
        %v2415 = vsel %vm510, %v2373, %v2382
        %v2416 = vsel %vm514, %v2413, %v2387
        %v2417 = vsel %vm514, %v2414, %v2389
        %v2418 = vsel %vm514, %v2415, %v2391
        %v2419 = vsel %vm518, %v2416, %v2396
        %v2420 = vsel %vm518, %v2417, %v2398
        %v2421 = vsel %vm518, %v2418, %v2400
        %v2422 = vsel %vm522, %v2419, %v2405
        %v2423 = vsel %vm522, %v2420, %v2407
        %v2424 = vsel %vm522, %v2421, %v2409
        %v2426 = vsel %vm529, %v2422, 0
        %v2429 = vsel %vm529, %v2423, 0
        %v2432 = vsel %vm529, %v2424, 0
        %2434 = vmatpush.msra.mxu0 0.0
        %2435 = vmatpush.msra.mxu0 0.0
        %2436 = vmatpush.msra.mxu0 0.0
        %2437 = vmatpush.msra.mxu0 0.0
        %2438 = vmatpush.msra.mxu0 0.0
        %2439 = vmatpush.msra.mxu0 0.0
        %2440 = vmatpush.msra.mxu0 0.0
        %2441 = vmatpush.msra.mxu0 0.0
        %2442 = vmatpush.msra.mxu0 0.0
        %2443 = vmatpush.msra.mxu0 0.0
        %2444 = vmatpush.msra.mxu0 0.0
        %2445 = vmatpush.msra.mxu0 0.0
        %2446 = vmatpush.msra.mxu0 %v541
        %2447 = vmatpush.msra.mxu0 %v336
        %2448 = vmatpush.msra.mxu0 %v335
        %2449 = vmatpush.msra.mxu0 %v334
        %2450 = vmatmul.f32.gmra.mxu0 %v2426
        %v2451 = vpop.f32.mrf.mxu0
        %v2452 = vadd.f32 %v527, %v2451
        %2453 = vmatmul.f32.gmra.mxu0 %v2429
        %v2454 = vpop.f32.mrf.mxu0
        %v2455 = vadd.f32 %v527, %v2454
        %2456 = vmatmul.f32.gmra.mxu0 %v2432
        %v2457 = vpop.f32.mrf.mxu0
        %v2458 = vadd.f32 %v527, %v2457
        %2459 = vdwg.mxu0
        %2460 = vrot.lane.b32.xlu0 %v330, 111
        %v2461 = vpop.permute.xlu0 %2460
        %2462 = vrot.lane.b32.xlu0 %v331, 111
        %v2463 = vpop.permute.xlu0 %2462
        %2464 = vrot.lane.b32.xlu0 %v332, 111
        %v2465 = vpop.permute.xlu0 %2464
        %2469 = vrot.lane.b32.xlu0 %v445, 116
        %v2470 = vpop.permute.xlu0 %2469
        %2471 = vrot.lane.b32.xlu0 %v447, 116
        %v2472 = vpop.permute.xlu0 %2471
        %2473 = vrot.lane.b32.xlu0 %v449, 116
        %v2474 = vpop.permute.xlu0 %2473
        %2478 = vrot.lane.b32.xlu0 %v462, 121
        %v2479 = vpop.permute.xlu0 %2478
        %2480 = vrot.lane.b32.xlu0 %v464, 121
        %v2481 = vpop.permute.xlu0 %2480
        %2482 = vrot.lane.b32.xlu0 %v466, 121
        %v2483 = vpop.permute.xlu0 %2482
        %2487 = vrot.lane.b32.xlu0 %v479, 126
        %v2488 = vpop.permute.xlu0 %2487
        %2489 = vrot.lane.b32.xlu0 %v481, 126
        %v2490 = vpop.permute.xlu0 %2489
        %2491 = vrot.lane.b32.xlu0 %v483, 126
        %v2492 = vpop.permute.xlu0 %2491
        %2496 = vrot.lane.b32.xlu0 %v496, 3
        %v2497 = vpop.permute.xlu0 %2496
        %2498 = vrot.lane.b32.xlu0 %v498, 3
        %v2499 = vpop.permute.xlu0 %2498
        %2500 = vrot.lane.b32.xlu0 %v500, 3
        %v2501 = vpop.permute.xlu0 %2500
        %v2505 = vsel %vm510, %v2461, %v2470
        %v2506 = vsel %vm510, %v2463, %v2472
        %v2507 = vsel %vm510, %v2465, %v2474
        %v2508 = vsel %vm514, %v2505, %v2479
        %v2509 = vsel %vm514, %v2506, %v2481
        %v2510 = vsel %vm514, %v2507, %v2483
        %v2511 = vsel %vm518, %v2508, %v2488
        %v2512 = vsel %vm518, %v2509, %v2490
        %v2513 = vsel %vm518, %v2510, %v2492
        %v2514 = vsel %vm522, %v2511, %v2497
        %v2515 = vsel %vm522, %v2512, %v2499
        %v2516 = vsel %vm522, %v2513, %v2501
        %v2518 = vsel %vm529, %v2514, 0
        %v2521 = vsel %vm529, %v2515, 0
        %v2524 = vsel %vm529, %v2516, 0
        %2526 = vmatpush.msra.mxu0 0.0
        %2527 = vmatpush.msra.mxu0 0.0
        %2528 = vmatpush.msra.mxu0 0.0
        %2529 = vmatpush.msra.mxu0 0.0
        %2530 = vmatpush.msra.mxu0 0.0
        %2531 = vmatpush.msra.mxu0 0.0
        %2532 = vmatpush.msra.mxu0 0.0
        %2533 = vmatpush.msra.mxu0 0.0
        %2534 = vmatpush.msra.mxu0 0.0
        %2535 = vmatpush.msra.mxu0 0.0
        %2536 = vmatpush.msra.mxu0 0.0
        %2537 = vmatpush.msra.mxu0 0.0
        %2538 = vmatpush.msra.mxu0 %v541
        %2539 = vmatpush.msra.mxu0 %v336
        %2540 = vmatpush.msra.mxu0 %v335
        %2541 = vmatpush.msra.mxu0 %v334
        %2542 = vmatmul.f32.gmra.mxu0 %v2518
        %v2543 = vpop.f32.mrf.mxu0
        %v2544 = vadd.f32 %v527, %v2543
        %2545 = vmatmul.f32.gmra.mxu0 %v2521
        %v2546 = vpop.f32.mrf.mxu0
        %v2547 = vadd.f32 %v527, %v2546
        %2548 = vmatmul.f32.gmra.mxu0 %v2524
        %v2549 = vpop.f32.mrf.mxu0
        %v2550 = vadd.f32 %v527, %v2549
        %2551 = vdwg.mxu0
        %v2552 = vmax.f32 %v2452, %v2544
        %v2553 = vmax.f32 %v2455, %v2547
        %v2554 = vmax.f32 %v2458, %v2550
        %2555 = vmatpush.msra.mxu0 0.0
        %2556 = vmatpush.msra.mxu0 0.0
        %2557 = vmatpush.msra.mxu0 0.0
        %2558 = vmatpush.msra.mxu0 0.0
        %2559 = vmatpush.msra.mxu0 0.0
        %2560 = vmatpush.msra.mxu0 0.0
        %2561 = vmatpush.msra.mxu0 0.0
        %2562 = vmatpush.msra.mxu0 0.0
        %2563 = vmatpush.msra.mxu0 0.0
        %2564 = vmatpush.msra.mxu0 0.0
        %2565 = vmatpush.msra.mxu0 0.0
        %2566 = vmatpush.msra.mxu0 0.0
        %2567 = vmatpush.msra.mxu0 0.0
        %2568 = vmatpush.msra.mxu0 %v2554
        %2569 = vmatpush.msra.mxu0 %v2553
        %2570 = vmatpush.msra.mxu0 %v2552
        %2571 = vmatmul.f32.gmra.mxu0 %v666
        %v2572 = vpop.f32.mrf.mxu0
        %v2573 = vadd.f32 0.0, %v2572
        %2574 = vmatmul.f32.gmra.mxu0 %v669
        %v2575 = vpop.f32.mrf.mxu0
        %v2576 = vadd.f32 0.0, %v2575
        %2577 = vdwg.mxu0
        %2578 = vmatpush.msra.mxu0 0.0
        %2579 = vmatpush.msra.mxu0 0.0
        %2580 = vmatpush.msra.mxu0 0.0
        %2581 = vmatpush.msra.mxu0 0.0
        %2582 = vmatpush.msra.mxu0 0.0
        %2583 = vmatpush.msra.mxu0 0.0
        %2584 = vmatpush.msra.mxu0 0.0
        %2585 = vmatpush.msra.mxu0 0.0
        %2586 = vmatpush.msra.mxu0 0.0
        %2587 = vmatpush.msra.mxu0 0.0
        %2588 = vmatpush.msra.mxu0 0.0
        %2589 = vmatpush.msra.mxu0 0.0
        %2590 = vmatpush.msra.mxu0 0.0
        %2591 = vmatpush.msra.mxu0 %v2554
        %2592 = vmatpush.msra.mxu0 %v2553
        %2593 = vmatpush.msra.mxu0 %v2552
        %2594 = vmatmul.f32.gmra.mxu0 %v695
        %v2595 = vpop.f32.mrf.mxu0
        %v2596 = vadd.f32 0.0, %v2595
        %2597 = vmatmul.f32.gmra.mxu0 %v698
        %v2598 = vpop.f32.mrf.mxu0
        %v2599 = vadd.f32 0.0, %v2598
        %2600 = vdwg.mxu0
        %v2601 = vmax.f32 %v2573, %v2596
        %v2602 = vmax.f32 %v2576, %v2599
        %v2603 = vmax.f32 %v2601, 0.0
        %v2604 = vmax.f32 %v2602, 0.0
        %2605 = vrot.lane.b32.xlu0 %v330, 110
        %v2606 = vpop.permute.xlu0 %2605
        %2607 = vrot.lane.b32.xlu0 %v331, 110
        %v2608 = vpop.permute.xlu0 %2607
        %2609 = vrot.lane.b32.xlu0 %v332, 110
        %v2610 = vpop.permute.xlu0 %2609
        %2614 = vrot.lane.b32.xlu0 %v445, 115
        %v2615 = vpop.permute.xlu0 %2614
        %2616 = vrot.lane.b32.xlu0 %v447, 115
        %v2617 = vpop.permute.xlu0 %2616
        %2618 = vrot.lane.b32.xlu0 %v449, 115
        %v2619 = vpop.permute.xlu0 %2618
        %2623 = vrot.lane.b32.xlu0 %v462, 120
        %v2624 = vpop.permute.xlu0 %2623
        %2625 = vrot.lane.b32.xlu0 %v464, 120
        %v2626 = vpop.permute.xlu0 %2625
        %2627 = vrot.lane.b32.xlu0 %v466, 120
        %v2628 = vpop.permute.xlu0 %2627
        %2632 = vrot.lane.b32.xlu0 %v479, 125
        %v2633 = vpop.permute.xlu0 %2632
        %2634 = vrot.lane.b32.xlu0 %v481, 125
        %v2635 = vpop.permute.xlu0 %2634
        %2636 = vrot.lane.b32.xlu0 %v483, 125
        %v2637 = vpop.permute.xlu0 %2636
        %2641 = vrot.lane.b32.xlu0 %v496, 2
        %v2642 = vpop.permute.xlu0 %2641
        %2643 = vrot.lane.b32.xlu0 %v498, 2
        %v2644 = vpop.permute.xlu0 %2643
        %2645 = vrot.lane.b32.xlu0 %v500, 2
        %v2646 = vpop.permute.xlu0 %2645
        %v2650 = vsel %vm510, %v2606, %v2615
        %v2651 = vsel %vm510, %v2608, %v2617
        %v2652 = vsel %vm510, %v2610, %v2619
        %v2653 = vsel %vm514, %v2650, %v2624
        %v2654 = vsel %vm514, %v2651, %v2626
        %v2655 = vsel %vm514, %v2652, %v2628
        %v2656 = vsel %vm518, %v2653, %v2633
        %v2657 = vsel %vm518, %v2654, %v2635
        %v2658 = vsel %vm518, %v2655, %v2637
        %v2659 = vsel %vm522, %v2656, %v2642
        %v2660 = vsel %vm522, %v2657, %v2644
        %v2661 = vsel %vm522, %v2658, %v2646
        %v2663 = vsel %vm529, %v2659, 0
        %v2666 = vsel %vm529, %v2660, 0
        %v2669 = vsel %vm529, %v2661, 0
        %2671 = vmatpush.msra.mxu0 0.0
        %2672 = vmatpush.msra.mxu0 0.0
        %2673 = vmatpush.msra.mxu0 0.0
        %2674 = vmatpush.msra.mxu0 0.0
        %2675 = vmatpush.msra.mxu0 0.0
        %2676 = vmatpush.msra.mxu0 0.0
        %2677 = vmatpush.msra.mxu0 0.0
        %2678 = vmatpush.msra.mxu0 0.0
        %2679 = vmatpush.msra.mxu0 0.0
        %2680 = vmatpush.msra.mxu0 0.0
        %2681 = vmatpush.msra.mxu0 0.0
        %2682 = vmatpush.msra.mxu0 0.0
        %2683 = vmatpush.msra.mxu0 %v541
        %2684 = vmatpush.msra.mxu0 %v336
        %2685 = vmatpush.msra.mxu0 %v335
        %2686 = vmatpush.msra.mxu0 %v334
        %2687 = vmatmul.f32.gmra.mxu0 %v2663
        %v2688 = vpop.f32.mrf.mxu0
        %v2689 = vadd.f32 %v527, %v2688
        %2690 = vmatmul.f32.gmra.mxu0 %v2666
        %v2691 = vpop.f32.mrf.mxu0
        %v2692 = vadd.f32 %v527, %v2691
        %2693 = vmatmul.f32.gmra.mxu0 %v2669
        %v2694 = vpop.f32.mrf.mxu0
        %v2695 = vadd.f32 %v527, %v2694
        %2696 = vdwg.mxu0
        %2697 = vrot.lane.b32.xlu0 %v330, 109
        %v2698 = vpop.permute.xlu0 %2697
        %2699 = vrot.lane.b32.xlu0 %v331, 109
        %v2700 = vpop.permute.xlu0 %2699
        %2701 = vrot.lane.b32.xlu0 %v332, 109
        %v2702 = vpop.permute.xlu0 %2701
        %2706 = vrot.lane.b32.xlu0 %v445, 114
        %v2707 = vpop.permute.xlu0 %2706
        %2708 = vrot.lane.b32.xlu0 %v447, 114
        %v2709 = vpop.permute.xlu0 %2708
        %2710 = vrot.lane.b32.xlu0 %v449, 114
        %v2711 = vpop.permute.xlu0 %2710
        %2715 = vrot.lane.b32.xlu0 %v462, 119
        %v2716 = vpop.permute.xlu0 %2715
        %2717 = vrot.lane.b32.xlu0 %v464, 119
        %v2718 = vpop.permute.xlu0 %2717
        %2719 = vrot.lane.b32.xlu0 %v466, 119
        %v2720 = vpop.permute.xlu0 %2719
        %2724 = vrot.lane.b32.xlu0 %v479, 124
        %v2725 = vpop.permute.xlu0 %2724
        %2726 = vrot.lane.b32.xlu0 %v481, 124
        %v2727 = vpop.permute.xlu0 %2726
        %2728 = vrot.lane.b32.xlu0 %v483, 124
        %v2729 = vpop.permute.xlu0 %2728
        %2733 = vrot.lane.b32.xlu0 %v496, 1
        %v2734 = vpop.permute.xlu0 %2733
        %2735 = vrot.lane.b32.xlu0 %v498, 1
        %v2736 = vpop.permute.xlu0 %2735
        %2737 = vrot.lane.b32.xlu0 %v500, 1
        %v2738 = vpop.permute.xlu0 %2737
        %v2742 = vsel %vm510, %v2698, %v2707
        %v2743 = vsel %vm510, %v2700, %v2709
        %v2744 = vsel %vm510, %v2702, %v2711
        %v2745 = vsel %vm514, %v2742, %v2716
        %v2746 = vsel %vm514, %v2743, %v2718
        %v2747 = vsel %vm514, %v2744, %v2720
        %v2748 = vsel %vm518, %v2745, %v2725
        %v2749 = vsel %vm518, %v2746, %v2727
        %v2750 = vsel %vm518, %v2747, %v2729
        %v2751 = vsel %vm522, %v2748, %v2734
        %v2752 = vsel %vm522, %v2749, %v2736
        %v2753 = vsel %vm522, %v2750, %v2738
        %v2755 = vsel %vm529, %v2751, 0
        %v2758 = vsel %vm529, %v2752, 0
        %v2761 = vsel %vm529, %v2753, 0
        %2763 = vmatpush.msra.mxu0 0.0
        %2764 = vmatpush.msra.mxu0 0.0
        %2765 = vmatpush.msra.mxu0 0.0
        %2766 = vmatpush.msra.mxu0 0.0
        %2767 = vmatpush.msra.mxu0 0.0
        %2768 = vmatpush.msra.mxu0 0.0
        %2769 = vmatpush.msra.mxu0 0.0
        %2770 = vmatpush.msra.mxu0 0.0
        %2771 = vmatpush.msra.mxu0 0.0
        %2772 = vmatpush.msra.mxu0 0.0
        %2773 = vmatpush.msra.mxu0 0.0
        %2774 = vmatpush.msra.mxu0 0.0
        %2775 = vmatpush.msra.mxu0 %v541
        %2776 = vmatpush.msra.mxu0 %v336
        %2777 = vmatpush.msra.mxu0 %v335
        %2778 = vmatpush.msra.mxu0 %v334
        %2779 = vmatmul.f32.gmra.mxu0 %v2755
        %v2780 = vpop.f32.mrf.mxu0
        %v2781 = vadd.f32 %v527, %v2780
        %2782 = vmatmul.f32.gmra.mxu0 %v2758
        %v2783 = vpop.f32.mrf.mxu0
        %v2784 = vadd.f32 %v527, %v2783
        %2785 = vmatmul.f32.gmra.mxu0 %v2761
        %v2786 = vpop.f32.mrf.mxu0
        %v2787 = vadd.f32 %v527, %v2786
        %2788 = vdwg.mxu0
        %v2789 = vmax.f32 %v2689, %v2781
        %v2790 = vmax.f32 %v2692, %v2784
        %v2791 = vmax.f32 %v2695, %v2787
        %2792 = vmatpush.msra.mxu0 0.0
        %2793 = vmatpush.msra.mxu0 0.0
        %2794 = vmatpush.msra.mxu0 0.0
        %2795 = vmatpush.msra.mxu0 0.0
        %2796 = vmatpush.msra.mxu0 0.0
        %2797 = vmatpush.msra.mxu0 0.0
        %2798 = vmatpush.msra.mxu0 0.0
        %2799 = vmatpush.msra.mxu0 0.0
        %2800 = vmatpush.msra.mxu0 0.0
        %2801 = vmatpush.msra.mxu0 0.0
        %2802 = vmatpush.msra.mxu0 0.0
        %2803 = vmatpush.msra.mxu0 0.0
        %2804 = vmatpush.msra.mxu0 0.0
        %2805 = vmatpush.msra.mxu0 %v2791
        %2806 = vmatpush.msra.mxu0 %v2790
        %2807 = vmatpush.msra.mxu0 %v2789
        %2808 = vmatmul.f32.gmra.mxu0 %v666
        %v2809 = vpop.f32.mrf.mxu0
        %v2810 = vadd.f32 0.0, %v2809
        %2811 = vmatmul.f32.gmra.mxu0 %v669
        %v2812 = vpop.f32.mrf.mxu0
        %v2813 = vadd.f32 0.0, %v2812
        %2814 = vdwg.mxu0
        %2815 = vmatpush.msra.mxu0 0.0
        %2816 = vmatpush.msra.mxu0 0.0
        %2817 = vmatpush.msra.mxu0 0.0
        %2818 = vmatpush.msra.mxu0 0.0
        %2819 = vmatpush.msra.mxu0 0.0
        %2820 = vmatpush.msra.mxu0 0.0
        %2821 = vmatpush.msra.mxu0 0.0
        %2822 = vmatpush.msra.mxu0 0.0
        %2823 = vmatpush.msra.mxu0 0.0
        %2824 = vmatpush.msra.mxu0 0.0
        %2825 = vmatpush.msra.mxu0 0.0
        %2826 = vmatpush.msra.mxu0 0.0
        %2827 = vmatpush.msra.mxu0 0.0
        %2828 = vmatpush.msra.mxu0 %v2791
        %2829 = vmatpush.msra.mxu0 %v2790
        %2830 = vmatpush.msra.mxu0 %v2789
        %2831 = vmatmul.f32.gmra.mxu0 %v695
        %v2832 = vpop.f32.mrf.mxu0
        %v2833 = vadd.f32 0.0, %v2832
        %2834 = vmatmul.f32.gmra.mxu0 %v698
        %v2835 = vpop.f32.mrf.mxu0
        %v2836 = vadd.f32 0.0, %v2835
        %2837 = vdwg.mxu0
        %v2838 = vmax.f32 %v2810, %v2833
        %v2839 = vmax.f32 %v2813, %v2836
        %v2840 = vmax.f32 %v2838, 0.0
        %v2841 = vmax.f32 %v2839, 0.0
        %2842 = vrot.lane.b32.xlu0 %v330, 108
        %v2843 = vpop.permute.xlu0 %2842
        %2844 = vrot.lane.b32.xlu0 %v331, 108
        %v2845 = vpop.permute.xlu0 %2844
        %2846 = vrot.lane.b32.xlu0 %v332, 108
        %v2847 = vpop.permute.xlu0 %2846
        %2851 = vrot.lane.b32.xlu0 %v445, 113
        %v2852 = vpop.permute.xlu0 %2851
        %2853 = vrot.lane.b32.xlu0 %v447, 113
        %v2854 = vpop.permute.xlu0 %2853
        %2855 = vrot.lane.b32.xlu0 %v449, 113
        %v2856 = vpop.permute.xlu0 %2855
        %2860 = vrot.lane.b32.xlu0 %v462, 118
        %v2861 = vpop.permute.xlu0 %2860
        %2862 = vrot.lane.b32.xlu0 %v464, 118
        %v2863 = vpop.permute.xlu0 %2862
        %2864 = vrot.lane.b32.xlu0 %v466, 118
        %v2865 = vpop.permute.xlu0 %2864
        %2869 = vrot.lane.b32.xlu0 %v479, 123
        %v2870 = vpop.permute.xlu0 %2869
        %2871 = vrot.lane.b32.xlu0 %v481, 123
        %v2872 = vpop.permute.xlu0 %2871
        %2873 = vrot.lane.b32.xlu0 %v483, 123
        %v2874 = vpop.permute.xlu0 %2873
        %v2881 = vsel %vm510, %v2843, %v2852
        %v2882 = vsel %vm510, %v2845, %v2854
        %v2883 = vsel %vm510, %v2847, %v2856
        %v2884 = vsel %vm514, %v2881, %v2861
        %v2885 = vsel %vm514, %v2882, %v2863
        %v2886 = vsel %vm514, %v2883, %v2865
        %v2887 = vsel %vm518, %v2884, %v2870
        %v2888 = vsel %vm518, %v2885, %v2872
        %v2889 = vsel %vm518, %v2886, %v2874
        %v2890 = vsel %vm522, %v2887, %v496
        %v2891 = vsel %vm522, %v2888, %v498
        %v2892 = vsel %vm522, %v2889, %v500
        %v2894 = vsel %vm529, %v2890, 0
        %v2897 = vsel %vm529, %v2891, 0
        %v2900 = vsel %vm529, %v2892, 0
        %2902 = vmatpush.msra.mxu0 0.0
        %2903 = vmatpush.msra.mxu0 0.0
        %2904 = vmatpush.msra.mxu0 0.0
        %2905 = vmatpush.msra.mxu0 0.0
        %2906 = vmatpush.msra.mxu0 0.0
        %2907 = vmatpush.msra.mxu0 0.0
        %2908 = vmatpush.msra.mxu0 0.0
        %2909 = vmatpush.msra.mxu0 0.0
        %2910 = vmatpush.msra.mxu0 0.0
        %2911 = vmatpush.msra.mxu0 0.0
        %2912 = vmatpush.msra.mxu0 0.0
        %2913 = vmatpush.msra.mxu0 0.0
        %2914 = vmatpush.msra.mxu0 %v541
        %2915 = vmatpush.msra.mxu0 %v336
        %2916 = vmatpush.msra.mxu0 %v335
        %2917 = vmatpush.msra.mxu0 %v334
        %2918 = vmatmul.f32.gmra.mxu0 %v2894
        %v2919 = vpop.f32.mrf.mxu0
        %v2920 = vadd.f32 %v527, %v2919
        %2921 = vmatmul.f32.gmra.mxu0 %v2897
        %v2922 = vpop.f32.mrf.mxu0
        %v2923 = vadd.f32 %v527, %v2922
        %2924 = vmatmul.f32.gmra.mxu0 %v2900
        %v2925 = vpop.f32.mrf.mxu0
        %v2926 = vadd.f32 %v527, %v2925
        %2927 = vdwg.mxu0
        %2928 = vrot.lane.b32.xlu0 %v330, 107
        %v2929 = vpop.permute.xlu0 %2928
        %2930 = vrot.lane.b32.xlu0 %v331, 107
        %v2931 = vpop.permute.xlu0 %2930
        %2932 = vrot.lane.b32.xlu0 %v332, 107
        %v2933 = vpop.permute.xlu0 %2932
        %2937 = vrot.lane.b32.xlu0 %v445, 112
        %v2938 = vpop.permute.xlu0 %2937
        %2939 = vrot.lane.b32.xlu0 %v447, 112
        %v2940 = vpop.permute.xlu0 %2939
        %2941 = vrot.lane.b32.xlu0 %v449, 112
        %v2942 = vpop.permute.xlu0 %2941
        %2946 = vrot.lane.b32.xlu0 %v462, 117
        %v2947 = vpop.permute.xlu0 %2946
        %2948 = vrot.lane.b32.xlu0 %v464, 117
        %v2949 = vpop.permute.xlu0 %2948
        %2950 = vrot.lane.b32.xlu0 %v466, 117
        %v2951 = vpop.permute.xlu0 %2950
        %2955 = vrot.lane.b32.xlu0 %v479, 122
        %v2956 = vpop.permute.xlu0 %2955
        %2957 = vrot.lane.b32.xlu0 %v481, 122
        %v2958 = vpop.permute.xlu0 %2957
        %2959 = vrot.lane.b32.xlu0 %v483, 122
        %v2960 = vpop.permute.xlu0 %2959
        %2964 = vrot.lane.b32.xlu0 %v496, 127
        %v2965 = vpop.permute.xlu0 %2964
        %2966 = vrot.lane.b32.xlu0 %v498, 127
        %v2967 = vpop.permute.xlu0 %2966
        %2968 = vrot.lane.b32.xlu0 %v500, 127
        %v2969 = vpop.permute.xlu0 %2968
        %v2973 = vsel %vm510, %v2929, %v2938
        %v2974 = vsel %vm510, %v2931, %v2940
        %v2975 = vsel %vm510, %v2933, %v2942
        %v2976 = vsel %vm514, %v2973, %v2947
        %v2977 = vsel %vm514, %v2974, %v2949
        %v2978 = vsel %vm514, %v2975, %v2951
        %v2979 = vsel %vm518, %v2976, %v2956
        %v2980 = vsel %vm518, %v2977, %v2958
        %v2981 = vsel %vm518, %v2978, %v2960
        %v2982 = vsel %vm522, %v2979, %v2965
        %v2983 = vsel %vm522, %v2980, %v2967
        %v2984 = vsel %vm522, %v2981, %v2969
        %v2986 = vsel %vm529, %v2982, 0
        %v2989 = vsel %vm529, %v2983, 0
        %v2992 = vsel %vm529, %v2984, 0
        %2994 = vmatpush.msra.mxu0 0.0
        %2995 = vmatpush.msra.mxu0 0.0
        %2996 = vmatpush.msra.mxu0 0.0
        %2997 = vmatpush.msra.mxu0 0.0
        %2998 = vmatpush.msra.mxu0 0.0
        %2999 = vmatpush.msra.mxu0 0.0
        %3000 = vmatpush.msra.mxu0 0.0
        %3001 = vmatpush.msra.mxu0 0.0
        %3002 = vmatpush.msra.mxu0 0.0
        %3003 = vmatpush.msra.mxu0 0.0
        %3004 = vmatpush.msra.mxu0 0.0
        %3005 = vmatpush.msra.mxu0 0.0
        %3006 = vmatpush.msra.mxu0 %v541
        %3007 = vmatpush.msra.mxu0 %v336
        %3008 = vmatpush.msra.mxu0 %v335
        %3009 = vmatpush.msra.mxu0 %v334
        %3010 = vmatmul.f32.gmra.mxu0 %v2986
        %v3011 = vpop.f32.mrf.mxu0
        %v3012 = vadd.f32 %v527, %v3011
        %3013 = vmatmul.f32.gmra.mxu0 %v2989
        %v3014 = vpop.f32.mrf.mxu0
        %v3015 = vadd.f32 %v527, %v3014
        %3016 = vmatmul.f32.gmra.mxu0 %v2992
        %v3017 = vpop.f32.mrf.mxu0
        %v3018 = vadd.f32 %v527, %v3017
        %3019 = vdwg.mxu0
        %v3020 = vmax.f32 %v2920, %v3012
        %v3021 = vmax.f32 %v2923, %v3015
        %v3022 = vmax.f32 %v2926, %v3018
        %3023 = vmatpush.msra.mxu0 0.0
        %3024 = vmatpush.msra.mxu0 0.0
        %3025 = vmatpush.msra.mxu0 0.0
        %3026 = vmatpush.msra.mxu0 0.0
        %3027 = vmatpush.msra.mxu0 0.0
        %3028 = vmatpush.msra.mxu0 0.0
        %3029 = vmatpush.msra.mxu0 0.0
        %3030 = vmatpush.msra.mxu0 0.0
        %3031 = vmatpush.msra.mxu0 0.0
        %3032 = vmatpush.msra.mxu0 0.0
        %3033 = vmatpush.msra.mxu0 0.0
        %3034 = vmatpush.msra.mxu0 0.0
        %3035 = vmatpush.msra.mxu0 0.0
        %3036 = vmatpush.msra.mxu0 %v3022
        %3037 = vmatpush.msra.mxu0 %v3021
        %3038 = vmatpush.msra.mxu0 %v3020
        %3039 = vmatmul.f32.gmra.mxu0 %v666
        %v3040 = vpop.f32.mrf.mxu0
        %v3041 = vadd.f32 0.0, %v3040
        %3042 = vmatmul.f32.gmra.mxu0 %v669
        %v3043 = vpop.f32.mrf.mxu0
        %v3044 = vadd.f32 0.0, %v3043
        %3045 = vdwg.mxu0
        %3046 = vmatpush.msra.mxu0 0.0
        %3047 = vmatpush.msra.mxu0 0.0
        %3048 = vmatpush.msra.mxu0 0.0
        %3049 = vmatpush.msra.mxu0 0.0
        %3050 = vmatpush.msra.mxu0 0.0
        %3051 = vmatpush.msra.mxu0 0.0
        %3052 = vmatpush.msra.mxu0 0.0
        %3053 = vmatpush.msra.mxu0 0.0
        %3054 = vmatpush.msra.mxu0 0.0
        %3055 = vmatpush.msra.mxu0 0.0
        %3056 = vmatpush.msra.mxu0 0.0
        %3057 = vmatpush.msra.mxu0 0.0
        %3058 = vmatpush.msra.mxu0 0.0
        %3059 = vmatpush.msra.mxu0 %v3022
        %3060 = vmatpush.msra.mxu0 %v3021
        %3061 = vmatpush.msra.mxu0 %v3020
        %3062 = vmatmul.f32.gmra.mxu0 %v695
        %v3063 = vpop.f32.mrf.mxu0
        %v3064 = vadd.f32 0.0, %v3063
        %3065 = vmatmul.f32.gmra.mxu0 %v698
        %v3066 = vpop.f32.mrf.mxu0
        %v3067 = vadd.f32 0.0, %v3066
        %3068 = vdwg.mxu0
        %v3069 = vmax.f32 %v3041, %v3064
        %v3070 = vmax.f32 %v3044, %v3067
        %v3071 = vmax.f32 %v3069, 0.0
        %v3072 = vmax.f32 %v3070, 0.0
        %3073 = vrot.lane.b32.xlu0 %v330, 106
        %v3074 = vpop.permute.xlu0 %3073
        %3075 = vrot.lane.b32.xlu0 %v331, 106
        %v3076 = vpop.permute.xlu0 %3075
        %3077 = vrot.lane.b32.xlu0 %v332, 106
        %v3078 = vpop.permute.xlu0 %3077
        %3082 = vrot.lane.b32.xlu0 %v445, 111
        %v3083 = vpop.permute.xlu0 %3082
        %3084 = vrot.lane.b32.xlu0 %v447, 111
        %v3085 = vpop.permute.xlu0 %3084
        %3086 = vrot.lane.b32.xlu0 %v449, 111
        %v3087 = vpop.permute.xlu0 %3086
        %3091 = vrot.lane.b32.xlu0 %v462, 116
        %v3092 = vpop.permute.xlu0 %3091
        %3093 = vrot.lane.b32.xlu0 %v464, 116
        %v3094 = vpop.permute.xlu0 %3093
        %3095 = vrot.lane.b32.xlu0 %v466, 116
        %v3096 = vpop.permute.xlu0 %3095
        %3100 = vrot.lane.b32.xlu0 %v479, 121
        %v3101 = vpop.permute.xlu0 %3100
        %3102 = vrot.lane.b32.xlu0 %v481, 121
        %v3103 = vpop.permute.xlu0 %3102
        %3104 = vrot.lane.b32.xlu0 %v483, 121
        %v3105 = vpop.permute.xlu0 %3104
        %3109 = vrot.lane.b32.xlu0 %v496, 126
        %v3110 = vpop.permute.xlu0 %3109
        %3111 = vrot.lane.b32.xlu0 %v498, 126
        %v3112 = vpop.permute.xlu0 %3111
        %3113 = vrot.lane.b32.xlu0 %v500, 126
        %v3114 = vpop.permute.xlu0 %3113
        %v3118 = vsel %vm510, %v3074, %v3083
        %v3119 = vsel %vm510, %v3076, %v3085
        %v3120 = vsel %vm510, %v3078, %v3087
        %v3121 = vsel %vm514, %v3118, %v3092
        %v3122 = vsel %vm514, %v3119, %v3094
        %v3123 = vsel %vm514, %v3120, %v3096
        %v3124 = vsel %vm518, %v3121, %v3101
        %v3125 = vsel %vm518, %v3122, %v3103
        %v3126 = vsel %vm518, %v3123, %v3105
        %v3127 = vsel %vm522, %v3124, %v3110
        %v3128 = vsel %vm522, %v3125, %v3112
        %v3129 = vsel %vm522, %v3126, %v3114
        %v3131 = vsel %vm529, %v3127, 0
        %v3134 = vsel %vm529, %v3128, 0
        %v3137 = vsel %vm529, %v3129, 0
        %3139 = vmatpush.msra.mxu0 0.0
        %3140 = vmatpush.msra.mxu0 0.0
        %3141 = vmatpush.msra.mxu0 0.0
        %3142 = vmatpush.msra.mxu0 0.0
        %3143 = vmatpush.msra.mxu0 0.0
        %3144 = vmatpush.msra.mxu0 0.0
        %3145 = vmatpush.msra.mxu0 0.0
        %3146 = vmatpush.msra.mxu0 0.0
        %3147 = vmatpush.msra.mxu0 0.0
        %3148 = vmatpush.msra.mxu0 0.0
        %3149 = vmatpush.msra.mxu0 0.0
        %3150 = vmatpush.msra.mxu0 0.0
        %3151 = vmatpush.msra.mxu0 %v541
        %3152 = vmatpush.msra.mxu0 %v336
        %3153 = vmatpush.msra.mxu0 %v335
        %3154 = vmatpush.msra.mxu0 %v334
        %3155 = vmatmul.f32.gmra.mxu0 %v3131
        %v3156 = vpop.f32.mrf.mxu0
        %v3157 = vadd.f32 %v527, %v3156
        %3158 = vmatmul.f32.gmra.mxu0 %v3134
        %v3159 = vpop.f32.mrf.mxu0
        %v3160 = vadd.f32 %v527, %v3159
        %3161 = vmatmul.f32.gmra.mxu0 %v3137
        %v3162 = vpop.f32.mrf.mxu0
        %v3163 = vadd.f32 %v527, %v3162
        %3164 = vdwg.mxu0
        %3165 = vrot.lane.b32.xlu0 %v330, 105
        %v3166 = vpop.permute.xlu0 %3165
        %3167 = vrot.lane.b32.xlu0 %v331, 105
        %v3168 = vpop.permute.xlu0 %3167
        %3169 = vrot.lane.b32.xlu0 %v332, 105
        %v3170 = vpop.permute.xlu0 %3169
        %3174 = vrot.lane.b32.xlu0 %v445, 110
        %v3175 = vpop.permute.xlu0 %3174
        %3176 = vrot.lane.b32.xlu0 %v447, 110
        %v3177 = vpop.permute.xlu0 %3176
        %3178 = vrot.lane.b32.xlu0 %v449, 110
        %v3179 = vpop.permute.xlu0 %3178
        %3183 = vrot.lane.b32.xlu0 %v462, 115
        %v3184 = vpop.permute.xlu0 %3183
        %3185 = vrot.lane.b32.xlu0 %v464, 115
        %v3186 = vpop.permute.xlu0 %3185
        %3187 = vrot.lane.b32.xlu0 %v466, 115
        %v3188 = vpop.permute.xlu0 %3187
        %3192 = vrot.lane.b32.xlu0 %v479, 120
        %v3193 = vpop.permute.xlu0 %3192
        %3194 = vrot.lane.b32.xlu0 %v481, 120
        %v3195 = vpop.permute.xlu0 %3194
        %3196 = vrot.lane.b32.xlu0 %v483, 120
        %v3197 = vpop.permute.xlu0 %3196
        %3201 = vrot.lane.b32.xlu0 %v496, 125
        %v3202 = vpop.permute.xlu0 %3201
        %3203 = vrot.lane.b32.xlu0 %v498, 125
        %v3204 = vpop.permute.xlu0 %3203
        %3205 = vrot.lane.b32.xlu0 %v500, 125
        %v3206 = vpop.permute.xlu0 %3205
        %v3210 = vsel %vm510, %v3166, %v3175
        %v3211 = vsel %vm510, %v3168, %v3177
        %v3212 = vsel %vm510, %v3170, %v3179
        %v3213 = vsel %vm514, %v3210, %v3184
        %v3214 = vsel %vm514, %v3211, %v3186
        %v3215 = vsel %vm514, %v3212, %v3188
        %v3216 = vsel %vm518, %v3213, %v3193
        %v3217 = vsel %vm518, %v3214, %v3195
        %v3218 = vsel %vm518, %v3215, %v3197
        %v3219 = vsel %vm522, %v3216, %v3202
        %v3220 = vsel %vm522, %v3217, %v3204
        %v3221 = vsel %vm522, %v3218, %v3206
        %v3223 = vsel %vm529, %v3219, 0
        %v3226 = vsel %vm529, %v3220, 0
        %v3229 = vsel %vm529, %v3221, 0
        %3231 = vmatpush.msra.mxu0 0.0
        %3232 = vmatpush.msra.mxu0 0.0
        %3233 = vmatpush.msra.mxu0 0.0
        %3234 = vmatpush.msra.mxu0 0.0
        %3235 = vmatpush.msra.mxu0 0.0
        %3236 = vmatpush.msra.mxu0 0.0
        %3237 = vmatpush.msra.mxu0 0.0
        %3238 = vmatpush.msra.mxu0 0.0
        %3239 = vmatpush.msra.mxu0 0.0
        %3240 = vmatpush.msra.mxu0 0.0
        %3241 = vmatpush.msra.mxu0 0.0
        %3242 = vmatpush.msra.mxu0 0.0
        %3243 = vmatpush.msra.mxu0 %v541
        %3244 = vmatpush.msra.mxu0 %v336
        %3245 = vmatpush.msra.mxu0 %v335
        %3246 = vmatpush.msra.mxu0 %v334
        %3247 = vmatmul.f32.gmra.mxu0 %v3223
        %v3248 = vpop.f32.mrf.mxu0
        %v3249 = vadd.f32 %v527, %v3248
        %3250 = vmatmul.f32.gmra.mxu0 %v3226
        %v3251 = vpop.f32.mrf.mxu0
        %v3252 = vadd.f32 %v527, %v3251
        %3253 = vmatmul.f32.gmra.mxu0 %v3229
        %v3254 = vpop.f32.mrf.mxu0
        %v3255 = vadd.f32 %v527, %v3254
        %3256 = vdwg.mxu0
        %v3257 = vmax.f32 %v3157, %v3249
        %v3258 = vmax.f32 %v3160, %v3252
        %v3259 = vmax.f32 %v3163, %v3255
        %3260 = vmatpush.msra.mxu0 0.0
        %3261 = vmatpush.msra.mxu0 0.0
        %3262 = vmatpush.msra.mxu0 0.0
        %3263 = vmatpush.msra.mxu0 0.0
        %3264 = vmatpush.msra.mxu0 0.0
        %3265 = vmatpush.msra.mxu0 0.0
        %3266 = vmatpush.msra.mxu0 0.0
        %3267 = vmatpush.msra.mxu0 0.0
        %3268 = vmatpush.msra.mxu0 0.0
        %3269 = vmatpush.msra.mxu0 0.0
        %3270 = vmatpush.msra.mxu0 0.0
        %3271 = vmatpush.msra.mxu0 0.0
        %3272 = vmatpush.msra.mxu0 0.0
        %3273 = vmatpush.msra.mxu0 %v3259
        %3274 = vmatpush.msra.mxu0 %v3258
        %3275 = vmatpush.msra.mxu0 %v3257
        %3276 = vmatmul.f32.gmra.mxu0 %v666
        %v3277 = vpop.f32.mrf.mxu0
        %v3278 = vadd.f32 0.0, %v3277
        %3279 = vmatmul.f32.gmra.mxu0 %v669
        %v3280 = vpop.f32.mrf.mxu0
        %v3281 = vadd.f32 0.0, %v3280
        %3282 = vdwg.mxu0
        %3283 = vmatpush.msra.mxu0 0.0
        %3284 = vmatpush.msra.mxu0 0.0
        %3285 = vmatpush.msra.mxu0 0.0
        %3286 = vmatpush.msra.mxu0 0.0
        %3287 = vmatpush.msra.mxu0 0.0
        %3288 = vmatpush.msra.mxu0 0.0
        %3289 = vmatpush.msra.mxu0 0.0
        %3290 = vmatpush.msra.mxu0 0.0
        %3291 = vmatpush.msra.mxu0 0.0
        %3292 = vmatpush.msra.mxu0 0.0
        %3293 = vmatpush.msra.mxu0 0.0
        %3294 = vmatpush.msra.mxu0 0.0
        %3295 = vmatpush.msra.mxu0 0.0
        %3296 = vmatpush.msra.mxu0 %v3259
        %3297 = vmatpush.msra.mxu0 %v3258
        %3298 = vmatpush.msra.mxu0 %v3257
        %3299 = vmatmul.f32.gmra.mxu0 %v695
        %v3300 = vpop.f32.mrf.mxu0
        %v3301 = vadd.f32 0.0, %v3300
        %3302 = vmatmul.f32.gmra.mxu0 %v698
        %v3303 = vpop.f32.mrf.mxu0
        %v3304 = vadd.f32 0.0, %v3303
        %3305 = vdwg.mxu0
        %v3306 = vmax.f32 %v3278, %v3301
        %v3307 = vmax.f32 %v3281, %v3304
        %v3308 = vmax.f32 %v3306, 0.0
        %v3309 = vmax.f32 %v3307, 0.0
        %3312 = vrot.lane.b32.xlu0 %v962, 10
        %v3313 = vpop.permute.xlu0 %3312
        %3314 = vrot.lane.b32.xlu0 %v963, 10
        %v3315 = vpop.permute.xlu0 %3314
        %3320 = vrot.lane.b32.xlu0 %v1193, 20
        %v3321 = vpop.permute.xlu0 %3320
        %3322 = vrot.lane.b32.xlu0 %v1194, 20
        %v3323 = vpop.permute.xlu0 %3322
        %3328 = vrot.lane.b32.xlu0 %v1430, 30
        %v3329 = vpop.permute.xlu0 %3328
        %3330 = vrot.lane.b32.xlu0 %v1431, 30
        %v3331 = vpop.permute.xlu0 %3330
        %3336 = vrot.lane.b32.xlu0 %v1667, 40
        %v3337 = vpop.permute.xlu0 %3336
        %3338 = vrot.lane.b32.xlu0 %v1668, 40
        %v3339 = vpop.permute.xlu0 %3338
        %3344 = vrot.lane.b32.xlu0 %v1898, 50
        %v3345 = vpop.permute.xlu0 %3344
        %3346 = vrot.lane.b32.xlu0 %v1899, 50
        %v3347 = vpop.permute.xlu0 %3346
        %3352 = vrot.lane.b32.xlu0 %v2135, 60
        %v3353 = vpop.permute.xlu0 %3352
        %3354 = vrot.lane.b32.xlu0 %v2136, 60
        %v3355 = vpop.permute.xlu0 %3354
        %3360 = vrot.lane.b32.xlu0 %v2366, 70
        %v3361 = vpop.permute.xlu0 %3360
        %3362 = vrot.lane.b32.xlu0 %v2367, 70
        %v3363 = vpop.permute.xlu0 %3362
        %3368 = vrot.lane.b32.xlu0 %v2603, 80
        %v3369 = vpop.permute.xlu0 %3368
        %3370 = vrot.lane.b32.xlu0 %v2604, 80
        %v3371 = vpop.permute.xlu0 %3370
        %3376 = vrot.lane.b32.xlu0 %v2840, 90
        %v3377 = vpop.permute.xlu0 %3376
        %3378 = vrot.lane.b32.xlu0 %v2841, 90
        %v3379 = vpop.permute.xlu0 %3378
        %3384 = vrot.lane.b32.xlu0 %v3071, 100
        %v3385 = vpop.permute.xlu0 %3384
        %3386 = vrot.lane.b32.xlu0 %v3072, 100
        %v3387 = vpop.permute.xlu0 %3386
        %3392 = vrot.lane.b32.xlu0 %v3308, 110
        %v3393 = vpop.permute.xlu0 %3392
        %3394 = vrot.lane.b32.xlu0 %v3309, 110
        %v3395 = vpop.permute.xlu0 %3394
        %v3398 = vsel %vm514, %v725, %v3313
        %v3399 = vsel %vm514, %v726, %v3315
        %v3400 = vsel %vm522, %v3398, %v3321
        %v3401 = vsel %vm522, %v3399, %v3323
        %vm3402 = vcmask 244736
        %v3403 = vsel %vm3402, %v3400, %v3329
        %v3404 = vsel %vm3402, %v3401, %v3331
        %vm3405 = vcmask 326656
        %v3406 = vsel %vm3405, %v3403, %v3337
        %v3407 = vsel %vm3405, %v3404, %v3339
        %vm3408 = vcmask 408576
        %v3409 = vsel %vm3408, %v3406, %v3345
        %v3410 = vsel %vm3408, %v3407, %v3347
        %vm3411 = vcmask 490496
        %v3412 = vsel %vm3411, %v3409, %v3353
        %v3413 = vsel %vm3411, %v3410, %v3355
        %vm3414 = vcmask 572416
        %v3415 = vsel %vm3414, %v3412, %v3361
        %v3416 = vsel %vm3414, %v3413, %v3363
        %vm3417 = vcmask 654336
        %v3418 = vsel %vm3417, %v3415, %v3369
        %v3419 = vsel %vm3417, %v3416, %v3371
        %vm3420 = vcmask 736256
        %v3421 = vsel %vm3420, %v3418, %v3377
        %v3422 = vsel %vm3420, %v3419, %v3379
        %vm3423 = vcmask 818176
        %v3424 = vsel %vm3423, %v3421, %v3385
        %v3425 = vsel %vm3423, %v3422, %v3387
        %vm3426 = vcmask 900096
        %v3427 = vsel %vm3426, %v3424, %v3393
        %v3428 = vsel %vm3426, %v3425, %v3395
        %v3430 = vsel %vm3408, %v3427, 0
        %vm3432 = vcmask 1041408
        %v3434 = vsel %vm3432, %v345, 0
        %3436 = vmatpush.msra.mxu0 0.0
        %3437 = vmatpush.msra.mxu0 0.0
        %3438 = vmatpush.msra.mxu0 0.0
        %3439 = vmatpush.msra.mxu0 0.0
        %3440 = vmatpush.msra.mxu0 0.0
        %3441 = vmatpush.msra.mxu0 0.0
        %3442 = vmatpush.msra.mxu0 0.0
        %3443 = vmatpush.msra.mxu0 0.0
        %3444 = vmatpush.msra.mxu0 0.0
        %3445 = vmatpush.msra.mxu0 %v3434
        %3446 = vmatpush.msra.mxu0 %v344
        %3447 = vmatpush.msra.mxu0 %v343
        %3448 = vmatpush.msra.mxu0 %v342
        %3449 = vmatpush.msra.mxu0 %v341
        %3450 = vmatpush.msra.mxu0 %v340
        %3451 = vmatpush.msra.mxu0 %v339
        %3452 = vmatmul.f32.gmra.mxu0 %v3430
        %v3453 = vpop.f32.mrf.mxu0
        %v3454 = vadd.f32 0.0, %v3453
        %3455 = vdwg.mxu0
        %v3457 = vperm.slane %v371, 0
        %v3459 = vadd.f32 %v3457, %v3454
        %v3461 = vrot.slane %v3427, 1
        %v3462 = vrot.slane %v3428, 1
        %v3463 = vsel %vm442, %v3461, %v3462
        %v3470 = vrot.slane %v345, 2
        %v3471 = vrot.slane %v346, 2
        %v3472 = vsel %vm459, %v3470, %v3471
        %v3473 = vrot.slane %v347, 2
        %v3474 = vsel %vm459, %v3471, %v3473
        %v3475 = vrot.slane %v348, 2
        %v3476 = vsel %vm459, %v3473, %v3475
        %v3477 = vrot.slane %v349, 2
        %v3478 = vsel %vm459, %v3475, %v3477
        %v3479 = vrot.slane %v350, 2
        %v3480 = vsel %vm459, %v3477, %v3479
        %v3481 = vrot.slane %v351, 2
        %v3482 = vsel %vm459, %v3479, %v3481
        %v3489 = vsel %vm3408, %v3463, 0
        %v3491 = vsel %vm3432, %v3481, 0
        %3493 = vmatpush.msra.mxu0 0.0
        %3494 = vmatpush.msra.mxu0 0.0
        %3495 = vmatpush.msra.mxu0 0.0
        %3496 = vmatpush.msra.mxu0 0.0
        %3497 = vmatpush.msra.mxu0 0.0
        %3498 = vmatpush.msra.mxu0 0.0
        %3499 = vmatpush.msra.mxu0 0.0
        %3500 = vmatpush.msra.mxu0 0.0
        %3501 = vmatpush.msra.mxu0 0.0
        %3502 = vmatpush.msra.mxu0 %v3491
        %3503 = vmatpush.msra.mxu0 %v3482
        %3504 = vmatpush.msra.mxu0 %v3480
        %3505 = vmatpush.msra.mxu0 %v3478
        %3506 = vmatpush.msra.mxu0 %v3476
        %3507 = vmatpush.msra.mxu0 %v3474
        %3508 = vmatpush.msra.mxu0 %v3472
        %3509 = vmatmul.f32.gmra.mxu0 %v3489
        %v3510 = vpop.f32.mrf.mxu0
        %v3511 = vadd.f32 0.0, %v3510
        %3512 = vdwg.mxu0
        %v3513 = vadd.f32 %v3459, %v3511
        %v3514 = vrot.slane %v3427, 2
        %v3515 = vrot.slane %v3428, 2
        %v3516 = vsel %vm459, %v3514, %v3515
        %v3523 = vrot.slane %v351, 4
        %v3524 = vrot.slane %v352, 4
        %v3525 = vsel %vm493, %v3523, %v3524
        %v3526 = vrot.slane %v353, 4
        %v3527 = vsel %vm493, %v3524, %v3526
        %v3528 = vrot.slane %v354, 4
        %v3529 = vsel %vm493, %v3526, %v3528
        %v3530 = vrot.slane %v355, 4
        %v3531 = vsel %vm493, %v3528, %v3530
        %v3532 = vrot.slane %v356, 4
        %v3533 = vsel %vm493, %v3530, %v3532
        %v3534 = vrot.slane %v357, 4
        %v3535 = vsel %vm493, %v3532, %v3534
        %v3542 = vsel %vm3408, %v3516, 0
        %v3544 = vsel %vm3432, %v3534, 0
        %3546 = vmatpush.msra.mxu0 0.0
        %3547 = vmatpush.msra.mxu0 0.0
        %3548 = vmatpush.msra.mxu0 0.0
        %3549 = vmatpush.msra.mxu0 0.0
        %3550 = vmatpush.msra.mxu0 0.0
        %3551 = vmatpush.msra.mxu0 0.0
        %3552 = vmatpush.msra.mxu0 0.0
        %3553 = vmatpush.msra.mxu0 0.0
        %3554 = vmatpush.msra.mxu0 0.0
        %3555 = vmatpush.msra.mxu0 %v3544
        %3556 = vmatpush.msra.mxu0 %v3535
        %3557 = vmatpush.msra.mxu0 %v3533
        %3558 = vmatpush.msra.mxu0 %v3531
        %3559 = vmatpush.msra.mxu0 %v3529
        %3560 = vmatpush.msra.mxu0 %v3527
        %3561 = vmatpush.msra.mxu0 %v3525
        %3562 = vmatmul.f32.gmra.mxu0 %v3542
        %v3563 = vpop.f32.mrf.mxu0
        %v3564 = vadd.f32 0.0, %v3563
        %3565 = vdwg.mxu0
        %v3566 = vadd.f32 %v3513, %v3564
        %v3567 = vrot.slane %v3427, 3
        %v3568 = vrot.slane %v3428, 3
        %v3569 = vsel %vm476, %v3567, %v3568
        %v3576 = vrot.slane %v357, 6
        %v3577 = vrot.slane %v358, 6
        %v3578 = vsel %vm3432, %v3576, %v3577
        %v3579 = vrot.slane %v359, 6
        %v3580 = vsel %vm3432, %v3577, %v3579
        %v3581 = vrot.slane %v360, 6
        %v3582 = vsel %vm3432, %v3579, %v3581
        %v3583 = vrot.slane %v361, 6
        %v3584 = vsel %vm3432, %v3581, %v3583
        %v3585 = vrot.slane %v362, 6
        %v3586 = vsel %vm3432, %v3583, %v3585
        %v3587 = vrot.slane %v363, 6
        %v3588 = vsel %vm3432, %v3585, %v3587
        %v3595 = vsel %vm3408, %v3569, 0
        %v3597 = vsel %vm3432, %v3587, 0
        %3599 = vmatpush.msra.mxu0 0.0
        %3600 = vmatpush.msra.mxu0 0.0
        %3601 = vmatpush.msra.mxu0 0.0
        %3602 = vmatpush.msra.mxu0 0.0
        %3603 = vmatpush.msra.mxu0 0.0
        %3604 = vmatpush.msra.mxu0 0.0
        %3605 = vmatpush.msra.mxu0 0.0
        %3606 = vmatpush.msra.mxu0 0.0
        %3607 = vmatpush.msra.mxu0 0.0
        %3608 = vmatpush.msra.mxu0 %v3597
        %3609 = vmatpush.msra.mxu0 %v3588
        %3610 = vmatpush.msra.mxu0 %v3586
        %3611 = vmatpush.msra.mxu0 %v3584
        %3612 = vmatpush.msra.mxu0 %v3582
        %3613 = vmatpush.msra.mxu0 %v3580
        %3614 = vmatpush.msra.mxu0 %v3578
        %3615 = vmatmul.f32.gmra.mxu0 %v3595
        %v3616 = vpop.f32.mrf.mxu0
        %v3617 = vadd.f32 0.0, %v3616
        %3618 = vdwg.mxu0
        %v3619 = vadd.f32 %v3566, %v3617
        %v3620 = vrot.slane %v3427, 4
        %v3621 = vrot.slane %v3428, 4
        %v3622 = vsel %vm493, %v3620, %v3621
        %v3623 = vsel %vm3408, %v3622, 0
        %v3626 = vsel %vm3432, %v370, 0
        %3628 = vmatpush.msra.mxu0 0.0
        %3629 = vmatpush.msra.mxu0 0.0
        %3630 = vmatpush.msra.mxu0 0.0
        %3631 = vmatpush.msra.mxu0 0.0
        %3632 = vmatpush.msra.mxu0 0.0
        %3633 = vmatpush.msra.mxu0 0.0
        %3634 = vmatpush.msra.mxu0 0.0
        %3635 = vmatpush.msra.mxu0 0.0
        %3636 = vmatpush.msra.mxu0 0.0
        %3637 = vmatpush.msra.mxu0 %v3626
        %3638 = vmatpush.msra.mxu0 %v369
        %3639 = vmatpush.msra.mxu0 %v368
        %3640 = vmatpush.msra.mxu0 %v367
        %3641 = vmatpush.msra.mxu0 %v366
        %3642 = vmatpush.msra.mxu0 %v365
        %3643 = vmatpush.msra.mxu0 %v364
        %3644 = vmatmul.f32.gmra.mxu0 %v3623
        %v3645 = vpop.f32.mrf.mxu0
        %v3646 = vadd.f32 0.0, %v3645
        %3647 = vdwg.mxu0
        %v3648 = vadd.f32 %v3619, %v3646
        %3649 = vrot.lane.b32.xlu0 %v3427, 118
        %v3650 = vpop.permute.xlu0 %3649
        %v3651 = vsel %vm3408, %v3650, 0
        %3653 = vmatpush.msra.mxu0 0.0
        %3654 = vmatpush.msra.mxu0 0.0
        %3655 = vmatpush.msra.mxu0 0.0
        %3656 = vmatpush.msra.mxu0 0.0
        %3657 = vmatpush.msra.mxu0 0.0
        %3658 = vmatpush.msra.mxu0 0.0
        %3659 = vmatpush.msra.mxu0 0.0
        %3660 = vmatpush.msra.mxu0 0.0
        %3661 = vmatpush.msra.mxu0 0.0
        %3662 = vmatpush.msra.mxu0 %v3434
        %3663 = vmatpush.msra.mxu0 %v344
        %3664 = vmatpush.msra.mxu0 %v343
        %3665 = vmatpush.msra.mxu0 %v342
        %3666 = vmatpush.msra.mxu0 %v341
        %3667 = vmatpush.msra.mxu0 %v340
        %3668 = vmatpush.msra.mxu0 %v339
        %3669 = vmatmul.f32.gmra.mxu0 %v3651
        %v3670 = vpop.f32.mrf.mxu0
        %v3671 = vadd.f32 0.0, %v3670
        %3672 = vdwg.mxu0
        %v3673 = vadd.f32 %v3457, %v3671
        %3674 = vrot.lane.b32.xlu0 %v3463, 118
        %v3675 = vpop.permute.xlu0 %3674
        %v3676 = vsel %vm3408, %v3675, 0
        %3678 = vmatpush.msra.mxu0 0.0
        %3679 = vmatpush.msra.mxu0 0.0
        %3680 = vmatpush.msra.mxu0 0.0
        %3681 = vmatpush.msra.mxu0 0.0
        %3682 = vmatpush.msra.mxu0 0.0
        %3683 = vmatpush.msra.mxu0 0.0
        %3684 = vmatpush.msra.mxu0 0.0
        %3685 = vmatpush.msra.mxu0 0.0
        %3686 = vmatpush.msra.mxu0 0.0
        %3687 = vmatpush.msra.mxu0 %v3491
        %3688 = vmatpush.msra.mxu0 %v3482
        %3689 = vmatpush.msra.mxu0 %v3480
        %3690 = vmatpush.msra.mxu0 %v3478
        %3691 = vmatpush.msra.mxu0 %v3476
        %3692 = vmatpush.msra.mxu0 %v3474
        %3693 = vmatpush.msra.mxu0 %v3472
        %3694 = vmatmul.f32.gmra.mxu0 %v3676
        %v3695 = vpop.f32.mrf.mxu0
        %v3696 = vadd.f32 0.0, %v3695
        %3697 = vdwg.mxu0
        %v3698 = vadd.f32 %v3673, %v3696
        %3699 = vrot.lane.b32.xlu0 %v3516, 118
        %v3700 = vpop.permute.xlu0 %3699
        %v3701 = vsel %vm3408, %v3700, 0
        %3703 = vmatpush.msra.mxu0 0.0
        %3704 = vmatpush.msra.mxu0 0.0
        %3705 = vmatpush.msra.mxu0 0.0
        %3706 = vmatpush.msra.mxu0 0.0
        %3707 = vmatpush.msra.mxu0 0.0
        %3708 = vmatpush.msra.mxu0 0.0
        %3709 = vmatpush.msra.mxu0 0.0
        %3710 = vmatpush.msra.mxu0 0.0
        %3711 = vmatpush.msra.mxu0 0.0
        %3712 = vmatpush.msra.mxu0 %v3544
        %3713 = vmatpush.msra.mxu0 %v3535
        %3714 = vmatpush.msra.mxu0 %v3533
        %3715 = vmatpush.msra.mxu0 %v3531
        %3716 = vmatpush.msra.mxu0 %v3529
        %3717 = vmatpush.msra.mxu0 %v3527
        %3718 = vmatpush.msra.mxu0 %v3525
        %3719 = vmatmul.f32.gmra.mxu0 %v3701
        %v3720 = vpop.f32.mrf.mxu0
        %v3721 = vadd.f32 0.0, %v3720
        %3722 = vdwg.mxu0
        %v3723 = vadd.f32 %v3698, %v3721
        %3724 = vrot.lane.b32.xlu0 %v3569, 118
        %v3725 = vpop.permute.xlu0 %3724
        %v3726 = vsel %vm3408, %v3725, 0
        %3728 = vmatpush.msra.mxu0 0.0
        %3729 = vmatpush.msra.mxu0 0.0
        %3730 = vmatpush.msra.mxu0 0.0
        %3731 = vmatpush.msra.mxu0 0.0
        %3732 = vmatpush.msra.mxu0 0.0
        %3733 = vmatpush.msra.mxu0 0.0
        %3734 = vmatpush.msra.mxu0 0.0
        %3735 = vmatpush.msra.mxu0 0.0
        %3736 = vmatpush.msra.mxu0 0.0
        %3737 = vmatpush.msra.mxu0 %v3597
        %3738 = vmatpush.msra.mxu0 %v3588
        %3739 = vmatpush.msra.mxu0 %v3586
        %3740 = vmatpush.msra.mxu0 %v3584
        %3741 = vmatpush.msra.mxu0 %v3582
        %3742 = vmatpush.msra.mxu0 %v3580
        %3743 = vmatpush.msra.mxu0 %v3578
        %3744 = vmatmul.f32.gmra.mxu0 %v3726
        %v3745 = vpop.f32.mrf.mxu0
        %v3746 = vadd.f32 0.0, %v3745
        %3747 = vdwg.mxu0
        %v3748 = vadd.f32 %v3723, %v3746
        %3749 = vrot.lane.b32.xlu0 %v3622, 118
        %v3750 = vpop.permute.xlu0 %3749
        %v3751 = vsel %vm3408, %v3750, 0
        %3753 = vmatpush.msra.mxu0 0.0
        %3754 = vmatpush.msra.mxu0 0.0
        %3755 = vmatpush.msra.mxu0 0.0
        %3756 = vmatpush.msra.mxu0 0.0
        %3757 = vmatpush.msra.mxu0 0.0
        %3758 = vmatpush.msra.mxu0 0.0
        %3759 = vmatpush.msra.mxu0 0.0
        %3760 = vmatpush.msra.mxu0 0.0
        %3761 = vmatpush.msra.mxu0 0.0
        %3762 = vmatpush.msra.mxu0 %v3626
        %3763 = vmatpush.msra.mxu0 %v369
        %3764 = vmatpush.msra.mxu0 %v368
        %3765 = vmatpush.msra.mxu0 %v367
        %3766 = vmatpush.msra.mxu0 %v366
        %3767 = vmatpush.msra.mxu0 %v365
        %3768 = vmatpush.msra.mxu0 %v364
        %3769 = vmatmul.f32.gmra.mxu0 %v3751
        %v3770 = vpop.f32.mrf.mxu0
        %v3771 = vadd.f32 0.0, %v3770
        %3772 = vdwg.mxu0
        %v3773 = vadd.f32 %v3748, %v3771
        %v3774 = vmax.f32 %v3648, %v3773
        %vm3775 = vcmask 64512
        %v3776 = vsel %vm3775, %v430, 0
        %3778 = vmatpush.msra.mxu0 0.0
        %3779 = vmatpush.msra.mxu0 0.0
        %3780 = vmatpush.msra.mxu0 0.0
        %3781 = vmatpush.msra.mxu0 0.0
        %3782 = vmatpush.msra.mxu0 0.0
        %3783 = vmatpush.msra.mxu0 0.0
        %3784 = vmatpush.msra.mxu0 0.0
        %3785 = vmatpush.msra.mxu0 0.0
        %3786 = vmatpush.msra.mxu0 0.0
        %3787 = vmatpush.msra.mxu0 0.0
        %3788 = vmatpush.msra.mxu0 0.0
        %3789 = vmatpush.msra.mxu0 0.0
        %3790 = vmatpush.msra.mxu0 0.0
        %3791 = vmatpush.msra.mxu0 0.0
        %3792 = vmatpush.msra.mxu0 0.0
        %3793 = vmatpush.msra.mxu0 %v3774
        %3794 = vmatmul.f32.gmra.mxu0 %v3776
        %v3795 = vpop.f32.mrf.mxu0
        %v3796 = vadd.f32 0.0, %v3795
        %3797 = vdwg.mxu0
        %v3798 = vsel %vm3775, %v436, 0
        %3800 = vmatpush.msra.mxu0 0.0
        %3801 = vmatpush.msra.mxu0 0.0
        %3802 = vmatpush.msra.mxu0 0.0
        %3803 = vmatpush.msra.mxu0 0.0
        %3804 = vmatpush.msra.mxu0 0.0
        %3805 = vmatpush.msra.mxu0 0.0
        %3806 = vmatpush.msra.mxu0 0.0
        %3807 = vmatpush.msra.mxu0 0.0
        %3808 = vmatpush.msra.mxu0 0.0
        %3809 = vmatpush.msra.mxu0 0.0
        %3810 = vmatpush.msra.mxu0 0.0
        %3811 = vmatpush.msra.mxu0 0.0
        %3812 = vmatpush.msra.mxu0 0.0
        %3813 = vmatpush.msra.mxu0 0.0
        %3814 = vmatpush.msra.mxu0 0.0
        %3815 = vmatpush.msra.mxu0 %v3774
        %3816 = vmatmul.f32.gmra.mxu0 %v3798
        %v3817 = vpop.f32.mrf.mxu0
        %v3818 = vadd.f32 0.0, %v3817
        %3819 = vdwg.mxu0
        %v3820 = vmax.f32 %v3796, %v3818
        %v3821 = vmax.f32 %v3820, 0.0
        %3822 = vrot.lane.b32.xlu0 %v3427, 108
        %v3823 = vpop.permute.xlu0 %3822
        %v3824 = vsel %vm3408, %v3823, 0
        %3826 = vmatpush.msra.mxu0 0.0
        %3827 = vmatpush.msra.mxu0 0.0
        %3828 = vmatpush.msra.mxu0 0.0
        %3829 = vmatpush.msra.mxu0 0.0
        %3830 = vmatpush.msra.mxu0 0.0
        %3831 = vmatpush.msra.mxu0 0.0
        %3832 = vmatpush.msra.mxu0 0.0
        %3833 = vmatpush.msra.mxu0 0.0
        %3834 = vmatpush.msra.mxu0 0.0
        %3835 = vmatpush.msra.mxu0 %v3434
        %3836 = vmatpush.msra.mxu0 %v344
        %3837 = vmatpush.msra.mxu0 %v343
        %3838 = vmatpush.msra.mxu0 %v342
        %3839 = vmatpush.msra.mxu0 %v341
        %3840 = vmatpush.msra.mxu0 %v340
        %3841 = vmatpush.msra.mxu0 %v339
        %3842 = vmatmul.f32.gmra.mxu0 %v3824
        %v3843 = vpop.f32.mrf.mxu0
        %v3844 = vadd.f32 0.0, %v3843
        %3845 = vdwg.mxu0
        %v3846 = vadd.f32 %v3457, %v3844
        %3847 = vrot.lane.b32.xlu0 %v3463, 108
        %v3848 = vpop.permute.xlu0 %3847
        %v3849 = vsel %vm3408, %v3848, 0
        %3851 = vmatpush.msra.mxu0 0.0
        %3852 = vmatpush.msra.mxu0 0.0
        %3853 = vmatpush.msra.mxu0 0.0
        %3854 = vmatpush.msra.mxu0 0.0
        %3855 = vmatpush.msra.mxu0 0.0
        %3856 = vmatpush.msra.mxu0 0.0
        %3857 = vmatpush.msra.mxu0 0.0
        %3858 = vmatpush.msra.mxu0 0.0
        %3859 = vmatpush.msra.mxu0 0.0
        %3860 = vmatpush.msra.mxu0 %v3491
        %3861 = vmatpush.msra.mxu0 %v3482
        %3862 = vmatpush.msra.mxu0 %v3480
        %3863 = vmatpush.msra.mxu0 %v3478
        %3864 = vmatpush.msra.mxu0 %v3476
        %3865 = vmatpush.msra.mxu0 %v3474
        %3866 = vmatpush.msra.mxu0 %v3472
        %3867 = vmatmul.f32.gmra.mxu0 %v3849
        %v3868 = vpop.f32.mrf.mxu0
        %v3869 = vadd.f32 0.0, %v3868
        %3870 = vdwg.mxu0
        %v3871 = vadd.f32 %v3846, %v3869
        %3872 = vrot.lane.b32.xlu0 %v3516, 108
        %v3873 = vpop.permute.xlu0 %3872
        %v3874 = vsel %vm3408, %v3873, 0
        %3876 = vmatpush.msra.mxu0 0.0
        %3877 = vmatpush.msra.mxu0 0.0
        %3878 = vmatpush.msra.mxu0 0.0
        %3879 = vmatpush.msra.mxu0 0.0
        %3880 = vmatpush.msra.mxu0 0.0
        %3881 = vmatpush.msra.mxu0 0.0
        %3882 = vmatpush.msra.mxu0 0.0
        %3883 = vmatpush.msra.mxu0 0.0
        %3884 = vmatpush.msra.mxu0 0.0
        %3885 = vmatpush.msra.mxu0 %v3544
        %3886 = vmatpush.msra.mxu0 %v3535
        %3887 = vmatpush.msra.mxu0 %v3533
        %3888 = vmatpush.msra.mxu0 %v3531
        %3889 = vmatpush.msra.mxu0 %v3529
        %3890 = vmatpush.msra.mxu0 %v3527
        %3891 = vmatpush.msra.mxu0 %v3525
        %3892 = vmatmul.f32.gmra.mxu0 %v3874
        %v3893 = vpop.f32.mrf.mxu0
        %v3894 = vadd.f32 0.0, %v3893
        %3895 = vdwg.mxu0
        %v3896 = vadd.f32 %v3871, %v3894
        %3897 = vrot.lane.b32.xlu0 %v3569, 108
        %v3898 = vpop.permute.xlu0 %3897
        %v3899 = vsel %vm3408, %v3898, 0
        %3901 = vmatpush.msra.mxu0 0.0
        %3902 = vmatpush.msra.mxu0 0.0
        %3903 = vmatpush.msra.mxu0 0.0
        %3904 = vmatpush.msra.mxu0 0.0
        %3905 = vmatpush.msra.mxu0 0.0
        %3906 = vmatpush.msra.mxu0 0.0
        %3907 = vmatpush.msra.mxu0 0.0
        %3908 = vmatpush.msra.mxu0 0.0
        %3909 = vmatpush.msra.mxu0 0.0
        %3910 = vmatpush.msra.mxu0 %v3597
        %3911 = vmatpush.msra.mxu0 %v3588
        %3912 = vmatpush.msra.mxu0 %v3586
        %3913 = vmatpush.msra.mxu0 %v3584
        %3914 = vmatpush.msra.mxu0 %v3582
        %3915 = vmatpush.msra.mxu0 %v3580
        %3916 = vmatpush.msra.mxu0 %v3578
        %3917 = vmatmul.f32.gmra.mxu0 %v3899
        %v3918 = vpop.f32.mrf.mxu0
        %v3919 = vadd.f32 0.0, %v3918
        %3920 = vdwg.mxu0
        %v3921 = vadd.f32 %v3896, %v3919
        %3922 = vrot.lane.b32.xlu0 %v3622, 108
        %v3923 = vpop.permute.xlu0 %3922
        %v3924 = vsel %vm3408, %v3923, 0
        %3926 = vmatpush.msra.mxu0 0.0
        %3927 = vmatpush.msra.mxu0 0.0
        %3928 = vmatpush.msra.mxu0 0.0
        %3929 = vmatpush.msra.mxu0 0.0
        %3930 = vmatpush.msra.mxu0 0.0
        %3931 = vmatpush.msra.mxu0 0.0
        %3932 = vmatpush.msra.mxu0 0.0
        %3933 = vmatpush.msra.mxu0 0.0
        %3934 = vmatpush.msra.mxu0 0.0
        %3935 = vmatpush.msra.mxu0 %v3626
        %3936 = vmatpush.msra.mxu0 %v369
        %3937 = vmatpush.msra.mxu0 %v368
        %3938 = vmatpush.msra.mxu0 %v367
        %3939 = vmatpush.msra.mxu0 %v366
        %3940 = vmatpush.msra.mxu0 %v365
        %3941 = vmatpush.msra.mxu0 %v364
        %3942 = vmatmul.f32.gmra.mxu0 %v3924
        %v3943 = vpop.f32.mrf.mxu0
        %v3944 = vadd.f32 0.0, %v3943
        %3945 = vdwg.mxu0
        %v3946 = vadd.f32 %v3921, %v3944
        %3947 = vrot.lane.b32.xlu0 %v3427, 98
        %v3948 = vpop.permute.xlu0 %3947
        %v3949 = vsel %vm3408, %v3948, 0
        %3951 = vmatpush.msra.mxu0 0.0
        %3952 = vmatpush.msra.mxu0 0.0
        %3953 = vmatpush.msra.mxu0 0.0
        %3954 = vmatpush.msra.mxu0 0.0
        %3955 = vmatpush.msra.mxu0 0.0
        %3956 = vmatpush.msra.mxu0 0.0
        %3957 = vmatpush.msra.mxu0 0.0
        %3958 = vmatpush.msra.mxu0 0.0
        %3959 = vmatpush.msra.mxu0 0.0
        %3960 = vmatpush.msra.mxu0 %v3434
        %3961 = vmatpush.msra.mxu0 %v344
        %3962 = vmatpush.msra.mxu0 %v343
        %3963 = vmatpush.msra.mxu0 %v342
        %3964 = vmatpush.msra.mxu0 %v341
        %3965 = vmatpush.msra.mxu0 %v340
        %3966 = vmatpush.msra.mxu0 %v339
        %3967 = vmatmul.f32.gmra.mxu0 %v3949
        %v3968 = vpop.f32.mrf.mxu0
        %v3969 = vadd.f32 0.0, %v3968
        %3970 = vdwg.mxu0
        %v3971 = vadd.f32 %v3457, %v3969
        %3972 = vrot.lane.b32.xlu0 %v3463, 98
        %v3973 = vpop.permute.xlu0 %3972
        %v3974 = vsel %vm3408, %v3973, 0
        %3976 = vmatpush.msra.mxu0 0.0
        %3977 = vmatpush.msra.mxu0 0.0
        %3978 = vmatpush.msra.mxu0 0.0
        %3979 = vmatpush.msra.mxu0 0.0
        %3980 = vmatpush.msra.mxu0 0.0
        %3981 = vmatpush.msra.mxu0 0.0
        %3982 = vmatpush.msra.mxu0 0.0
        %3983 = vmatpush.msra.mxu0 0.0
        %3984 = vmatpush.msra.mxu0 0.0
        %3985 = vmatpush.msra.mxu0 %v3491
        %3986 = vmatpush.msra.mxu0 %v3482
        %3987 = vmatpush.msra.mxu0 %v3480
        %3988 = vmatpush.msra.mxu0 %v3478
        %3989 = vmatpush.msra.mxu0 %v3476
        %3990 = vmatpush.msra.mxu0 %v3474
        %3991 = vmatpush.msra.mxu0 %v3472
        %3992 = vmatmul.f32.gmra.mxu0 %v3974
        %v3993 = vpop.f32.mrf.mxu0
        %v3994 = vadd.f32 0.0, %v3993
        %3995 = vdwg.mxu0
        %v3996 = vadd.f32 %v3971, %v3994
        %3997 = vrot.lane.b32.xlu0 %v3516, 98
        %v3998 = vpop.permute.xlu0 %3997
        %v3999 = vsel %vm3408, %v3998, 0
        %4001 = vmatpush.msra.mxu0 0.0
        %4002 = vmatpush.msra.mxu0 0.0
        %4003 = vmatpush.msra.mxu0 0.0
        %4004 = vmatpush.msra.mxu0 0.0
        %4005 = vmatpush.msra.mxu0 0.0
        %4006 = vmatpush.msra.mxu0 0.0
        %4007 = vmatpush.msra.mxu0 0.0
        %4008 = vmatpush.msra.mxu0 0.0
        %4009 = vmatpush.msra.mxu0 0.0
        %4010 = vmatpush.msra.mxu0 %v3544
        %4011 = vmatpush.msra.mxu0 %v3535
        %4012 = vmatpush.msra.mxu0 %v3533
        %4013 = vmatpush.msra.mxu0 %v3531
        %4014 = vmatpush.msra.mxu0 %v3529
        %4015 = vmatpush.msra.mxu0 %v3527
        %4016 = vmatpush.msra.mxu0 %v3525
        %4017 = vmatmul.f32.gmra.mxu0 %v3999
        %v4018 = vpop.f32.mrf.mxu0
        %v4019 = vadd.f32 0.0, %v4018
        %4020 = vdwg.mxu0
        %v4021 = vadd.f32 %v3996, %v4019
        %4022 = vrot.lane.b32.xlu0 %v3569, 98
        %v4023 = vpop.permute.xlu0 %4022
        %v4024 = vsel %vm3408, %v4023, 0
        %4026 = vmatpush.msra.mxu0 0.0
        %4027 = vmatpush.msra.mxu0 0.0
        %4028 = vmatpush.msra.mxu0 0.0
        %4029 = vmatpush.msra.mxu0 0.0
        %4030 = vmatpush.msra.mxu0 0.0
        %4031 = vmatpush.msra.mxu0 0.0
        %4032 = vmatpush.msra.mxu0 0.0
        %4033 = vmatpush.msra.mxu0 0.0
        %4034 = vmatpush.msra.mxu0 0.0
        %4035 = vmatpush.msra.mxu0 %v3597
        %4036 = vmatpush.msra.mxu0 %v3588
        %4037 = vmatpush.msra.mxu0 %v3586
        %4038 = vmatpush.msra.mxu0 %v3584
        %4039 = vmatpush.msra.mxu0 %v3582
        %4040 = vmatpush.msra.mxu0 %v3580
        %4041 = vmatpush.msra.mxu0 %v3578
        %4042 = vmatmul.f32.gmra.mxu0 %v4024
        %v4043 = vpop.f32.mrf.mxu0
        %v4044 = vadd.f32 0.0, %v4043
        %4045 = vdwg.mxu0
        %v4046 = vadd.f32 %v4021, %v4044
        %4047 = vrot.lane.b32.xlu0 %v3622, 98
        %v4048 = vpop.permute.xlu0 %4047
        %v4049 = vsel %vm3408, %v4048, 0
        %4051 = vmatpush.msra.mxu0 0.0
        %4052 = vmatpush.msra.mxu0 0.0
        %4053 = vmatpush.msra.mxu0 0.0
        %4054 = vmatpush.msra.mxu0 0.0
        %4055 = vmatpush.msra.mxu0 0.0
        %4056 = vmatpush.msra.mxu0 0.0
        %4057 = vmatpush.msra.mxu0 0.0
        %4058 = vmatpush.msra.mxu0 0.0
        %4059 = vmatpush.msra.mxu0 0.0
        %4060 = vmatpush.msra.mxu0 %v3626
        %4061 = vmatpush.msra.mxu0 %v369
        %4062 = vmatpush.msra.mxu0 %v368
        %4063 = vmatpush.msra.mxu0 %v367
        %4064 = vmatpush.msra.mxu0 %v366
        %4065 = vmatpush.msra.mxu0 %v365
        %4066 = vmatpush.msra.mxu0 %v364
        %4067 = vmatmul.f32.gmra.mxu0 %v4049
        %v4068 = vpop.f32.mrf.mxu0
        %v4069 = vadd.f32 0.0, %v4068
        %4070 = vdwg.mxu0
        %v4071 = vadd.f32 %v4046, %v4069
        %v4072 = vmax.f32 %v3946, %v4071
        %4073 = vmatpush.msra.mxu0 0.0
        %4074 = vmatpush.msra.mxu0 0.0
        %4075 = vmatpush.msra.mxu0 0.0
        %4076 = vmatpush.msra.mxu0 0.0
        %4077 = vmatpush.msra.mxu0 0.0
        %4078 = vmatpush.msra.mxu0 0.0
        %4079 = vmatpush.msra.mxu0 0.0
        %4080 = vmatpush.msra.mxu0 0.0
        %4081 = vmatpush.msra.mxu0 0.0
        %4082 = vmatpush.msra.mxu0 0.0
        %4083 = vmatpush.msra.mxu0 0.0
        %4084 = vmatpush.msra.mxu0 0.0
        %4085 = vmatpush.msra.mxu0 0.0
        %4086 = vmatpush.msra.mxu0 0.0
        %4087 = vmatpush.msra.mxu0 0.0
        %4088 = vmatpush.msra.mxu0 %v4072
        %4089 = vmatmul.f32.gmra.mxu0 %v3776
        %v4090 = vpop.f32.mrf.mxu0
        %v4091 = vadd.f32 0.0, %v4090
        %4092 = vdwg.mxu0
        %4093 = vmatpush.msra.mxu0 0.0
        %4094 = vmatpush.msra.mxu0 0.0
        %4095 = vmatpush.msra.mxu0 0.0
        %4096 = vmatpush.msra.mxu0 0.0
        %4097 = vmatpush.msra.mxu0 0.0
        %4098 = vmatpush.msra.mxu0 0.0
        %4099 = vmatpush.msra.mxu0 0.0
        %4100 = vmatpush.msra.mxu0 0.0
        %4101 = vmatpush.msra.mxu0 0.0
        %4102 = vmatpush.msra.mxu0 0.0
        %4103 = vmatpush.msra.mxu0 0.0
        %4104 = vmatpush.msra.mxu0 0.0
        %4105 = vmatpush.msra.mxu0 0.0
        %4106 = vmatpush.msra.mxu0 0.0
        %4107 = vmatpush.msra.mxu0 0.0
        %4108 = vmatpush.msra.mxu0 %v4072
        %4109 = vmatmul.f32.gmra.mxu0 %v3798
        %v4110 = vpop.f32.mrf.mxu0
        %v4111 = vadd.f32 0.0, %v4110
        %4112 = vdwg.mxu0
        %v4113 = vmax.f32 %v4091, %v4111
        %v4114 = vmax.f32 %v4113, 0.0
        %4115 = vrot.lane.b32.xlu0 %v3427, 88
        %v4116 = vpop.permute.xlu0 %4115
        %v4117 = vsel %vm3408, %v4116, 0
        %4119 = vmatpush.msra.mxu0 0.0
        %4120 = vmatpush.msra.mxu0 0.0
        %4121 = vmatpush.msra.mxu0 0.0
        %4122 = vmatpush.msra.mxu0 0.0
        %4123 = vmatpush.msra.mxu0 0.0
        %4124 = vmatpush.msra.mxu0 0.0
        %4125 = vmatpush.msra.mxu0 0.0
        %4126 = vmatpush.msra.mxu0 0.0
        %4127 = vmatpush.msra.mxu0 0.0
        %4128 = vmatpush.msra.mxu0 %v3434
        %4129 = vmatpush.msra.mxu0 %v344
        %4130 = vmatpush.msra.mxu0 %v343
        %4131 = vmatpush.msra.mxu0 %v342
        %4132 = vmatpush.msra.mxu0 %v341
        %4133 = vmatpush.msra.mxu0 %v340
        %4134 = vmatpush.msra.mxu0 %v339
        %4135 = vmatmul.f32.gmra.mxu0 %v4117
        %v4136 = vpop.f32.mrf.mxu0
        %v4137 = vadd.f32 0.0, %v4136
        %4138 = vdwg.mxu0
        %v4139 = vadd.f32 %v3457, %v4137
        %4140 = vrot.lane.b32.xlu0 %v3463, 88
        %v4141 = vpop.permute.xlu0 %4140
        %v4142 = vsel %vm3408, %v4141, 0
        %4144 = vmatpush.msra.mxu0 0.0
        %4145 = vmatpush.msra.mxu0 0.0
        %4146 = vmatpush.msra.mxu0 0.0
        %4147 = vmatpush.msra.mxu0 0.0
        %4148 = vmatpush.msra.mxu0 0.0
        %4149 = vmatpush.msra.mxu0 0.0
        %4150 = vmatpush.msra.mxu0 0.0
        %4151 = vmatpush.msra.mxu0 0.0
        %4152 = vmatpush.msra.mxu0 0.0
        %4153 = vmatpush.msra.mxu0 %v3491
        %4154 = vmatpush.msra.mxu0 %v3482
        %4155 = vmatpush.msra.mxu0 %v3480
        %4156 = vmatpush.msra.mxu0 %v3478
        %4157 = vmatpush.msra.mxu0 %v3476
        %4158 = vmatpush.msra.mxu0 %v3474
        %4159 = vmatpush.msra.mxu0 %v3472
        %4160 = vmatmul.f32.gmra.mxu0 %v4142
        %v4161 = vpop.f32.mrf.mxu0
        %v4162 = vadd.f32 0.0, %v4161
        %4163 = vdwg.mxu0
        %v4164 = vadd.f32 %v4139, %v4162
        %4165 = vrot.lane.b32.xlu0 %v3516, 88
        %v4166 = vpop.permute.xlu0 %4165
        %v4167 = vsel %vm3408, %v4166, 0
        %4169 = vmatpush.msra.mxu0 0.0
        %4170 = vmatpush.msra.mxu0 0.0
        %4171 = vmatpush.msra.mxu0 0.0
        %4172 = vmatpush.msra.mxu0 0.0
        %4173 = vmatpush.msra.mxu0 0.0
        %4174 = vmatpush.msra.mxu0 0.0
        %4175 = vmatpush.msra.mxu0 0.0
        %4176 = vmatpush.msra.mxu0 0.0
        %4177 = vmatpush.msra.mxu0 0.0
        %4178 = vmatpush.msra.mxu0 %v3544
        %4179 = vmatpush.msra.mxu0 %v3535
        %4180 = vmatpush.msra.mxu0 %v3533
        %4181 = vmatpush.msra.mxu0 %v3531
        %4182 = vmatpush.msra.mxu0 %v3529
        %4183 = vmatpush.msra.mxu0 %v3527
        %4184 = vmatpush.msra.mxu0 %v3525
        %4185 = vmatmul.f32.gmra.mxu0 %v4167
        %v4186 = vpop.f32.mrf.mxu0
        %v4187 = vadd.f32 0.0, %v4186
        %4188 = vdwg.mxu0
        %v4189 = vadd.f32 %v4164, %v4187
        %4190 = vrot.lane.b32.xlu0 %v3569, 88
        %v4191 = vpop.permute.xlu0 %4190
        %v4192 = vsel %vm3408, %v4191, 0
        %4194 = vmatpush.msra.mxu0 0.0
        %4195 = vmatpush.msra.mxu0 0.0
        %4196 = vmatpush.msra.mxu0 0.0
        %4197 = vmatpush.msra.mxu0 0.0
        %4198 = vmatpush.msra.mxu0 0.0
        %4199 = vmatpush.msra.mxu0 0.0
        %4200 = vmatpush.msra.mxu0 0.0
        %4201 = vmatpush.msra.mxu0 0.0
        %4202 = vmatpush.msra.mxu0 0.0
        %4203 = vmatpush.msra.mxu0 %v3597
        %4204 = vmatpush.msra.mxu0 %v3588
        %4205 = vmatpush.msra.mxu0 %v3586
        %4206 = vmatpush.msra.mxu0 %v3584
        %4207 = vmatpush.msra.mxu0 %v3582
        %4208 = vmatpush.msra.mxu0 %v3580
        %4209 = vmatpush.msra.mxu0 %v3578
        %4210 = vmatmul.f32.gmra.mxu0 %v4192
        %v4211 = vpop.f32.mrf.mxu0
        %v4212 = vadd.f32 0.0, %v4211
        %4213 = vdwg.mxu0
        %v4214 = vadd.f32 %v4189, %v4212
        %4215 = vrot.lane.b32.xlu0 %v3622, 88
        %v4216 = vpop.permute.xlu0 %4215
        %v4217 = vsel %vm3408, %v4216, 0
        %4219 = vmatpush.msra.mxu0 0.0
        %4220 = vmatpush.msra.mxu0 0.0
        %4221 = vmatpush.msra.mxu0 0.0
        %4222 = vmatpush.msra.mxu0 0.0
        %4223 = vmatpush.msra.mxu0 0.0
        %4224 = vmatpush.msra.mxu0 0.0
        %4225 = vmatpush.msra.mxu0 0.0
        %4226 = vmatpush.msra.mxu0 0.0
        %4227 = vmatpush.msra.mxu0 0.0
        %4228 = vmatpush.msra.mxu0 %v3626
        %4229 = vmatpush.msra.mxu0 %v369
        %4230 = vmatpush.msra.mxu0 %v368
        %4231 = vmatpush.msra.mxu0 %v367
        %4232 = vmatpush.msra.mxu0 %v366
        %4233 = vmatpush.msra.mxu0 %v365
        %4234 = vmatpush.msra.mxu0 %v364
        %4235 = vmatmul.f32.gmra.mxu0 %v4217
        %v4236 = vpop.f32.mrf.mxu0
        %v4237 = vadd.f32 0.0, %v4236
        %4238 = vdwg.mxu0
        %v4239 = vadd.f32 %v4214, %v4237
        %4240 = vrot.lane.b32.xlu0 %v3427, 78
        %v4241 = vpop.permute.xlu0 %4240
        %v4242 = vsel %vm3408, %v4241, 0
        %4244 = vmatpush.msra.mxu0 0.0
        %4245 = vmatpush.msra.mxu0 0.0
        %4246 = vmatpush.msra.mxu0 0.0
        %4247 = vmatpush.msra.mxu0 0.0
        %4248 = vmatpush.msra.mxu0 0.0
        %4249 = vmatpush.msra.mxu0 0.0
        %4250 = vmatpush.msra.mxu0 0.0
        %4251 = vmatpush.msra.mxu0 0.0
        %4252 = vmatpush.msra.mxu0 0.0
        %4253 = vmatpush.msra.mxu0 %v3434
        %4254 = vmatpush.msra.mxu0 %v344
        %4255 = vmatpush.msra.mxu0 %v343
        %4256 = vmatpush.msra.mxu0 %v342
        %4257 = vmatpush.msra.mxu0 %v341
        %4258 = vmatpush.msra.mxu0 %v340
        %4259 = vmatpush.msra.mxu0 %v339
        %4260 = vmatmul.f32.gmra.mxu0 %v4242
        %v4261 = vpop.f32.mrf.mxu0
        %v4262 = vadd.f32 0.0, %v4261
        %4263 = vdwg.mxu0
        %v4264 = vadd.f32 %v3457, %v4262
        %4265 = vrot.lane.b32.xlu0 %v3463, 78
        %v4266 = vpop.permute.xlu0 %4265
        %v4267 = vsel %vm3408, %v4266, 0
        %4269 = vmatpush.msra.mxu0 0.0
        %4270 = vmatpush.msra.mxu0 0.0
        %4271 = vmatpush.msra.mxu0 0.0
        %4272 = vmatpush.msra.mxu0 0.0
        %4273 = vmatpush.msra.mxu0 0.0
        %4274 = vmatpush.msra.mxu0 0.0
        %4275 = vmatpush.msra.mxu0 0.0
        %4276 = vmatpush.msra.mxu0 0.0
        %4277 = vmatpush.msra.mxu0 0.0
        %4278 = vmatpush.msra.mxu0 %v3491
        %4279 = vmatpush.msra.mxu0 %v3482
        %4280 = vmatpush.msra.mxu0 %v3480
        %4281 = vmatpush.msra.mxu0 %v3478
        %4282 = vmatpush.msra.mxu0 %v3476
        %4283 = vmatpush.msra.mxu0 %v3474
        %4284 = vmatpush.msra.mxu0 %v3472
        %4285 = vmatmul.f32.gmra.mxu0 %v4267
        %v4286 = vpop.f32.mrf.mxu0
        %v4287 = vadd.f32 0.0, %v4286
        %4288 = vdwg.mxu0
        %v4289 = vadd.f32 %v4264, %v4287
        %4290 = vrot.lane.b32.xlu0 %v3516, 78
        %v4291 = vpop.permute.xlu0 %4290
        %v4292 = vsel %vm3408, %v4291, 0
        %4294 = vmatpush.msra.mxu0 0.0
        %4295 = vmatpush.msra.mxu0 0.0
        %4296 = vmatpush.msra.mxu0 0.0
        %4297 = vmatpush.msra.mxu0 0.0
        %4298 = vmatpush.msra.mxu0 0.0
        %4299 = vmatpush.msra.mxu0 0.0
        %4300 = vmatpush.msra.mxu0 0.0
        %4301 = vmatpush.msra.mxu0 0.0
        %4302 = vmatpush.msra.mxu0 0.0
        %4303 = vmatpush.msra.mxu0 %v3544
        %4304 = vmatpush.msra.mxu0 %v3535
        %4305 = vmatpush.msra.mxu0 %v3533
        %4306 = vmatpush.msra.mxu0 %v3531
        %4307 = vmatpush.msra.mxu0 %v3529
        %4308 = vmatpush.msra.mxu0 %v3527
        %4309 = vmatpush.msra.mxu0 %v3525
        %4310 = vmatmul.f32.gmra.mxu0 %v4292
        %v4311 = vpop.f32.mrf.mxu0
        %v4312 = vadd.f32 0.0, %v4311
        %4313 = vdwg.mxu0
        %v4314 = vadd.f32 %v4289, %v4312
        %4315 = vrot.lane.b32.xlu0 %v3569, 78
        %v4316 = vpop.permute.xlu0 %4315
        %v4317 = vsel %vm3408, %v4316, 0
        %4319 = vmatpush.msra.mxu0 0.0
        %4320 = vmatpush.msra.mxu0 0.0
        %4321 = vmatpush.msra.mxu0 0.0
        %4322 = vmatpush.msra.mxu0 0.0
        %4323 = vmatpush.msra.mxu0 0.0
        %4324 = vmatpush.msra.mxu0 0.0
        %4325 = vmatpush.msra.mxu0 0.0
        %4326 = vmatpush.msra.mxu0 0.0
        %4327 = vmatpush.msra.mxu0 0.0
        %4328 = vmatpush.msra.mxu0 %v3597
        %4329 = vmatpush.msra.mxu0 %v3588
        %4330 = vmatpush.msra.mxu0 %v3586
        %4331 = vmatpush.msra.mxu0 %v3584
        %4332 = vmatpush.msra.mxu0 %v3582
        %4333 = vmatpush.msra.mxu0 %v3580
        %4334 = vmatpush.msra.mxu0 %v3578
        %4335 = vmatmul.f32.gmra.mxu0 %v4317
        %v4336 = vpop.f32.mrf.mxu0
        %v4337 = vadd.f32 0.0, %v4336
        %4338 = vdwg.mxu0
        %v4339 = vadd.f32 %v4314, %v4337
        %4340 = vrot.lane.b32.xlu0 %v3622, 78
        %v4341 = vpop.permute.xlu0 %4340
        %v4342 = vsel %vm3408, %v4341, 0
        %4344 = vmatpush.msra.mxu0 0.0
        %4345 = vmatpush.msra.mxu0 0.0
        %4346 = vmatpush.msra.mxu0 0.0
        %4347 = vmatpush.msra.mxu0 0.0
        %4348 = vmatpush.msra.mxu0 0.0
        %4349 = vmatpush.msra.mxu0 0.0
        %4350 = vmatpush.msra.mxu0 0.0
        %4351 = vmatpush.msra.mxu0 0.0
        %4352 = vmatpush.msra.mxu0 0.0
        %4353 = vmatpush.msra.mxu0 %v3626
        %4354 = vmatpush.msra.mxu0 %v369
        %4355 = vmatpush.msra.mxu0 %v368
        %4356 = vmatpush.msra.mxu0 %v367
        %4357 = vmatpush.msra.mxu0 %v366
        %4358 = vmatpush.msra.mxu0 %v365
        %4359 = vmatpush.msra.mxu0 %v364
        %4360 = vmatmul.f32.gmra.mxu0 %v4342
        %v4361 = vpop.f32.mrf.mxu0
        %v4362 = vadd.f32 0.0, %v4361
        %4363 = vdwg.mxu0
        %v4364 = vadd.f32 %v4339, %v4362
        %v4365 = vmax.f32 %v4239, %v4364
        %4366 = vmatpush.msra.mxu0 0.0
        %4367 = vmatpush.msra.mxu0 0.0
        %4368 = vmatpush.msra.mxu0 0.0
        %4369 = vmatpush.msra.mxu0 0.0
        %4370 = vmatpush.msra.mxu0 0.0
        %4371 = vmatpush.msra.mxu0 0.0
        %4372 = vmatpush.msra.mxu0 0.0
        %4373 = vmatpush.msra.mxu0 0.0
        %4374 = vmatpush.msra.mxu0 0.0
        %4375 = vmatpush.msra.mxu0 0.0
        %4376 = vmatpush.msra.mxu0 0.0
        %4377 = vmatpush.msra.mxu0 0.0
        %4378 = vmatpush.msra.mxu0 0.0
        %4379 = vmatpush.msra.mxu0 0.0
        %4380 = vmatpush.msra.mxu0 0.0
        %4381 = vmatpush.msra.mxu0 %v4365
        %4382 = vmatmul.f32.gmra.mxu0 %v3776
        %v4383 = vpop.f32.mrf.mxu0
        %v4384 = vadd.f32 0.0, %v4383
        %4385 = vdwg.mxu0
        %4386 = vmatpush.msra.mxu0 0.0
        %4387 = vmatpush.msra.mxu0 0.0
        %4388 = vmatpush.msra.mxu0 0.0
        %4389 = vmatpush.msra.mxu0 0.0
        %4390 = vmatpush.msra.mxu0 0.0
        %4391 = vmatpush.msra.mxu0 0.0
        %4392 = vmatpush.msra.mxu0 0.0
        %4393 = vmatpush.msra.mxu0 0.0
        %4394 = vmatpush.msra.mxu0 0.0
        %4395 = vmatpush.msra.mxu0 0.0
        %4396 = vmatpush.msra.mxu0 0.0
        %4397 = vmatpush.msra.mxu0 0.0
        %4398 = vmatpush.msra.mxu0 0.0
        %4399 = vmatpush.msra.mxu0 0.0
        %4400 = vmatpush.msra.mxu0 0.0
        %4401 = vmatpush.msra.mxu0 %v4365
        %4402 = vmatmul.f32.gmra.mxu0 %v3798
        %v4403 = vpop.f32.mrf.mxu0
        %v4404 = vadd.f32 0.0, %v4403
        %4405 = vdwg.mxu0
        %v4406 = vmax.f32 %v4384, %v4404
        %v4407 = vmax.f32 %v4406, 0.0
        %4408 = vrot.lane.b32.xlu0 %v3427, 68
        %v4409 = vpop.permute.xlu0 %4408
        %v4410 = vsel %vm3408, %v4409, 0
        %4412 = vmatpush.msra.mxu0 0.0
        %4413 = vmatpush.msra.mxu0 0.0
        %4414 = vmatpush.msra.mxu0 0.0
        %4415 = vmatpush.msra.mxu0 0.0
        %4416 = vmatpush.msra.mxu0 0.0
        %4417 = vmatpush.msra.mxu0 0.0
        %4418 = vmatpush.msra.mxu0 0.0
        %4419 = vmatpush.msra.mxu0 0.0
        %4420 = vmatpush.msra.mxu0 0.0
        %4421 = vmatpush.msra.mxu0 %v3434
        %4422 = vmatpush.msra.mxu0 %v344
        %4423 = vmatpush.msra.mxu0 %v343
        %4424 = vmatpush.msra.mxu0 %v342
        %4425 = vmatpush.msra.mxu0 %v341
        %4426 = vmatpush.msra.mxu0 %v340
        %4427 = vmatpush.msra.mxu0 %v339
        %4428 = vmatmul.f32.gmra.mxu0 %v4410
        %v4429 = vpop.f32.mrf.mxu0
        %v4430 = vadd.f32 0.0, %v4429
        %4431 = vdwg.mxu0
        %v4432 = vadd.f32 %v3457, %v4430
        %4433 = vrot.lane.b32.xlu0 %v3463, 68
        %v4434 = vpop.permute.xlu0 %4433
        %v4435 = vsel %vm3408, %v4434, 0
        %4437 = vmatpush.msra.mxu0 0.0
        %4438 = vmatpush.msra.mxu0 0.0
        %4439 = vmatpush.msra.mxu0 0.0
        %4440 = vmatpush.msra.mxu0 0.0
        %4441 = vmatpush.msra.mxu0 0.0
        %4442 = vmatpush.msra.mxu0 0.0
        %4443 = vmatpush.msra.mxu0 0.0
        %4444 = vmatpush.msra.mxu0 0.0
        %4445 = vmatpush.msra.mxu0 0.0
        %4446 = vmatpush.msra.mxu0 %v3491
        %4447 = vmatpush.msra.mxu0 %v3482
        %4448 = vmatpush.msra.mxu0 %v3480
        %4449 = vmatpush.msra.mxu0 %v3478
        %4450 = vmatpush.msra.mxu0 %v3476
        %4451 = vmatpush.msra.mxu0 %v3474
        %4452 = vmatpush.msra.mxu0 %v3472
        %4453 = vmatmul.f32.gmra.mxu0 %v4435
        %v4454 = vpop.f32.mrf.mxu0
        %v4455 = vadd.f32 0.0, %v4454
        %4456 = vdwg.mxu0
        %v4457 = vadd.f32 %v4432, %v4455
        %4458 = vrot.lane.b32.xlu0 %v3516, 68
        %v4459 = vpop.permute.xlu0 %4458
        %v4460 = vsel %vm3408, %v4459, 0
        %4462 = vmatpush.msra.mxu0 0.0
        %4463 = vmatpush.msra.mxu0 0.0
        %4464 = vmatpush.msra.mxu0 0.0
        %4465 = vmatpush.msra.mxu0 0.0
        %4466 = vmatpush.msra.mxu0 0.0
        %4467 = vmatpush.msra.mxu0 0.0
        %4468 = vmatpush.msra.mxu0 0.0
        %4469 = vmatpush.msra.mxu0 0.0
        %4470 = vmatpush.msra.mxu0 0.0
        %4471 = vmatpush.msra.mxu0 %v3544
        %4472 = vmatpush.msra.mxu0 %v3535
        %4473 = vmatpush.msra.mxu0 %v3533
        %4474 = vmatpush.msra.mxu0 %v3531
        %4475 = vmatpush.msra.mxu0 %v3529
        %4476 = vmatpush.msra.mxu0 %v3527
        %4477 = vmatpush.msra.mxu0 %v3525
        %4478 = vmatmul.f32.gmra.mxu0 %v4460
        %v4479 = vpop.f32.mrf.mxu0
        %v4480 = vadd.f32 0.0, %v4479
        %4481 = vdwg.mxu0
        %v4482 = vadd.f32 %v4457, %v4480
        %4483 = vrot.lane.b32.xlu0 %v3569, 68
        %v4484 = vpop.permute.xlu0 %4483
        %v4485 = vsel %vm3408, %v4484, 0
        %4487 = vmatpush.msra.mxu0 0.0
        %4488 = vmatpush.msra.mxu0 0.0
        %4489 = vmatpush.msra.mxu0 0.0
        %4490 = vmatpush.msra.mxu0 0.0
        %4491 = vmatpush.msra.mxu0 0.0
        %4492 = vmatpush.msra.mxu0 0.0
        %4493 = vmatpush.msra.mxu0 0.0
        %4494 = vmatpush.msra.mxu0 0.0
        %4495 = vmatpush.msra.mxu0 0.0
        %4496 = vmatpush.msra.mxu0 %v3597
        %4497 = vmatpush.msra.mxu0 %v3588
        %4498 = vmatpush.msra.mxu0 %v3586
        %4499 = vmatpush.msra.mxu0 %v3584
        %4500 = vmatpush.msra.mxu0 %v3582
        %4501 = vmatpush.msra.mxu0 %v3580
        %4502 = vmatpush.msra.mxu0 %v3578
        %4503 = vmatmul.f32.gmra.mxu0 %v4485
        %v4504 = vpop.f32.mrf.mxu0
        %v4505 = vadd.f32 0.0, %v4504
        %4506 = vdwg.mxu0
        %v4507 = vadd.f32 %v4482, %v4505
        %4508 = vrot.lane.b32.xlu0 %v3622, 68
        %v4509 = vpop.permute.xlu0 %4508
        %v4510 = vsel %vm3408, %v4509, 0
        %4512 = vmatpush.msra.mxu0 0.0
        %4513 = vmatpush.msra.mxu0 0.0
        %4514 = vmatpush.msra.mxu0 0.0
        %4515 = vmatpush.msra.mxu0 0.0
        %4516 = vmatpush.msra.mxu0 0.0
        %4517 = vmatpush.msra.mxu0 0.0
        %4518 = vmatpush.msra.mxu0 0.0
        %4519 = vmatpush.msra.mxu0 0.0
        %4520 = vmatpush.msra.mxu0 0.0
        %4521 = vmatpush.msra.mxu0 %v3626
        %4522 = vmatpush.msra.mxu0 %v369
        %4523 = vmatpush.msra.mxu0 %v368
        %4524 = vmatpush.msra.mxu0 %v367
        %4525 = vmatpush.msra.mxu0 %v366
        %4526 = vmatpush.msra.mxu0 %v365
        %4527 = vmatpush.msra.mxu0 %v364
        %4528 = vmatmul.f32.gmra.mxu0 %v4510
        %v4529 = vpop.f32.mrf.mxu0
        %v4530 = vadd.f32 0.0, %v4529
        %4531 = vdwg.mxu0
        %v4532 = vadd.f32 %v4507, %v4530
        %4533 = vrot.lane.b32.xlu0 %v3427, 58
        %v4534 = vpop.permute.xlu0 %4533
        %v4535 = vsel %vm3408, %v4534, 0
        %4537 = vmatpush.msra.mxu0 0.0
        %4538 = vmatpush.msra.mxu0 0.0
        %4539 = vmatpush.msra.mxu0 0.0
        %4540 = vmatpush.msra.mxu0 0.0
        %4541 = vmatpush.msra.mxu0 0.0
        %4542 = vmatpush.msra.mxu0 0.0
        %4543 = vmatpush.msra.mxu0 0.0
        %4544 = vmatpush.msra.mxu0 0.0
        %4545 = vmatpush.msra.mxu0 0.0
        %4546 = vmatpush.msra.mxu0 %v3434
        %4547 = vmatpush.msra.mxu0 %v344
        %4548 = vmatpush.msra.mxu0 %v343
        %4549 = vmatpush.msra.mxu0 %v342
        %4550 = vmatpush.msra.mxu0 %v341
        %4551 = vmatpush.msra.mxu0 %v340
        %4552 = vmatpush.msra.mxu0 %v339
        %4553 = vmatmul.f32.gmra.mxu0 %v4535
        %v4554 = vpop.f32.mrf.mxu0
        %v4555 = vadd.f32 0.0, %v4554
        %4556 = vdwg.mxu0
        %v4557 = vadd.f32 %v3457, %v4555
        %4558 = vrot.lane.b32.xlu0 %v3463, 58
        %v4559 = vpop.permute.xlu0 %4558
        %v4560 = vsel %vm3408, %v4559, 0
        %4562 = vmatpush.msra.mxu0 0.0
        %4563 = vmatpush.msra.mxu0 0.0
        %4564 = vmatpush.msra.mxu0 0.0
        %4565 = vmatpush.msra.mxu0 0.0
        %4566 = vmatpush.msra.mxu0 0.0
        %4567 = vmatpush.msra.mxu0 0.0
        %4568 = vmatpush.msra.mxu0 0.0
        %4569 = vmatpush.msra.mxu0 0.0
        %4570 = vmatpush.msra.mxu0 0.0
        %4571 = vmatpush.msra.mxu0 %v3491
        %4572 = vmatpush.msra.mxu0 %v3482
        %4573 = vmatpush.msra.mxu0 %v3480
        %4574 = vmatpush.msra.mxu0 %v3478
        %4575 = vmatpush.msra.mxu0 %v3476
        %4576 = vmatpush.msra.mxu0 %v3474
        %4577 = vmatpush.msra.mxu0 %v3472
        %4578 = vmatmul.f32.gmra.mxu0 %v4560
        %v4579 = vpop.f32.mrf.mxu0
        %v4580 = vadd.f32 0.0, %v4579
        %4581 = vdwg.mxu0
        %v4582 = vadd.f32 %v4557, %v4580
        %4583 = vrot.lane.b32.xlu0 %v3516, 58
        %v4584 = vpop.permute.xlu0 %4583
        %v4585 = vsel %vm3408, %v4584, 0
        %4587 = vmatpush.msra.mxu0 0.0
        %4588 = vmatpush.msra.mxu0 0.0
        %4589 = vmatpush.msra.mxu0 0.0
        %4590 = vmatpush.msra.mxu0 0.0
        %4591 = vmatpush.msra.mxu0 0.0
        %4592 = vmatpush.msra.mxu0 0.0
        %4593 = vmatpush.msra.mxu0 0.0
        %4594 = vmatpush.msra.mxu0 0.0
        %4595 = vmatpush.msra.mxu0 0.0
        %4596 = vmatpush.msra.mxu0 %v3544
        %4597 = vmatpush.msra.mxu0 %v3535
        %4598 = vmatpush.msra.mxu0 %v3533
        %4599 = vmatpush.msra.mxu0 %v3531
        %4600 = vmatpush.msra.mxu0 %v3529
        %4601 = vmatpush.msra.mxu0 %v3527
        %4602 = vmatpush.msra.mxu0 %v3525
        %4603 = vmatmul.f32.gmra.mxu0 %v4585
        %v4604 = vpop.f32.mrf.mxu0
        %v4605 = vadd.f32 0.0, %v4604
        %4606 = vdwg.mxu0
        %v4607 = vadd.f32 %v4582, %v4605
        %4608 = vrot.lane.b32.xlu0 %v3569, 58
        %v4609 = vpop.permute.xlu0 %4608
        %v4610 = vsel %vm3408, %v4609, 0
        %4612 = vmatpush.msra.mxu0 0.0
        %4613 = vmatpush.msra.mxu0 0.0
        %4614 = vmatpush.msra.mxu0 0.0
        %4615 = vmatpush.msra.mxu0 0.0
        %4616 = vmatpush.msra.mxu0 0.0
        %4617 = vmatpush.msra.mxu0 0.0
        %4618 = vmatpush.msra.mxu0 0.0
        %4619 = vmatpush.msra.mxu0 0.0
        %4620 = vmatpush.msra.mxu0 0.0
        %4621 = vmatpush.msra.mxu0 %v3597
        %4622 = vmatpush.msra.mxu0 %v3588
        %4623 = vmatpush.msra.mxu0 %v3586
        %4624 = vmatpush.msra.mxu0 %v3584
        %4625 = vmatpush.msra.mxu0 %v3582
        %4626 = vmatpush.msra.mxu0 %v3580
        %4627 = vmatpush.msra.mxu0 %v3578
        %4628 = vmatmul.f32.gmra.mxu0 %v4610
        %v4629 = vpop.f32.mrf.mxu0
        %v4630 = vadd.f32 0.0, %v4629
        %4631 = vdwg.mxu0
        %v4632 = vadd.f32 %v4607, %v4630
        %4633 = vrot.lane.b32.xlu0 %v3622, 58
        %v4634 = vpop.permute.xlu0 %4633
        %v4635 = vsel %vm3408, %v4634, 0
        %4637 = vmatpush.msra.mxu0 0.0
        %4638 = vmatpush.msra.mxu0 0.0
        %4639 = vmatpush.msra.mxu0 0.0
        %4640 = vmatpush.msra.mxu0 0.0
        %4641 = vmatpush.msra.mxu0 0.0
        %4642 = vmatpush.msra.mxu0 0.0
        %4643 = vmatpush.msra.mxu0 0.0
        %4644 = vmatpush.msra.mxu0 0.0
        %4645 = vmatpush.msra.mxu0 0.0
        %4646 = vmatpush.msra.mxu0 %v3626
        %4647 = vmatpush.msra.mxu0 %v369
        %4648 = vmatpush.msra.mxu0 %v368
        %4649 = vmatpush.msra.mxu0 %v367
        %4650 = vmatpush.msra.mxu0 %v366
        %4651 = vmatpush.msra.mxu0 %v365
        %4652 = vmatpush.msra.mxu0 %v364
        %4653 = vmatmul.f32.gmra.mxu0 %v4635
        %v4654 = vpop.f32.mrf.mxu0
        %v4655 = vadd.f32 0.0, %v4654
        %4656 = vdwg.mxu0
        %v4657 = vadd.f32 %v4632, %v4655
        %v4658 = vmax.f32 %v4532, %v4657
        %4659 = vmatpush.msra.mxu0 0.0
        %4660 = vmatpush.msra.mxu0 0.0
        %4661 = vmatpush.msra.mxu0 0.0
        %4662 = vmatpush.msra.mxu0 0.0
        %4663 = vmatpush.msra.mxu0 0.0
        %4664 = vmatpush.msra.mxu0 0.0
        %4665 = vmatpush.msra.mxu0 0.0
        %4666 = vmatpush.msra.mxu0 0.0
        %4667 = vmatpush.msra.mxu0 0.0
        %4668 = vmatpush.msra.mxu0 0.0
        %4669 = vmatpush.msra.mxu0 0.0
        %4670 = vmatpush.msra.mxu0 0.0
        %4671 = vmatpush.msra.mxu0 0.0
        %4672 = vmatpush.msra.mxu0 0.0
        %4673 = vmatpush.msra.mxu0 0.0
        %4674 = vmatpush.msra.mxu0 %v4658
        %4675 = vmatmul.f32.gmra.mxu0 %v3776
        %v4676 = vpop.f32.mrf.mxu0
        %v4677 = vadd.f32 0.0, %v4676
        %4678 = vdwg.mxu0
        %4679 = vmatpush.msra.mxu0 0.0
        %4680 = vmatpush.msra.mxu0 0.0
        %4681 = vmatpush.msra.mxu0 0.0
        %4682 = vmatpush.msra.mxu0 0.0
        %4683 = vmatpush.msra.mxu0 0.0
        %4684 = vmatpush.msra.mxu0 0.0
        %4685 = vmatpush.msra.mxu0 0.0
        %4686 = vmatpush.msra.mxu0 0.0
        %4687 = vmatpush.msra.mxu0 0.0
        %4688 = vmatpush.msra.mxu0 0.0
        %4689 = vmatpush.msra.mxu0 0.0
        %4690 = vmatpush.msra.mxu0 0.0
        %4691 = vmatpush.msra.mxu0 0.0
        %4692 = vmatpush.msra.mxu0 0.0
        %4693 = vmatpush.msra.mxu0 0.0
        %4694 = vmatpush.msra.mxu0 %v4658
        %4695 = vmatmul.f32.gmra.mxu0 %v3798
        %v4696 = vpop.f32.mrf.mxu0
        %v4697 = vadd.f32 0.0, %v4696
        %4698 = vdwg.mxu0
        %v4699 = vmax.f32 %v4677, %v4697
        %v4700 = vmax.f32 %v4699, 0.0
        %4702 = vrot.lane.b32.xlu0 %v4114, 20
        %v4703 = vpop.permute.xlu0 %4702
        %4706 = vrot.lane.b32.xlu0 %v4407, 40
        %v4707 = vpop.permute.xlu0 %4706
        %4710 = vrot.lane.b32.xlu0 %v4700, 60
        %v4711 = vpop.permute.xlu0 %4710
        %v4713 = vsel %vm522, %v3821, %v4703
        %v4714 = vsel %vm3405, %v4713, %v4707
        %v4715 = vsel %vm3411, %v4714, %v4711
        %v4717 = vrot.slane %v4715, 1
        %4718 = vrot.lane.b32.xlu0 %v4717, 80
        %v4719 = vpop.permute.xlu0 %4718
        %v4721 = vrot.slane %v4715, 2
        %4722 = vrot.lane.b32.xlu0 %v4721, 32
        %v4723 = vpop.permute.xlu0 %4722
        %v4725 = vrot.slane %v4715, 3
        %4726 = vrot.lane.b32.xlu0 %v4725, 112
        %v4727 = vpop.permute.xlu0 %4726
        %v4729 = vsel %vm3417, %v4715, %v4719
        %vm4730 = vcmask 261120
        %v4731 = vsel %vm4730, %v4719, %v4723
        %vm4732 = vcmask 916480
        %v4733 = vsel %vm4732, %v4731, %v4727
        %vm4734 = vcmask 523264
        %v4735 = vsel %vm4734, %v4727, 0
        %4737 = vmatpush.msra.mxu0 %v387
        %4738 = vmatpush.msra.mxu0 %v386
        %4739 = vmatpush.msra.mxu0 %v385
        %4740 = vmatpush.msra.mxu0 %v384
        %4741 = vmatpush.msra.mxu0 %v383
        %4742 = vmatpush.msra.mxu0 %v382
        %4743 = vmatpush.msra.mxu0 %v381
        %4744 = vmatpush.msra.mxu0 %v380
        %4745 = vmatpush.msra.mxu0 %v379
        %4746 = vmatpush.msra.mxu0 %v378
        %4747 = vmatpush.msra.mxu0 %v377
        %4748 = vmatpush.msra.mxu0 %v376
        %4749 = vmatpush.msra.mxu0 %v375
        %4750 = vmatpush.msra.mxu0 %v374
        %4751 = vmatpush.msra.mxu0 %v373
        %4752 = vmatpush.msra.mxu0 %v372
        %4753 = vmatmul.f32.gmra.mxu0 %v4729
        %v4754 = vpop.f32.mrf.mxu0
        %v4755 = vadd.f32 %v412, %v4754
        %4756 = vdwg.mxu0
        %4757 = vmatpush.msra.mxu0 %v403
        %4758 = vmatpush.msra.mxu0 %v402
        %4759 = vmatpush.msra.mxu0 %v401
        %4760 = vmatpush.msra.mxu0 %v400
        %4761 = vmatpush.msra.mxu0 %v399
        %4762 = vmatpush.msra.mxu0 %v398
        %4763 = vmatpush.msra.mxu0 %v397
        %4764 = vmatpush.msra.mxu0 %v396
        %4765 = vmatpush.msra.mxu0 %v395
        %4766 = vmatpush.msra.mxu0 %v394
        %4767 = vmatpush.msra.mxu0 %v393
        %4768 = vmatpush.msra.mxu0 %v392
        %4769 = vmatpush.msra.mxu0 %v391
        %4770 = vmatpush.msra.mxu0 %v390
        %4771 = vmatpush.msra.mxu0 %v389
        %4772 = vmatpush.msra.mxu0 %v388
        %4773 = vmatmul.f32.gmra.mxu0 %v4733
        %v4774 = vpop.f32.mrf.mxu0
        %v4775 = vadd.f32 %v4755, %v4774
        %4776 = vdwg.mxu0
        %4777 = vmatpush.msra.mxu0 0.0
        %4778 = vmatpush.msra.mxu0 0.0
        %4779 = vmatpush.msra.mxu0 0.0
        %4780 = vmatpush.msra.mxu0 0.0
        %4781 = vmatpush.msra.mxu0 0.0
        %4782 = vmatpush.msra.mxu0 0.0
        %4783 = vmatpush.msra.mxu0 0.0
        %4784 = vmatpush.msra.mxu0 0.0
        %4785 = vmatpush.msra.mxu0 %v411
        %4786 = vmatpush.msra.mxu0 %v410
        %4787 = vmatpush.msra.mxu0 %v409
        %4788 = vmatpush.msra.mxu0 %v408
        %4789 = vmatpush.msra.mxu0 %v407
        %4790 = vmatpush.msra.mxu0 %v406
        %4791 = vmatpush.msra.mxu0 %v405
        %4792 = vmatpush.msra.mxu0 %v404
        %4793 = vmatmul.f32.gmra.mxu0 %v4735
        %v4794 = vpop.f32.mrf.mxu0
        %v4795 = vadd.f32 %v4775, %v4794
        %4796 = vdwg.mxu0
        %v4797 = vmax.f32 %v4795, 0.0
        %v4799 = vsel %vm3408, %v4797, 0
        %v4802 = vsel %vm3432, %v419, 0
        %4804 = vmatpush.msra.mxu0 0.0
        %4805 = vmatpush.msra.mxu0 0.0
        %4806 = vmatpush.msra.mxu0 0.0
        %4807 = vmatpush.msra.mxu0 0.0
        %4808 = vmatpush.msra.mxu0 0.0
        %4809 = vmatpush.msra.mxu0 0.0
        %4810 = vmatpush.msra.mxu0 0.0
        %4811 = vmatpush.msra.mxu0 0.0
        %4812 = vmatpush.msra.mxu0 0.0
        %4813 = vmatpush.msra.mxu0 %v4802
        %4814 = vmatpush.msra.mxu0 %v418
        %4815 = vmatpush.msra.mxu0 %v417
        %4816 = vmatpush.msra.mxu0 %v416
        %4817 = vmatpush.msra.mxu0 %v415
        %4818 = vmatpush.msra.mxu0 %v414
        %4819 = vmatpush.msra.mxu0 %v413
        %4820 = vmatmul.f32.gmra.mxu0 %v4799
        %v4821 = vpop.f32.mrf.mxu0
        %v4822 = vadd.f32 %v420, %v4821
        %4823 = vdwg.mxu0
        %vm4824 = vcmask 73728
        %v4825 = vsel %vm4824, %v4822, -inf
        %4826 = vmax.xlane.f32.xlu0 %v4825
        %v4827 = vpop.xlane.xlu0 %4826
        %v4828 = vsub.f32 %v4822, %v4827
        %v4829 = vmul.f32 %v4828, 1.442695
        %v4830 = vpow.pop %v4829
        %v4831 = vsel %vm4824, %v4830, 0.0
        %4832 = vadd.xlane.f32.xlu0 %v4831
        %v4833 = vpop.xlane.xlu0 %4832
        %v4834 = vlog2.pop %v4833
        %v4835 = vmul.f32 %v4834, 0.6931472
        %v4836 = vsub.f32 %v4828, %v4835
        %4837 = vst.msk [vmem:[%s324] sm:$0x1] %vm4824, %v4836
        %s4838 = sand.u32 %s225, 1
        %s4839 = scalar_lea.sflag [#allocation3], %s4838
        %s4840 = sand.u32 %s225, 1
        %s4841 = scalar_lea.vmem [#allocation2], %s4840
        // Predicated region
        $region57: #{net_forward.1} parent=55 // pred_check
          %p4842 = pneg %p235
        $region58: #{net_forward.1} parent=55 // pred_check_branch
          %4844 = sbr.rel (%p4842) target = $region60
        $region59: #{net_forward.1} parent=55 // pred_region
          %4846 = vsyncadd %s4839, 0
          %s4847 = scalar_lea.hbm %s9, %s23
          %s4849 = sshll.u32 %s4841, 4
          %s4850 = int_to_ptr.vmem [resolvable:$true] %s4849
          %s4851 = sshll.u32 %s4847, 4
          %s4852 = int_to_ptr.hbm [resolvable:$true] %s4851
          %4854 = dma.vmem_to_hbm [thread:$0]  %s4850, 16, %s4852, %s4839
        $region60: #{net_forward.1} parent=55 // pred_fallthru
          _
      $region56: #{net_forward.1} parent=5 // pred_fallthru
        _
      %p4855 = scmp.le.s32.totalorder 2, %s18
      // Predicated region
      $region61: #{net_forward.1} parent=5 // pred_check
        %p4856 = pneg %p4855
      $region62: #{net_forward.1} parent=5 // pred_check_branch
        %4858 = sbr.rel (%p4856) target = $region64
      $region63: #{net_forward.1} parent=5 // pred_region
        %s4859 = ssub.s32 %s18, 2
        // Predicated region
        $region65: #{net_forward.1} parent=63 // pred_check
          %p4860 = pneg %p241
        $region66: #{net_forward.1} parent=63 // pred_check_branch
          %4862 = sbr.rel (%p4860) target = $region68
        $region67: #{net_forward.1} parent=63 // pred_region
          %s4863 = sand.u32 %s226, 1
          %s4864 = scalar_lea.sflag [#allocation3], %s4863
          %s4865 = sand.u32 %s226, 1
          %s4866 = scalar_lea.vmem [#allocation2], %s4865
          %4868 = dma.done %s4864, 16
        $region68: #{net_forward.1} parent=63 // pred_fallthru
          _
      $region64: #{net_forward.1} parent=5 // pred_fallthru
        _
    $region6: #{net_forward.1} parent=1 // loop_footer
      %s22 = sadd.s32 1, %s18
    $region7: #{net_forward.1} parent=1 // loop_footer_branch
      %17 = sbr.rel target = $region3
    $region8: #{net_forward.1} parent=1 // loop_exit
      _
    %4869 = vsyncpa [#allocation3], 1
    %s4870 = scalar_lea.sflag [#allocation3], 1
    %4871 = vsyncpa %s4870, 1

</llo_original>
